<compile_context>
chip_gen: v7x
topology: tpu7x:2x2x1
jax: 0.10.0
libtpu: 0.0.40
codegen_flags: <defaults>
</compile_context>

<pallas_src>
import functools
import numpy as np
import jax
import jax.numpy as jnp
from jax.experimental import pallas as pl
from jax.experimental.pallas import tpu as pltpu


# ---------------------------------------------------------------------------
# Fused kernel: (1x1 conv + BN + ReLU) -> (3x3 conv pad=1 + BN)
# ---------------------------------------------------------------------------
def _fused_rfb_kernel(x_ref, w1_ref, b1_ref, w2_ref, b2_ref, o_ref, ypad_ref,
                      *, th, w, n_tiles):
    """One (image, row-tile) pair per grid step.

    x_ref:    ((th+2)*w, Cin)    bf16  overlapping row window (1-row halo)
    w1_ref:   (Cin, Cmid)        bf16  1x1 weight, BN1 scale folded in
    b1_ref:   (1, Cmid)          f32   BN1 bias
    w2_ref:   (9*Cmid, Cout)     bf16  3x3 weight ((ky,kx,cin)-major), BN2 folded
    b2_ref:   (1, Cout)          f32   BN2 bias
    o_ref:    (th*w, Cout)       bf16
    ypad_ref: (th+2, w+2, Cmid)  bf16  scratch: intermediate + zero halo
    """
    cmid = ypad_ref.shape[-1]
    cout = o_ref.shape[-1]
    t = pl.program_id(0) % n_tiles          # row-tile index within the image

    # ---- stage 1: 1x1 conv == channel matmul, + bias + ReLU (f32 epilogue).
    y1 = jnp.dot(x_ref[...], w1_ref[...], preferred_element_type=jnp.float32)
    y1 = jnp.maximum(y1 + b1_ref[...], 0.0)

    # Intermediate never leaves VMEM.  Interior write covers all th+2 rows;
    # only the two W-halo columns are zeroed (no full-scratch memset).
    ypad_ref[:, 1:w + 1, :] = y1.reshape(th + 2, w, cmid).astype(ypad_ref.dtype)
    zero_col = jnp.zeros((th + 2, 1, cmid), ypad_ref.dtype)
    ypad_ref[:, 0:1, :] = zero_col
    ypad_ref[:, w + 1:w + 2, :] = zero_col

    # At image borders the halo row must be the 3x3 conv's zero padding, not
    # ReLU(BN-bias) of the wrapper's zero-padded input row.
    zero_row = jnp.zeros((w + 2, cmid), ypad_ref.dtype)

    @pl.when(t == 0)
    def _():
        ypad_ref[0, :, :] = zero_row

    @pl.when(t == n_tiles - 1)
    def _():
        ypad_ref[th + 1, :, :] = zero_row

    # ---- stage 2: 3x3 conv as 9 accumulating per-tap matmuls (no im2col
    # concatenate, no (th*w, 9*Cmid) slab).
    acc = jnp.zeros((th * w, cout), jnp.float32)
    for ky in range(3):
        for kx in range(3):
            tap = ypad_ref[ky:ky + th, kx:kx + w, :].reshape(th * w, cmid)
            wk = w2_ref[(ky * 3 + kx) * cmid:(ky * 3 + kx + 1) * cmid, :]
            acc = acc + jnp.dot(tap, wk, preferred_element_type=jnp.float32)
    o_ref[...] = (acc + b2_ref[...]).astype(o_ref.dtype)


# ---------------------------------------------------------------------------
# Helpers
# ---------------------------------------------------------------------------
def _fold_bn(gamma, beta, mean, var, eps=1e-5):
    scale = gamma / jnp.sqrt(var + eps)
    return scale, beta - mean * scale


def _pick_tile_h(h, w):
    """Row-tile height: divides H, keeps flattened blocks sublane-aligned."""
    for th in (8, 16, 32, 4, 2, 1):
        if h % th == 0 and (th * w) % 8 == 0 and ((th + 2) * w) % 8 == 0:
            return th
    return h


def _pick_vmem_limit():
    """Generation-aware scoped-VMEM limit (v5e/v6e: 128 MiB phys, v7x: 64)."""
    try:
        cap = pltpu.get_tpu_info().vmem_capacity_bytes
    except Exception:
        return 32 * 1024 * 1024
    if cap >= 100 * 1024 * 1024:
        return 96 * 1024 * 1024          # v5e / v6e
    return 40 * 1024 * 1024              # v7x: leave headroom under 64 MiB


# ---------------------------------------------------------------------------
# Module wrapper (parameter setup + pallas_call glue)
# ---------------------------------------------------------------------------
class BasicRFB_bPallas:
    def __init__(self, in_planes, out_planes, stride=1, *, key):
        assert stride == 1
        inter = in_planes // 4
        ks = jax.random.split(key, 10)
        # Conv weights, PyTorch OIHW layout, bias=False.
        self.w1 = 0.1 * jax.random.normal(ks[0], (inter, in_planes, 1, 1), jnp.float32)
        self.w2 = 0.1 * jax.random.normal(ks[1], (out_planes, inter, 3, 3), jnp.float32)
        # BatchNorm (eval-mode) parameters, deterministic but non-trivial.
        self.g1 = 1.0 + 0.1 * jax.random.normal(ks[2], (inter,), jnp.float32)
        self.b1 = 0.1 * jax.random.normal(ks[3], (inter,), jnp.float32)
        self.m1 = 0.1 * jax.random.normal(ks[4], (inter,), jnp.float32)
        self.v1 = jnp.abs(jax.random.normal(ks[5], (inter,), jnp.float32)) + 0.5
        self.g2 = 1.0 + 0.1 * jax.random.normal(ks[6], (out_planes,), jnp.float32)
        self.b2 = 0.1 * jax.random.normal(ks[7], (out_planes,), jnp.float32)
        self.m2 = 0.1 * jax.random.normal(ks[8], (out_planes,), jnp.float32)
        self.v2 = jnp.abs(jax.random.normal(ks[9], (out_planes,), jnp.float32)) + 0.5

    def __call__(self, x_nchw):
        n, cin, h, w = x_nchw.shape
        cmid = self.w1.shape[0]
        cout = self.w2.shape[0]
        th = _pick_tile_h(h, w)
        t_tiles = h // th

        scale1, bias1 = _fold_bn(self.g1, self.b1, self.m1, self.v1)
        scale2, bias2 = _fold_bn(self.g2, self.b2, self.m2, self.v2)

        # Fold BN scales into the conv weights in f32, cast to bf16 last.
        w1f = (self.w1[:, :, 0, 0].T * scale1[None, :]).astype(jnp.bfloat16)
        w2f = (jnp.transpose(self.w2, (2, 3, 1, 0)).reshape(9 * cmid, cout)
               * scale2[None, :]).astype(jnp.bfloat16)        # (9*Cmid, Cout)
        b1v = bias1.reshape(1, cmid).astype(jnp.float32)
        b2v = bias2.reshape(1, cout).astype(jnp.float32)

        # NCHW -> NHWC bf16, zero-pad rows, build overlapping (th+2)-row
        # windows so every tile carries its 1-row halo (2/th extra input
        # bytes; stage-1 is pointwise so recomputing halo rows is exact).
        x = jnp.transpose(x_nchw, (0, 2, 3, 1)).astype(jnp.bfloat16)
        xp = jnp.pad(x, ((0, 0), (1, 1), (0, 0), (0, 0)))      # (N, H+2, W, Cin)
        xw = jnp.stack([xp[:, i * th:i * th + th + 2] for i in range(t_tiles)],
                       axis=1)                                  # (N, T, th+2, W, Cin)
        xw = xw.reshape(n * t_tiles * (th + 2) * w, cin)

        kernel = functools.partial(_fused_rfb_kernel, th=th, w=w, n_tiles=t_tiles)
        out = pl.pallas_call(
            kernel,
            out_shape=jax.ShapeDtypeStruct((n * h * w, cout), jnp.bfloat16),
            grid=(n * t_tiles,),
            in_specs=[
                pl.BlockSpec(((th + 2) * w, cin), lambda i: (i, 0)),
                pl.BlockSpec((cin, cmid), lambda i: (0, 0)),
                pl.BlockSpec((1, cmid), lambda i: (0, 0)),
                pl.BlockSpec((9 * cmid, cout), lambda i: (0, 0)),
                pl.BlockSpec((1, cout), lambda i: (0, 0)),
            ],
            out_specs=pl.BlockSpec((th * w, cout), lambda i: (i, 0)),
            scratch_shapes=[pltpu.VMEM((th + 2, w + 2, cmid), jnp.bfloat16)],
            compiler_params=pltpu.CompilerParams(
                dimension_semantics=("parallel",),
                vmem_limit_bytes=_pick_vmem_limit()),
        )(xw, w1f, b1v, w2f, b2v)

        out = out.reshape(n, h, w, cout)
        # f32 cast fuses with the boundary transpose back to NCHW.
        return jnp.transpose(out, (0, 3, 1, 2)).astype(jnp.float32)


# ---------------------------------------------------------------------------
# Pure-JAX reference (XLA convs, f32) for correctness check
# ---------------------------------------------------------------------------
def reference_forward(x, mod, eps=1e-5):
    def bn(y, g, b, m, v):
        g, b, m, v = (t[None, :, None, None] for t in (g, b, m, v))
        return (y - m) / jnp.sqrt(v + eps) * g + b

    y = jax.lax.conv_general_dilated(
        x, mod.w1, (1, 1), "VALID",
        dimension_numbers=("NCHW", "OIHW", "NCHW"))
    y = jnp.maximum(bn(y, mod.g1, mod.b1, mod.m1, mod.v1), 0.0)
    y = jax.lax.conv_general_dilated(
        y, mod.w2, (1, 1), ((1, 1), (1, 1)),
        dimension_numbers=("NCHW", "OIHW", "NCHW"))
    return bn(y, mod.g2, mod.b2, mod.m2, mod.v2)


if __name__ == "__main__":
    key = jax.random.PRNGKey(0)
    k_in, k_mod = jax.random.split(key)
    N, C, H, W = 2, 32, 16, 16          # in_planes=32 -> inter_planes=8
    x = jax.random.normal(k_in, (N, C, H, W), jnp.float32)

    mod = BasicRFB_bPallas(in_planes=C, out_planes=C, stride=1, key=k_mod)
    forward = jax.jit(mod.__call__)
    out = jax.block_until_ready(forward(x))
    ref = jax.block_until_ready(reference_forward(x, mod))

    assert out.shape == (N, C, H, W)
    # Tolerance accounts for bf16 matmul operands + bf16 output (acc is f32).
    np.testing.assert_allclose(np.asarray(out), np.asarray(ref),
                               rtol=3e-2, atol=3e-2)
    print("KERNEL_OK")
</pallas_src>

<mosaic_0001>
module attributes {stable_mosaic.version = 11 : i64} {
  func.func @_fused_rfb_kernel(%arg0: i32, %arg1: memref<160x32xbf16, #tpu.memory_space<vmem>>, %arg2: memref<32x8xbf16, #tpu.memory_space<vmem>>, %arg3: memref<1x8xf32, #tpu.memory_space<vmem>>, %arg4: memref<72x32xbf16, #tpu.memory_space<vmem>>, %arg5: memref<1x32xf32, #tpu.memory_space<vmem>>, %arg6: memref<128x32xbf16, #tpu.memory_space<vmem>>, %arg7: memref<10x18x8xbf16, #tpu.memory_space<vmem>>) attributes {dimension_semantics = [#tpu.dimension_semantics<parallel>], iteration_bounds = array<i64: 4>, scalar_prefetch = 0 : i64, scratch_operands = 1 : i64, tpu.core_type = #tpu.core_type<tc>, window_params = [{transform_indices = @transform_0, window_bounds = array<i64: 160, 32>}, {pipeline_mode = #tpu.pipeline_mode<synchronous>, transform_indices = @transform_1, window_bounds = array<i64: 32, 8>}, {pipeline_mode = #tpu.pipeline_mode<synchronous>, transform_indices = @transform_2, window_bounds = array<i64: 1, 8>}, {pipeline_mode = #tpu.pipeline_mode<synchronous>, transform_indices = @transform_3, window_bounds = array<i64: 72, 32>}, {pipeline_mode = #tpu.pipeline_mode<synchronous>, transform_indices = @transform_4, window_bounds = array<i64: 1, 32>}, {transform_indices = @transform_5, window_bounds = array<i64: 128, 32>}]} {
    %c2_i32 = arith.constant 2 : i32
    %c0_i32 = arith.constant 0 : i32
    %0 = arith.cmpi eq, %c2_i32, %c0_i32 : i32
    %c1_i32 = arith.constant 1 : i32
    %1 = arith.select %0, %c1_i32, %c2_i32 : i32
    %2 = arith.remsi %arg0, %1 : i32
    %c0_i32_0 = arith.constant 0 : i32
    %3 = arith.cmpi ne, %2, %c0_i32_0 : i32
    %c0_i32_1 = arith.constant 0 : i32
    %4 = arith.cmpi slt, %2, %c0_i32_1 : i32
    %c0_i32_2 = arith.constant 0 : i32
    %5 = arith.cmpi slt, %1, %c0_i32_2 : i32
    %6 = arith.xori %4, %5 : i1
    %7 = arith.andi %6, %3 : i1
    %8 = arith.addi %2, %1 : i32
    %9 = arith.select %7, %8, %2 : i32
    %c0 = arith.constant 0 : index
    %c0_3 = arith.constant 0 : index
    %10 = vector.load %arg1[%c0, %c0_3] : memref<160x32xbf16, #tpu.memory_space<vmem>>, vector<160x32xbf16>
    %c0_4 = arith.constant 0 : index
    %c0_5 = arith.constant 0 : index
    %11 = vector.load %arg2[%c0_4, %c0_5] : memref<32x8xbf16, #tpu.memory_space<vmem>>, vector<32x8xbf16>
    %cst = arith.constant dense<0.000000e+00> : vector<160x8xf32>
    %12 = tpu.matmul %10, %11, %cst {dimension_numbers = #tpu.dot_dimension_numbers<[1], [0], [0], [1], [0, 0, 1, 1], [], []>} : vector<160x32xbf16>, vector<32x8xbf16>, vector<160x8xf32> -> vector<160x8xf32>
    %c0_6 = arith.constant 0 : index
    %c0_7 = arith.constant 0 : index
    %13 = vector.load %arg3[%c0_6, %c0_7] : memref<1x8xf32, #tpu.memory_space<vmem>>, vector<1x8xf32>
    %14 = vector.broadcast %13 : vector<1x8xf32> to vector<160x8xf32>
    %15 = arith.addf %12, %14 : vector<160x8xf32>
    %cst_8 = arith.constant 0.000000e+00 : f32
    %16 = vector.broadcast %cst_8 : f32 to vector<160x8xf32>
    %17 = arith.maximumf %15, %16 : vector<160x8xf32>
    %18 = vector.shape_cast %17 : vector<160x8xf32> to vector<10x16x8xf32>
    %19 = arith.truncf %18 : vector<10x16x8xf32> to vector<10x16x8xbf16>
    %c0_9 = arith.constant 0 : index
    %c1 = arith.constant 1 : index
    %c0_10 = arith.constant 0 : index
    %20 = vector.load %arg7[%c0_9, %c1, %c0_10] : memref<10x18x8xbf16, #tpu.memory_space<vmem>>, vector<10x16x8xbf16>
    tpu.vector_store %arg7[%c0_9, %c1, %c0_10], %19 {strides = array<i32>} : memref<10x18x8xbf16, #tpu.memory_space<vmem>>, vector<10x16x8xbf16>,
    %cst_11 = arith.constant 0.000000e+00 : bf16
    %21 = vector.broadcast %cst_11 : bf16 to vector<10x1x8xbf16>
    %c0_12 = arith.constant 0 : index
    %c0_13 = arith.constant 0 : index
    %c0_14 = arith.constant 0 : index
    %22 = vector.load %arg7[%c0_12, %c0_13, %c0_14] : memref<10x18x8xbf16, #tpu.memory_space<vmem>>, vector<10x1x8xbf16>
    tpu.vector_store %arg7[%c0_12, %c0_13, %c0_14], %21 {strides = array<i32>} : memref<10x18x8xbf16, #tpu.memory_space<vmem>>, vector<10x1x8xbf16>,
    %c0_15 = arith.constant 0 : index
    %c17 = arith.constant 17 : index
    %c0_16 = arith.constant 0 : index
    %23 = vector.load %arg7[%c0_15, %c17, %c0_16] : memref<10x18x8xbf16, #tpu.memory_space<vmem>>, vector<10x1x8xbf16>
    tpu.vector_store %arg7[%c0_15, %c17, %c0_16], %21 {strides = array<i32>} : memref<10x18x8xbf16, #tpu.memory_space<vmem>>, vector<10x1x8xbf16>,
    %cst_17 = arith.constant 0.000000e+00 : bf16
    %24 = vector.broadcast %cst_17 : bf16 to vector<18x8xbf16>
    %c0_i32_18 = arith.constant 0 : i32
    %25 = arith.cmpi eq, %9, %c0_i32_18 : i32
    %26 = arith.extui %25 : i1 to i32
    %c0_i32_19 = arith.constant 0 : i32
    %27 = arith.cmpi ne, %26, %c0_i32_19 : i32
    scf.if %27 {
      %c0_72 = arith.constant 0 : index
      %c0_73 = arith.constant 0 : index
      %c0_74 = arith.constant 0 : index
      %82 = vector.load %arg7[%c0_72, %c0_73, %c0_74] : memref<10x18x8xbf16, #tpu.memory_space<vmem>>, vector<1x18x8xbf16>
      %83 = vector.shape_cast %82 : vector<1x18x8xbf16> to vector<18x8xbf16>
      %84 = vector.shape_cast %24 : vector<18x8xbf16> to vector<1x18x8xbf16>
      tpu.vector_store %arg7[%c0_72, %c0_73, %c0_74], %84 {strides = array<i32>} : memref<10x18x8xbf16, #tpu.memory_space<vmem>>, vector<1x18x8xbf16>,
    } else {
    }
    %c1_i32_20 = arith.constant 1 : i32
    %28 = arith.cmpi eq, %9, %c1_i32_20 : i32
    %29 = arith.extui %28 : i1 to i32
    %c0_i32_21 = arith.constant 0 : i32
    %30 = arith.cmpi ne, %29, %c0_i32_21 : i32
    scf.if %30 {
      %c9 = arith.constant 9 : index
      %c0_72 = arith.constant 0 : index
      %c0_73 = arith.constant 0 : index
      %82 = vector.load %arg7[%c9, %c0_72, %c0_73] : memref<10x18x8xbf16, #tpu.memory_space<vmem>>, vector<1x18x8xbf16>
      %83 = vector.shape_cast %82 : vector<1x18x8xbf16> to vector<18x8xbf16>
      %84 = vector.shape_cast %24 : vector<18x8xbf16> to vector<1x18x8xbf16>
      tpu.vector_store %arg7[%c9, %c0_72, %c0_73], %84 {strides = array<i32>} : memref<10x18x8xbf16, #tpu.memory_space<vmem>>, vector<1x18x8xbf16>,
    } else {
    }
    %cst_22 = arith.constant 0.000000e+00 : f32
    %31 = vector.broadcast %cst_22 : f32 to vector<128x32xf32>
    %c0_23 = arith.constant 0 : index
    %c0_24 = arith.constant 0 : index
    %c0_25 = arith.constant 0 : index
    %32 = vector.load %arg7[%c0_23, %c0_24, %c0_25] : memref<10x18x8xbf16, #tpu.memory_space<vmem>>, vector<8x16x8xbf16>
    %33 = vector.shape_cast %32 : vector<8x16x8xbf16> to vector<128x8xbf16>
    %c0_26 = arith.constant 0 : index
    %c0_27 = arith.constant 0 : index
    %34 = vector.load %arg4[%c0_26, %c0_27] : memref<72x32xbf16, #tpu.memory_space<vmem>>, vector<8x32xbf16>
    %cst_28 = arith.constant dense<0.000000e+00> : vector<128x32xf32>
    %35 = tpu.matmul %33, %34, %cst_28 {dimension_numbers = #tpu.dot_dimension_numbers<[1], [0], [0], [1], [0, 0, 1, 1], [], []>} : vector<128x8xbf16>, vector<8x32xbf16>, vector<128x32xf32> -> vector<128x32xf32>
    %36 = arith.addf %31, %35 : vector<128x32xf32>
    %c0_29 = arith.constant 0 : index
    %c1_30 = arith.constant 1 : index
    %c0_31 = arith.constant 0 : index
    %37 = vector.load %arg7[%c0_29, %c1_30, %c0_31] : memref<10x18x8xbf16, #tpu.memory_space<vmem>>, vector<8x16x8xbf16>
    %38 = vector.shape_cast %37 : vector<8x16x8xbf16> to vector<128x8xbf16>
    %c8 = arith.constant 8 : index
    %c0_32 = arith.constant 0 : index
    %39 = vector.load %arg4[%c8, %c0_32] : memref<72x32xbf16, #tpu.memory_space<vmem>>, vector<8x32xbf16>
    %cst_33 = arith.constant dense<0.000000e+00> : vector<128x32xf32>
    %40 = tpu.matmul %38, %39, %cst_33 {dimension_numbers = #tpu.dot_dimension_numbers<[1], [0], [0], [1], [0, 0, 1, 1], [], []>} : vector<128x8xbf16>, vector<8x32xbf16>, vector<128x32xf32> -> vector<128x32xf32>
    %41 = arith.addf %36, %40 : vector<128x32xf32>
    %c0_34 = arith.constant 0 : index
    %c2 = arith.constant 2 : index
    %c0_35 = arith.constant 0 : index
    %42 = vector.load %arg7[%c0_34, %c2, %c0_35] : memref<10x18x8xbf16, #tpu.memory_space<vmem>>, vector<8x16x8xbf16>
    %43 = vector.shape_cast %42 : vector<8x16x8xbf16> to vector<128x8xbf16>
    %c16 = arith.constant 16 : index
    %c0_36 = arith.constant 0 : index
    %44 = vector.load %arg4[%c16, %c0_36] : memref<72x32xbf16, #tpu.memory_space<vmem>>, vector<8x32xbf16>
    %cst_37 = arith.constant dense<0.000000e+00> : vector<128x32xf32>
    %45 = tpu.matmul %43, %44, %cst_37 {dimension_numbers = #tpu.dot_dimension_numbers<[1], [0], [0], [1], [0, 0, 1, 1], [], []>} : vector<128x8xbf16>, vector<8x32xbf16>, vector<128x32xf32> -> vector<128x32xf32>
    %46 = arith.addf %41, %45 : vector<128x32xf32>
    %c1_38 = arith.constant 1 : index
    %c0_39 = arith.constant 0 : index
    %c0_40 = arith.constant 0 : index
    %47 = vector.load %arg7[%c1_38, %c0_39, %c0_40] : memref<10x18x8xbf16, #tpu.memory_space<vmem>>, vector<8x16x8xbf16>
    %48 = vector.shape_cast %47 : vector<8x16x8xbf16> to vector<128x8xbf16>
    %c24 = arith.constant 24 : index
    %c0_41 = arith.constant 0 : index
    %49 = vector.load %arg4[%c24, %c0_41] : memref<72x32xbf16, #tpu.memory_space<vmem>>, vector<8x32xbf16>
    %cst_42 = arith.constant dense<0.000000e+00> : vector<128x32xf32>
    %50 = tpu.matmul %48, %49, %cst_42 {dimension_numbers = #tpu.dot_dimension_numbers<[1], [0], [0], [1], [0, 0, 1, 1], [], []>} : vector<128x8xbf16>, vector<8x32xbf16>, vector<128x32xf32> -> vector<128x32xf32>
    %51 = arith.addf %46, %50 : vector<128x32xf32>
    %c1_43 = arith.constant 1 : index
    %c1_44 = arith.constant 1 : index
    %c0_45 = arith.constant 0 : index
    %52 = vector.load %arg7[%c1_43, %c1_44, %c0_45] : memref<10x18x8xbf16, #tpu.memory_space<vmem>>, vector<8x16x8xbf16>
    %53 = vector.shape_cast %52 : vector<8x16x8xbf16> to vector<128x8xbf16>
    %c32 = arith.constant 32 : index
    %c0_46 = arith.constant 0 : index
    %54 = vector.load %arg4[%c32, %c0_46] : memref<72x32xbf16, #tpu.memory_space<vmem>>, vector<8x32xbf16>
    %cst_47 = arith.constant dense<0.000000e+00> : vector<128x32xf32>
    %55 = tpu.matmul %53, %54, %cst_47 {dimension_numbers = #tpu.dot_dimension_numbers<[1], [0], [0], [1], [0, 0, 1, 1], [], []>} : vector<128x8xbf16>, vector<8x32xbf16>, vector<128x32xf32> -> vector<128x32xf32>
    %56 = arith.addf %51, %55 : vector<128x32xf32>
    %c1_48 = arith.constant 1 : index
    %c2_49 = arith.constant 2 : index
    %c0_50 = arith.constant 0 : index
    %57 = vector.load %arg7[%c1_48, %c2_49, %c0_50] : memref<10x18x8xbf16, #tpu.memory_space<vmem>>, vector<8x16x8xbf16>
    %58 = vector.shape_cast %57 : vector<8x16x8xbf16> to vector<128x8xbf16>
    %c40 = arith.constant 40 : index
    %c0_51 = arith.constant 0 : index
    %59 = vector.load %arg4[%c40, %c0_51] : memref<72x32xbf16, #tpu.memory_space<vmem>>, vector<8x32xbf16>
    %cst_52 = arith.constant dense<0.000000e+00> : vector<128x32xf32>
    %60 = tpu.matmul %58, %59, %cst_52 {dimension_numbers = #tpu.dot_dimension_numbers<[1], [0], [0], [1], [0, 0, 1, 1], [], []>} : vector<128x8xbf16>, vector<8x32xbf16>, vector<128x32xf32> -> vector<128x32xf32>
    %61 = arith.addf %56, %60 : vector<128x32xf32>
    %c2_53 = arith.constant 2 : index
    %c0_54 = arith.constant 0 : index
    %c0_55 = arith.constant 0 : index
    %62 = vector.load %arg7[%c2_53, %c0_54, %c0_55] : memref<10x18x8xbf16, #tpu.memory_space<vmem>>, vector<8x16x8xbf16>
    %63 = vector.shape_cast %62 : vector<8x16x8xbf16> to vector<128x8xbf16>
    %c48 = arith.constant 48 : index
    %c0_56 = arith.constant 0 : index
    %64 = vector.load %arg4[%c48, %c0_56] : memref<72x32xbf16, #tpu.memory_space<vmem>>, vector<8x32xbf16>
    %cst_57 = arith.constant dense<0.000000e+00> : vector<128x32xf32>
    %65 = tpu.matmul %63, %64, %cst_57 {dimension_numbers = #tpu.dot_dimension_numbers<[1], [0], [0], [1], [0, 0, 1, 1], [], []>} : vector<128x8xbf16>, vector<8x32xbf16>, vector<128x32xf32> -> vector<128x32xf32>
    %66 = arith.addf %61, %65 : vector<128x32xf32>
    %c2_58 = arith.constant 2 : index
    %c1_59 = arith.constant 1 : index
    %c0_60 = arith.constant 0 : index
    %67 = vector.load %arg7[%c2_58, %c1_59, %c0_60] : memref<10x18x8xbf16, #tpu.memory_space<vmem>>, vector<8x16x8xbf16>
    %68 = vector.shape_cast %67 : vector<8x16x8xbf16> to vector<128x8xbf16>
    %c56 = arith.constant 56 : index
    %c0_61 = arith.constant 0 : index
    %69 = vector.load %arg4[%c56, %c0_61] : memref<72x32xbf16, #tpu.memory_space<vmem>>, vector<8x32xbf16>
    %cst_62 = arith.constant dense<0.000000e+00> : vector<128x32xf32>
    %70 = tpu.matmul %68, %69, %cst_62 {dimension_numbers = #tpu.dot_dimension_numbers<[1], [0], [0], [1], [0, 0, 1, 1], [], []>} : vector<128x8xbf16>, vector<8x32xbf16>, vector<128x32xf32> -> vector<128x32xf32>
    %71 = arith.addf %66, %70 : vector<128x32xf32>
    %c2_63 = arith.constant 2 : index
    %c2_64 = arith.constant 2 : index
    %c0_65 = arith.constant 0 : index
    %72 = vector.load %arg7[%c2_63, %c2_64, %c0_65] : memref<10x18x8xbf16, #tpu.memory_space<vmem>>, vector<8x16x8xbf16>
    %73 = vector.shape_cast %72 : vector<8x16x8xbf16> to vector<128x8xbf16>
    %c64 = arith.constant 64 : index
    %c0_66 = arith.constant 0 : index
    %74 = vector.load %arg4[%c64, %c0_66] : memref<72x32xbf16, #tpu.memory_space<vmem>>, vector<8x32xbf16>
    %cst_67 = arith.constant dense<0.000000e+00> : vector<128x32xf32>
    %75 = tpu.matmul %73, %74, %cst_67 {dimension_numbers = #tpu.dot_dimension_numbers<[1], [0], [0], [1], [0, 0, 1, 1], [], []>} : vector<128x8xbf16>, vector<8x32xbf16>, vector<128x32xf32> -> vector<128x32xf32>
    %76 = arith.addf %71, %75 : vector<128x32xf32>
    %c0_68 = arith.constant 0 : index
    %c0_69 = arith.constant 0 : index
    %77 = vector.load %arg5[%c0_68, %c0_69] : memref<1x32xf32, #tpu.memory_space<vmem>>, vector<1x32xf32>
    %78 = vector.broadcast %77 : vector<1x32xf32> to vector<128x32xf32>
    %79 = arith.addf %76, %78 : vector<128x32xf32>
    %80 = arith.truncf %79 : vector<128x32xf32> to vector<128x32xbf16>
    %c0_70 = arith.constant 0 : index
    %c0_71 = arith.constant 0 : index
    %81 = vector.load %arg6[%c0_70, %c0_71] : memref<128x32xbf16, #tpu.memory_space<vmem>>, vector<128x32xbf16>
    tpu.vector_store %arg6[%c0_70, %c0_71], %80 {strides = array<i32>} : memref<128x32xbf16, #tpu.memory_space<vmem>>, vector<128x32xbf16>,
    return
  }
  func.func @transform_0(%arg0: i32) -> (i32, i32) {
    %c0_i32 = arith.constant 0 : i32
    %c0_i32_0 = arith.constant 0 : i32
    return %arg0, %c0_i32 : i32, i32
  }
  func.func @transform_1(%arg0: i32) -> (i32, i32) {
    %c0_i32 = arith.constant 0 : i32
    %c0_i32_0 = arith.constant 0 : i32
    %c0_i32_1 = arith.constant 0 : i32
    return %c0_i32, %c0_i32_0 : i32, i32
  }
  func.func @transform_2(%arg0: i32) -> (i32, i32) {
    %c0_i32 = arith.constant 0 : i32
    %c0_i32_0 = arith.constant 0 : i32
    %c0_i32_1 = arith.constant 0 : i32
    return %c0_i32, %c0_i32_0 : i32, i32
  }
  func.func @transform_3(%arg0: i32) -> (i32, i32) {
    %c0_i32 = arith.constant 0 : i32
    %c0_i32_0 = arith.constant 0 : i32
    %c0_i32_1 = arith.constant 0 : i32
    return %c0_i32, %c0_i32_0 : i32, i32
  }
  func.func @transform_4(%arg0: i32) -> (i32, i32) {
    %c0_i32 = arith.constant 0 : i32
    %c0_i32_0 = arith.constant 0 : i32
    %c0_i32_1 = arith.constant 0 : i32
    return %c0_i32, %c0_i32_0 : i32, i32
  }
  func.func @transform_5(%arg0: i32) -> (i32, i32) {
    %c0_i32 = arith.constant 0 : i32
    %c0_i32_0 = arith.constant 0 : i32
    return %arg0, %c0_i32 : i32, i32
  }
}

</mosaic_0001>

<llo_original>
// kernel: a_call__.1
$region0: #{a_call__.1}
  #allocation0 [shape = 'u32[]', space=smem, size = 0x4, offset = 0x4, fixed_abs, tag = 'smem constant byte address 0x4 - core index']
  #allocation1 [shape = 'u32[144,128]{1,0:T(1,128)}', space=vmem, size = 0x12000, scoped, tag = 'internal scratch']
  #allocation2 [shape = 'bf16[10,18,8]{2,1,0:T(8,128)(2,1)}', space=vmem, size = 0xf000, scoped, tag = 'scratch operand']
  %s0 = inlined_call_operand.vmem [shape: bf16[640,32], index: 0, kind: input, shape index: {}]
  %s1 = inlined_call_operand.vmem [shape: bf16[32,8], index: 1, kind: input, shape index: {}]
  %s2 = inlined_call_operand.vmem [shape: f32[1,8], index: 2, kind: input, shape index: {}]
  %s3 = inlined_call_operand.vmem [shape: bf16[72,32], index: 3, kind: input, shape index: {}]
  %s4 = inlined_call_operand.vmem [shape: f32[1,32], index: 4, kind: input, shape index: {}]
  %s5 = inlined_call_operand.vmem [shape: bf16[512,32], index: 5, kind: output, shape index: {}]
  %s6 = sld [smem:[#allocation0]]
  $region61: #{a_call__.1} parent=0
    _
  %s8 = ssub.s32 1, %s6
  %s9 = scalar_select 0, %s8, %s6
  loop: start=0, step=1, limit=6
  $region2: #{a_call__.1} parent=0 // loop_pre_header
    _
  $region3: #{a_call__.1} parent=0 // loop_header
    %s11 = sphi 0, %s15
    %p12 = scmp.ge.s32.totalorder %s11, 6
    %s21 = sphi 0, %s23
    %s24 = sphi 0, %s21
    %s25 = sphi 0, %s24
    %s41 = sphi 0, %s25
    %s45 = sphi 0, %s45
    %s47 = sphi 0, %s45
    %s48 = sphi 0, %s47
    %s62 = sphi 0, %s48
    %s66 = sphi 0, %s66
    %s68 = sphi 0, %s66
    %s69 = sphi 0, %s68
    %s83 = sphi 0, %s69
    %s87 = sphi 0, %s87
    %s89 = sphi 0, %s87
    %s90 = sphi 0, %s89
    %s104 = sphi 0, %s90
    %s108 = sphi 0, %s108
    %s110 = sphi 0, %s108
    %s111 = sphi 0, %s110
    %s125 = sphi 0, %s111
    %s131 = sphi 0, %s133
    %s134 = sphi 0, %s131
    %s135 = sphi 0, %s134
    %s151 = sphi 0, %s135
  $region4: #{a_call__.1} parent=0 // loop_header_branch
    %14 = sbr.rel (%p12) target = $region8
  $region5: #{a_call__.1} parent=0 // loop_body
    %s16 = ssub.s32 %s11, 1
    %s17 = ssub.s32 %s11, 2
    %s18 = sadd.s32 %s11, 1
    %s19 = ssub.s32 %s11, %s18
    %p20 = scmp.eq.s32.totalorder %s19, 0
    %s22 = sadd.s32 %s21, 1
    %s23 = scalar_select %p20, %s21, %s22
    %p26 = pneg %p20
    %p27 = scmp.eq.s32.totalorder %s11, 3
    %p28 = por %p26, %p27
    %p29 = scmp.ne.s32.totalorder %s21, %s24
    %p30 = scmp.eq.s32.totalorder %s11, 0
    %p31 = por %p29, %p30
    %p32 = scmp.ne.s32.totalorder %s21, %s24
    %p33 = scmp.eq.s32.totalorder %s16, 3
    %p34 = por %p32, %p33
    %p35 = scmp.ne.s32.totalorder %s24, %s25
    %p36 = scmp.eq.s32.totalorder %s16, 0
    %p37 = por %p35, %p36
    %p38 = scmp.ne.s32.totalorder %s24, %s25
    %p39 = scmp.eq.s32.totalorder %s17, 3
    %p40 = por %p38, %p39
    %p42 = scmp.ne.s32.totalorder %s25, %s41
    %p43 = scmp.eq.s32.totalorder %s17, 0
    %p44 = por %p42, %p43
    %s46 = sadd.s32 %s45, 1
    %p49 = scmp.eq.s32.totalorder %s11, 3
    %p50 = scmp.ne.s32.totalorder %s45, %s47
    %p51 = scmp.eq.s32.totalorder %s11, 0
    %p52 = por %p50, %p51
    %p53 = scmp.ne.s32.totalorder %s45, %s47
    %p54 = scmp.eq.s32.totalorder %s16, 3
    %p55 = por %p53, %p54
    %p56 = scmp.ne.s32.totalorder %s47, %s48
    %p57 = scmp.eq.s32.totalorder %s16, 0
    %p58 = por %p56, %p57
    %p59 = scmp.ne.s32.totalorder %s47, %s48
    %p60 = scmp.eq.s32.totalorder %s17, 3
    %p61 = por %p59, %p60
    %p63 = scmp.ne.s32.totalorder %s48, %s62
    %p64 = scmp.eq.s32.totalorder %s17, 0
    %p65 = por %p63, %p64
    %s67 = sadd.s32 %s66, 1
    %p70 = scmp.eq.s32.totalorder %s11, 3
    %p71 = scmp.ne.s32.totalorder %s66, %s68
    %p72 = scmp.eq.s32.totalorder %s11, 0
    %p73 = por %p71, %p72
    %p74 = scmp.ne.s32.totalorder %s66, %s68
    %p75 = scmp.eq.s32.totalorder %s16, 3
    %p76 = por %p74, %p75
    %p77 = scmp.ne.s32.totalorder %s68, %s69
    %p78 = scmp.eq.s32.totalorder %s16, 0
    %p79 = por %p77, %p78
    %p80 = scmp.ne.s32.totalorder %s68, %s69
    %p81 = scmp.eq.s32.totalorder %s17, 3
    %p82 = por %p80, %p81
    %p84 = scmp.ne.s32.totalorder %s69, %s83
    %p85 = scmp.eq.s32.totalorder %s17, 0
    %p86 = por %p84, %p85
    %s88 = sadd.s32 %s87, 1
    %p91 = scmp.eq.s32.totalorder %s11, 3
    %p92 = scmp.ne.s32.totalorder %s87, %s89
    %p93 = scmp.eq.s32.totalorder %s11, 0
    %p94 = por %p92, %p93
    %p95 = scmp.ne.s32.totalorder %s87, %s89
    %p96 = scmp.eq.s32.totalorder %s16, 3
    %p97 = por %p95, %p96
    %p98 = scmp.ne.s32.totalorder %s89, %s90
    %p99 = scmp.eq.s32.totalorder %s16, 0
    %p100 = por %p98, %p99
    %p101 = scmp.ne.s32.totalorder %s89, %s90
    %p102 = scmp.eq.s32.totalorder %s17, 3
    %p103 = por %p101, %p102
    %p105 = scmp.ne.s32.totalorder %s90, %s104
    %p106 = scmp.eq.s32.totalorder %s17, 0
    %p107 = por %p105, %p106
    %s109 = sadd.s32 %s108, 1
    %p112 = scmp.eq.s32.totalorder %s11, 3
    %p113 = scmp.ne.s32.totalorder %s108, %s110
    %p114 = scmp.eq.s32.totalorder %s11, 0
    %p115 = por %p113, %p114
    %p116 = scmp.ne.s32.totalorder %s108, %s110
    %p117 = scmp.eq.s32.totalorder %s16, 3
    %p118 = por %p116, %p117
    %p119 = scmp.ne.s32.totalorder %s110, %s111
    %p120 = scmp.eq.s32.totalorder %s16, 0
    %p121 = por %p119, %p120
    %p122 = scmp.ne.s32.totalorder %s110, %s111
    %p123 = scmp.eq.s32.totalorder %s17, 3
    %p124 = por %p122, %p123
    %p126 = scmp.ne.s32.totalorder %s111, %s125
    %p127 = scmp.eq.s32.totalorder %s17, 0
    %p128 = por %p126, %p127
    %s129 = ssub.s32 %s11, %s18
    %p130 = scmp.eq.s32.totalorder %s129, 0
    %s132 = sadd.s32 %s131, 1
    %s133 = scalar_select %p130, %s131, %s132
    %p136 = pneg %p130
    %p137 = scmp.eq.s32.totalorder %s11, 3
    %p138 = por %p136, %p137
    %p139 = scmp.ne.s32.totalorder %s131, %s134
    %p140 = scmp.eq.s32.totalorder %s11, 0
    %p141 = por %p139, %p140
    %p142 = scmp.ne.s32.totalorder %s131, %s134
    %p143 = scmp.eq.s32.totalorder %s16, 3
    %p144 = por %p142, %p143
    %p145 = scmp.ne.s32.totalorder %s134, %s135
    %p146 = scmp.eq.s32.totalorder %s16, 0
    %p147 = por %p145, %p146
    %p148 = scmp.ne.s32.totalorder %s134, %s135
    %p149 = scmp.eq.s32.totalorder %s17, 3
    %p150 = por %p148, %p149
    %p152 = scmp.ne.s32.totalorder %s135, %s151
    %p153 = scmp.eq.s32.totalorder %s17, 0
    %p154 = por %p152, %p153
    %p155 = scmp.le.s32.totalorder 1, %s11
    %p156 = scmp.lt.s32.totalorder %s11, 5
    %p157 = pnand %p155, %p156
    %p158 = pneg %p157
    // Predicated region
    $region9: #{a_call__.1} parent=5 // pred_check
      _
    $region10: #{a_call__.1} parent=5 // pred_check_branch
      %160 = sbr.rel (%p157) target = $region12
    $region11: #{a_call__.1} parent=5 // pred_region
      %s161 = ssub.s32 %s11, 1
      // Predicated region
      $region13: #{a_call__.1} parent=11 // pred_check
        %p162 = pneg %p58
      $region14: #{a_call__.1} parent=11 // pred_check_branch
        %164 = sbr.rel (%p162) target = $region16
      $region15: #{a_call__.1} parent=11 // pred_region
        _
      $region16: #{a_call__.1} parent=11 // pred_fallthru
        _
      // Predicated region
      $region17: #{a_call__.1} parent=11 // pred_check
        %p165 = pneg %p79
      $region18: #{a_call__.1} parent=11 // pred_check_branch
        %167 = sbr.rel (%p165) target = $region20
      $region19: #{a_call__.1} parent=11 // pred_region
        _
      $region20: #{a_call__.1} parent=11 // pred_fallthru
        _
      // Predicated region
      $region21: #{a_call__.1} parent=11 // pred_check
        %p168 = pneg %p100
      $region22: #{a_call__.1} parent=11 // pred_check_branch
        %170 = sbr.rel (%p168) target = $region24
      $region23: #{a_call__.1} parent=11 // pred_region
        _
      $region24: #{a_call__.1} parent=11 // pred_fallthru
        _
      // Predicated region
      $region25: #{a_call__.1} parent=11 // pred_check
        %p171 = pneg %p121
      $region26: #{a_call__.1} parent=11 // pred_check_branch
        %173 = sbr.rel (%p171) target = $region28
      $region27: #{a_call__.1} parent=11 // pred_region
        _
      $region28: #{a_call__.1} parent=11 // pred_fallthru
        _
    $region12: #{a_call__.1} parent=5 // pred_fallthru
      _
    %p174 = scmp.lt.s32.totalorder %s11, 4
    // Predicated region
    $region29: #{a_call__.1} parent=5 // pred_check
      %p175 = pneg %p174
    $region30: #{a_call__.1} parent=5 // pred_check_branch
      %177 = sbr.rel (%p175) target = $region32
    $region31: #{a_call__.1} parent=5 // pred_region
      // Predicated region
      $region33: #{a_call__.1} parent=31 // pred_check
        %p178 = pneg %p31
      $region34: #{a_call__.1} parent=31 // pred_check_branch
        %180 = sbr.rel (%p178) target = $region36
      $region35: #{a_call__.1} parent=31 // pred_region
        %s181 = smul.u32 20, %s11
        %p182 = scmp.lt.s32.totalorder %s181, 79
        %s183 = scalar_select %p182, %s181, 79
        %s184 = smul.addr %s183, 4
        %s185 = scalar_lea.vmem %s0, %s184
        %s186 = smul.u32 20, %s11
      $region36: #{a_call__.1} parent=31 // pred_fallthru
        _
    $region32: #{a_call__.1} parent=5 // pred_fallthru
      _
    %p187 = scmp.le.s32.totalorder 1, %s11
    %p188 = scmp.lt.s32.totalorder %s11, 5
    %p189 = pnand %p187, %p188
    %p190 = pneg %p189
    // Predicated region
    $region37: #{a_call__.1} parent=5 // pred_check
      _
    $region38: #{a_call__.1} parent=5 // pred_check_branch
      %192 = sbr.rel (%p189) target = $region40
    $region39: #{a_call__.1} parent=5 // pred_region
      %s193 = ssub.s32 %s11, 1
      %s194 = smul.u32 20, %s16
      %p195 = scmp.lt.s32.totalorder %s194, 79
      %s196 = scalar_select %p195, %s194, 79
      %s197 = smul.addr %s196, 4
      %s198 = scalar_lea.vmem %s0, %s197
      %p199 = pneg %p37
      %p200 = pneg %p34
      %p201 = pneg %p58
      %p202 = pneg %p55
      %p203 = pneg %p79
      %p204 = pneg %p76
      %p205 = pneg %p100
      %p206 = pneg %p97
      %p207 = pneg %p121
      %p208 = pneg %p118
      %p209 = pneg %p147
      %p210 = pneg %p144
      %s211 = smul.u32 16, %s16
      %p212 = scmp.lt.s32.totalorder %s211, 63
      %s213 = scalar_select %p212, %s211, 63
      %s214 = smul.addr %s213, 4
      %s215 = scalar_lea.vmem %s5, %s214
      %s216 = smul.u32 20, %s16
      %p217 = scmp.lt.s32.totalorder %s216, 79
      %s218 = scalar_select %p217, %s216, 79
      %s219 = smul.addr %s218, 4
      %s220 = scalar_lea.vmem %s0, %s219
      %s221 = smul.u32 20, %s16
      %s222 = smul.u32 16, %s16
      %p223 = scmp.lt.s32.totalorder %s222, 63
      %s224 = scalar_select %p223, %s222, 63
      %s225 = smul.addr %s224, 4
      %s226 = scalar_lea.vmem %s5, %s225
      %s227 = smul.u32 16, %s16
      %p229 = scmp.lt.s32.totalorder %s16, 0
      %s230 = ssub.s32 0, %s16
      %s231 = scalar_select %p229, %s230, %s16
      %s232 = sand.u32 %s231, 1
      %s233 = ssub.s32 0, %s232
      %s234 = scalar_select %p229, %s233, %s232
      %p235 = scmp.ne.s32.totalorder %s234, 0
      %p236 = scmp.lt.s32.totalorder %s234, 0
      %p237 = pnand %p236, %p235
      %p238 = pneg %p237
      %s239 = sadd.s32 %s234, 2
      %s240 = scalar_select %p238, %s239, %s234
      %v241 = vld [vmem:[%s220] sm:$0xf]
      %v242 = vld [vmem:[%s220 + $0x4] sm:$0xf]
      %v243 = vld [vmem:[%s220 + $0x8] sm:$0xf]
      %v244 = vld [vmem:[%s220 + $0xc] sm:$0xf]
      %v245 = vld [vmem:[%s220 + $0x10] sm:$0xf]
      %v246 = vld [vmem:[%s220 + $0x14] sm:$0xf]
      %v247 = vld [vmem:[%s220 + $0x18] sm:$0xf]
      %v248 = vld [vmem:[%s220 + $0x1c] sm:$0xf]
      %v249 = vld [vmem:[%s220 + $0x20] sm:$0xf]
      %v250 = vld [vmem:[%s220 + $0x24] sm:$0xf]
      %v251 = vld [vmem:[%s220 + $0x28] sm:$0xf]
      %v252 = vld [vmem:[%s220 + $0x2c] sm:$0xf]
      %v253 = vld [vmem:[%s220 + $0x30] sm:$0xf]
      %v254 = vld [vmem:[%s220 + $0x34] sm:$0xf]
      %v255 = vld [vmem:[%s220 + $0x38] sm:$0xf]
      %v256 = vld [vmem:[%s220 + $0x3c] sm:$0xf]
      %v257 = vld [vmem:[%s220 + $0x40] sm:$0xf]
      %v258 = vld [vmem:[%s220 + $0x44] sm:$0xf]
      %v259 = vld [vmem:[%s220 + $0x48] sm:$0xf]
      %v260 = vld [vmem:[%s220 + $0x4c] sm:$0xf]
      %v261 = vld [vmem:[%s1] sm:$0xf]
      %v262 = vld [vmem:[%s1 + $0x4] sm:$0xf]
      %v263 = vld [vmem:[%s1 + $0x8] sm:$0xf]
      %v264 = vld [vmem:[%s1 + $0xc] sm:$0xf]
      %v265 = vld [vmem:[%s2] sm:$0x1]
      %v267 = vlaneseq
      %v268 = vshrl.u32 %v267, 7
      %v269 = vsub.s32 0, %v268
      %v270 = vrot.slane %v265, %v269
      %v292 = vunpack.c.l.b16 %v241
      %v293 = vunpack.c.l.b16 %v242
      %v294 = vunpack.c.l.b16 %v243
      %v295 = vunpack.c.l.b16 %v244
      %v296 = vunpack.c.l.b16 %v245
      %v297 = vunpack.c.l.b16 %v246
      %v298 = vunpack.c.l.b16 %v247
      %v299 = vunpack.c.l.b16 %v248
      %v300 = vunpack.c.l.b16 %v249
      %v301 = vunpack.c.l.b16 %v250
      %v302 = vunpack.c.l.b16 %v251
      %v303 = vunpack.c.l.b16 %v252
      %v304 = vunpack.c.l.b16 %v253
      %v305 = vunpack.c.l.b16 %v254
      %v306 = vunpack.c.l.b16 %v255
      %v307 = vunpack.c.l.b16 %v256
      %v308 = vunpack.c.l.b16 %v257
      %v309 = vunpack.c.l.b16 %v258
      %v310 = vunpack.c.l.b16 %v259
      %v311 = vunpack.c.l.b16 %v260
      %v312 = vpack.c.b16 %v293, %v292
      %v313 = vpack.c.b16 %v295, %v294
      %v314 = vpack.c.b16 %v297, %v296
      %v315 = vpack.c.b16 %v299, %v298
      %v316 = vpack.c.b16 %v301, %v300
      %v317 = vpack.c.b16 %v303, %v302
      %v318 = vpack.c.b16 %v305, %v304
      %v319 = vpack.c.b16 %v307, %v306
      %v320 = vpack.c.b16 %v309, %v308
      %v321 = vpack.c.b16 %v311, %v310
      %v326 = vunpack.c.l.b16 %v261
      %v327 = vunpack.c.l.b16 %v262
      %v328 = vunpack.c.l.b16 %v263
      %v329 = vunpack.c.l.b16 %v264
      %v330 = vpack.c.b16 %v327, %v326
      %v331 = vpack.c.b16 %v329, %v328
      %vm334 = vcmask 261120
      %v336 = vsel %vm334, %v312, 0
      %v339 = vsel %vm334, %v313, 0
      %v342 = vsel %vm334, %v314, 0
      %v345 = vsel %vm334, %v315, 0
      %v348 = vsel %vm334, %v316, 0
      %v351 = vsel %vm334, %v317, 0
      %v354 = vsel %vm334, %v318, 0
      %v357 = vsel %vm334, %v319, 0
      %v360 = vsel %vm334, %v320, 0
      %v363 = vsel %vm334, %v321, 0
      %365 = vmatprep.subr.bf16.mxu0 0
      %366 = vmatpush1.bf16.msra.mxu0 %v330
      %367 = vmatprep.subr.bf16.mxu0 0
      %368 = vmatpush1.bf16.msra.mxu0 %v331
      %369 = vmatprep.subr.bf16.mxu0 0
      %370 = vmatpush1.bf16.msra.mxu0 0
      %371 = vmatprep.subr.bf16.mxu0 0
      %372 = vmatpush1.bf16.msra.mxu0 0
      %373 = vmatprep.subr.bf16.mxu0 0
      %374 = vmatpush1.bf16.msra.mxu0 0
      %375 = vmatprep.subr.bf16.mxu0 0
      %376 = vmatpush1.bf16.msra.mxu0 0
      %377 = vmatprep.subr.bf16.mxu0 0
      %378 = vmatpush1.bf16.msra.mxu0 0
      %379 = vmatprep.subr.bf16.mxu0 0
      %380 = vmatpush1.bf16.msra.mxu0 0
      %381 = vmatprep.subr.bf16.mxu0 0
      %382 = vmatpush1.bf16.msra.mxu0 0
      %383 = vmatprep.subr.bf16.mxu0 0
      %384 = vmatpush1.bf16.msra.mxu0 0
      %385 = vmatprep.subr.bf16.mxu0 0
      %386 = vmatpush1.bf16.msra.mxu0 0
      %387 = vmatprep.subr.bf16.mxu0 0
      %388 = vmatpush1.bf16.msra.mxu0 0
      %389 = vmatprep.subr.bf16.mxu0 0
      %390 = vmatpush1.bf16.msra.mxu0 0
      %391 = vmatprep.subr.bf16.mxu0 0
      %392 = vmatpush1.bf16.msra.mxu0 0
      %393 = vmatprep.subr.bf16.mxu0 0
      %394 = vmatpush1.bf16.msra.mxu0 0
      %395 = vmatprep.subr.bf16.mxu0 0
      %396 = vmatpush1.bf16.msra.mxu0 0
      %397 = vmatprep.mubr.bf16.mxu0 0
      %398 = vmatmul.mubr.bf16.gmra.mrb[0].mxu0 %v336
      %v399 = vpop.f32.mrb[0].mxu0
      %v400 = vadd.f32 %v270, %v399
      %v401 = vpop.f32.mrb[0].mxu0
      %v402 = vpop.f32.mrb[0].mxu0
      %v403 = vadd.f32 %v270, %v402
      %v404 = vpop.f32.mrb[0].mxu0
      %405 = vmatprep.mubr.bf16.mxu0 0
      %406 = vmatmul.mubr.bf16.gmra.mrb[0].mxu0 %v339
      %v407 = vpop.f32.mrb[0].mxu0
      %v408 = vadd.f32 %v270, %v407
      %v409 = vpop.f32.mrb[0].mxu0
      %v410 = vpop.f32.mrb[0].mxu0
      %v411 = vadd.f32 %v270, %v410
      %v412 = vpop.f32.mrb[0].mxu0
      %413 = vmatprep.mubr.bf16.mxu0 0
      %414 = vmatmul.mubr.bf16.gmra.mrb[0].mxu0 %v342
      %v415 = vpop.f32.mrb[0].mxu0
      %v416 = vadd.f32 %v270, %v415
      %v417 = vpop.f32.mrb[0].mxu0
      %v418 = vpop.f32.mrb[0].mxu0
      %v419 = vadd.f32 %v270, %v418
      %v420 = vpop.f32.mrb[0].mxu0
      %421 = vmatprep.mubr.bf16.mxu0 0
      %422 = vmatmul.mubr.bf16.gmra.mrb[0].mxu0 %v345
      %v423 = vpop.f32.mrb[0].mxu0
      %v424 = vadd.f32 %v270, %v423
      %v425 = vpop.f32.mrb[0].mxu0
      %v426 = vpop.f32.mrb[0].mxu0
      %v427 = vadd.f32 %v270, %v426
      %v428 = vpop.f32.mrb[0].mxu0
      %429 = vmatprep.mubr.bf16.mxu0 0
      %430 = vmatmul.mubr.bf16.gmra.mrb[0].mxu0 %v348
      %v431 = vpop.f32.mrb[0].mxu0
      %v432 = vadd.f32 %v270, %v431
      %v433 = vpop.f32.mrb[0].mxu0
      %v434 = vpop.f32.mrb[0].mxu0
      %v435 = vadd.f32 %v270, %v434
      %v436 = vpop.f32.mrb[0].mxu0
      %437 = vmatprep.mubr.bf16.mxu0 0
      %438 = vmatmul.mubr.bf16.gmra.mrb[0].mxu0 %v351
      %v439 = vpop.f32.mrb[0].mxu0
      %v440 = vadd.f32 %v270, %v439
      %v441 = vpop.f32.mrb[0].mxu0
      %v442 = vpop.f32.mrb[0].mxu0
      %v443 = vadd.f32 %v270, %v442
      %v444 = vpop.f32.mrb[0].mxu0
      %445 = vmatprep.mubr.bf16.mxu0 0
      %446 = vmatmul.mubr.bf16.gmra.mrb[0].mxu0 %v354
      %v447 = vpop.f32.mrb[0].mxu0
      %v448 = vadd.f32 %v270, %v447
      %v449 = vpop.f32.mrb[0].mxu0
      %v450 = vpop.f32.mrb[0].mxu0
      %v451 = vadd.f32 %v270, %v450
      %v452 = vpop.f32.mrb[0].mxu0
      %453 = vmatprep.mubr.bf16.mxu0 0
      %454 = vmatmul.mubr.bf16.gmra.mrb[0].mxu0 %v357
      %v455 = vpop.f32.mrb[0].mxu0
      %v456 = vadd.f32 %v270, %v455
      %v457 = vpop.f32.mrb[0].mxu0
      %v458 = vpop.f32.mrb[0].mxu0
      %v459 = vadd.f32 %v270, %v458
      %v460 = vpop.f32.mrb[0].mxu0
      %461 = vmatprep.mubr.bf16.mxu0 0
      %462 = vmatmul.mubr.bf16.gmra.mrb[0].mxu0 %v360
      %v463 = vpop.f32.mrb[0].mxu0
      %v464 = vadd.f32 %v270, %v463
      %v465 = vpop.f32.mrb[0].mxu0
      %v466 = vpop.f32.mrb[0].mxu0
      %v467 = vadd.f32 %v270, %v466
      %v468 = vpop.f32.mrb[0].mxu0
      %469 = vmatprep.mubr.bf16.mxu0 0
      %470 = vmatmul.mubr.bf16.gmra.mrb[0].mxu0 %v363
      %v471 = vpop.f32.mrb[0].mxu0
      %v472 = vadd.f32 %v270, %v471
      %v473 = vpop.f32.mrb[0].mxu0
      %v474 = vpop.f32.mrb[0].mxu0
      %v475 = vadd.f32 %v270, %v474
      %v476 = vpop.f32.mrb[0].mxu0
      %477 = vdwg.mxu0
      %v478 = vmax.f32 %v400, 0.0
      %v479 = vmax.f32 %v403, 0.0
      %v480 = vmax.f32 %v408, 0.0
      %v481 = vmax.f32 %v411, 0.0
      %v482 = vmax.f32 %v416, 0.0
      %v483 = vmax.f32 %v419, 0.0
      %v484 = vmax.f32 %v424, 0.0
      %v485 = vmax.f32 %v427, 0.0
      %v486 = vmax.f32 %v432, 0.0
      %v487 = vmax.f32 %v435, 0.0
      %v488 = vmax.f32 %v440, 0.0
      %v489 = vmax.f32 %v443, 0.0
      %v490 = vmax.f32 %v448, 0.0
      %v491 = vmax.f32 %v451, 0.0
      %v492 = vmax.f32 %v456, 0.0
      %v493 = vmax.f32 %v459, 0.0
      %v494 = vmax.f32 %v464, 0.0
      %v495 = vmax.f32 %v467, 0.0
      %v496 = vmax.f32 %v472, 0.0
      %v497 = vmax.f32 %v475, 0.0
      %v498 = vpack.c.bf16 %v479, %v478
      %v499 = vpack.c.bf16 %v481, %v480
      %v500 = vpack.c.bf16 %v483, %v482
      %v501 = vpack.c.bf16 %v485, %v484
      %v502 = vpack.c.bf16 %v487, %v486
      %v503 = vpack.c.bf16 %v489, %v488
      %v504 = vpack.c.bf16 %v491, %v490
      %v505 = vpack.c.bf16 %v493, %v492
      %v506 = vpack.c.bf16 %v495, %v494
      %v507 = vpack.c.bf16 %v497, %v496
      %v518 = vunpack.c.l.b16 %v498
      %v519 = vunpack.c.h.b16 %v498
      %v520 = vunpack.c.l.b16 %v499
      %v521 = vunpack.c.h.b16 %v499
      %v522 = vunpack.c.l.b16 %v500
      %v523 = vunpack.c.h.b16 %v500
      %v524 = vunpack.c.l.b16 %v501
      %v525 = vunpack.c.h.b16 %v501
      %v526 = vunpack.c.l.b16 %v502
      %v527 = vunpack.c.h.b16 %v502
      %v528 = vunpack.c.l.b16 %v503
      %v529 = vunpack.c.h.b16 %v503
      %v530 = vunpack.c.l.b16 %v504
      %v531 = vunpack.c.h.b16 %v504
      %v532 = vunpack.c.l.b16 %v505
      %v533 = vunpack.c.h.b16 %v505
      %v534 = vunpack.c.l.b16 %v506
      %v535 = vunpack.c.h.b16 %v506
      %v536 = vunpack.c.l.b16 %v507
      %v537 = vunpack.c.h.b16 %v507
      %v538 = vpack.c.b16 %v518, %v518
      %v539 = vpack.c.b16 %v519, %v519
      %v540 = vpack.c.b16 %v520, %v520
      %v541 = vpack.c.b16 %v521, %v521
      %v542 = vpack.c.b16 %v522, %v522
      %v543 = vpack.c.b16 %v523, %v523
      %v544 = vpack.c.b16 %v524, %v524
      %v545 = vpack.c.b16 %v525, %v525
      %v546 = vpack.c.b16 %v526, %v526
      %v547 = vpack.c.b16 %v527, %v527
      %v548 = vpack.c.b16 %v528, %v528
      %v549 = vpack.c.b16 %v529, %v529
      %v550 = vpack.c.b16 %v530, %v530
      %v551 = vpack.c.b16 %v531, %v531
      %v552 = vpack.c.b16 %v532, %v532
      %v553 = vpack.c.b16 %v533, %v533
      %v554 = vpack.c.b16 %v534, %v534
      %v555 = vpack.c.b16 %v535, %v535
      %v556 = vpack.c.b16 %v536, %v536
      %v557 = vpack.c.b16 %v537, %v537
      %vm558 = vsmask.f32 256
      %vm559 = vsmask.f32 4368
      %vm560 = vmor %vm558, %vm559
      %v562 = vshrl.u32 %v538, 16
      %v564 = vrot.slane %v562, 7
      %v565 = vshll.u32 %v538, 16
      %v567 = vor.u32 %v564, %v565
      %v568 = vrot.slane %v564, 4
      %v570 = vshrl.u32 %v539, 16
      %v572 = vrot.slane %v570, 7
      %v573 = vshll.u32 %v539, 16
      %v575 = vor.u32 %v572, %v573
      %v576 = vsel %vm560, %v568, %v575
      %v577 = vrot.slane %v572, 4
      %v579 = vshrl.u32 %v540, 16
      %v581 = vrot.slane %v579, 7
      %v582 = vshll.u32 %v540, 16
      %v584 = vor.u32 %v581, %v582
      %v585 = vrot.slane %v581, 4
      %v587 = vshrl.u32 %v541, 16
      %v589 = vrot.slane %v587, 7
      %v590 = vshll.u32 %v541, 16
      %v592 = vor.u32 %v589, %v590
      %v593 = vsel %vm560, %v585, %v592
      %v594 = vrot.slane %v589, 4
      %v596 = vshrl.u32 %v542, 16
      %v598 = vrot.slane %v596, 7
      %v599 = vshll.u32 %v542, 16
      %v601 = vor.u32 %v598, %v599
      %v602 = vrot.slane %v598, 4
      %v604 = vshrl.u32 %v543, 16
      %v606 = vrot.slane %v604, 7
      %v607 = vshll.u32 %v543, 16
      %v609 = vor.u32 %v606, %v607
      %v610 = vsel %vm560, %v602, %v609
      %v611 = vrot.slane %v606, 4
      %v613 = vshrl.u32 %v544, 16
      %v615 = vrot.slane %v613, 7
      %v616 = vshll.u32 %v544, 16
      %v618 = vor.u32 %v615, %v616
      %v619 = vrot.slane %v615, 4
      %v621 = vshrl.u32 %v545, 16
      %v623 = vrot.slane %v621, 7
      %v624 = vshll.u32 %v545, 16
      %v626 = vor.u32 %v623, %v624
      %v627 = vsel %vm560, %v619, %v626
      %v628 = vrot.slane %v623, 4
      %v630 = vshrl.u32 %v546, 16
      %v632 = vrot.slane %v630, 7
      %v633 = vshll.u32 %v546, 16
      %v635 = vor.u32 %v632, %v633
      %v636 = vrot.slane %v632, 4
      %v638 = vshrl.u32 %v547, 16
      %v640 = vrot.slane %v638, 7
      %v641 = vshll.u32 %v547, 16
      %v643 = vor.u32 %v640, %v641
      %v644 = vsel %vm560, %v636, %v643
      %v645 = vrot.slane %v640, 4
      %v647 = vshrl.u32 %v548, 16
      %v649 = vrot.slane %v647, 7
      %v650 = vshll.u32 %v548, 16
      %v652 = vor.u32 %v649, %v650
      %v653 = vrot.slane %v649, 4
      %v655 = vshrl.u32 %v549, 16
      %v657 = vrot.slane %v655, 7
      %v658 = vshll.u32 %v549, 16
      %v660 = vor.u32 %v657, %v658
      %v661 = vsel %vm560, %v653, %v660
      %v662 = vrot.slane %v657, 4
      %v664 = vshrl.u32 %v550, 16
      %v666 = vrot.slane %v664, 7
      %v667 = vshll.u32 %v550, 16
      %v669 = vor.u32 %v666, %v667
      %v670 = vrot.slane %v666, 4
      %v672 = vshrl.u32 %v551, 16
      %v674 = vrot.slane %v672, 7
      %v675 = vshll.u32 %v551, 16
      %v677 = vor.u32 %v674, %v675
      %v678 = vsel %vm560, %v670, %v677
      %v679 = vrot.slane %v674, 4
      %v681 = vshrl.u32 %v552, 16
      %v683 = vrot.slane %v681, 7
      %v684 = vshll.u32 %v552, 16
      %v686 = vor.u32 %v683, %v684
      %v687 = vrot.slane %v683, 4
      %v689 = vshrl.u32 %v553, 16
      %v691 = vrot.slane %v689, 7
      %v692 = vshll.u32 %v553, 16
      %v694 = vor.u32 %v691, %v692
      %v695 = vsel %vm560, %v687, %v694
      %v696 = vrot.slane %v691, 4
      %v698 = vshrl.u32 %v554, 16
      %v700 = vrot.slane %v698, 7
      %v701 = vshll.u32 %v554, 16
      %v703 = vor.u32 %v700, %v701
      %v704 = vrot.slane %v700, 4
      %v706 = vshrl.u32 %v555, 16
      %v708 = vrot.slane %v706, 7
      %v709 = vshll.u32 %v555, 16
      %v711 = vor.u32 %v708, %v709
      %v712 = vsel %vm560, %v704, %v711
      %v713 = vrot.slane %v708, 4
      %v715 = vshrl.u32 %v556, 16
      %v717 = vrot.slane %v715, 7
      %v718 = vshll.u32 %v556, 16
      %v720 = vor.u32 %v717, %v718
      %v721 = vrot.slane %v717, 4
      %v723 = vshrl.u32 %v557, 16
      %v725 = vrot.slane %v723, 7
      %v726 = vshll.u32 %v557, 16
      %v728 = vor.u32 %v725, %v726
      %v729 = vsel %vm560, %v721, %v728
      %v730 = vrot.slane %v725, 4
      %vm761 = vcmask 60416
      %vm762 = vsmask.f32 7938
      %vm763 = vmand %vm761, %vm762
      %v764 = vld [vmem:[#allocation2] sm:$0xf]
      %v765 = vsel %vm763, %v567, %v764
      %766 = vst [vmem:[#allocation2] sm:$0xf] %v765
      %vm767 = vcmask 60416
      %768 = vst.msk [vmem:[#allocation2 + $0x4] sm:$0xf] %vm767, %v576
      %vm769 = vcmask 57344
      %vm770 = vmand %vm769, %vm558
      %v771 = vld [vmem:[#allocation2 + $0x8] sm:$0x1]
      %v772 = vsel %vm770, %v577, %v771
      %773 = vst [vmem:[#allocation2 + $0x8] sm:$0x1] %v772
      %v774 = vld [vmem:[#allocation2 + $0xc] sm:$0xf]
      %v775 = vsel %vm763, %v584, %v774
      %776 = vst [vmem:[#allocation2 + $0xc] sm:$0xf] %v775
      %777 = vst.msk [vmem:[#allocation2 + $0x10] sm:$0xf] %vm767, %v593
      %v778 = vld [vmem:[#allocation2 + $0x14] sm:$0x1]
      %v779 = vsel %vm770, %v594, %v778
      %780 = vst [vmem:[#allocation2 + $0x14] sm:$0x1] %v779
      %v781 = vld [vmem:[#allocation2 + $0x18] sm:$0xf]
      %v782 = vsel %vm763, %v601, %v781
      %783 = vst [vmem:[#allocation2 + $0x18] sm:$0xf] %v782
      %784 = vst.msk [vmem:[#allocation2 + $0x1c] sm:$0xf] %vm767, %v610
      %v785 = vld [vmem:[#allocation2 + $0x20] sm:$0x1]
      %v786 = vsel %vm770, %v611, %v785
      %787 = vst [vmem:[#allocation2 + $0x20] sm:$0x1] %v786
      %v788 = vld [vmem:[#allocation2 + $0x24] sm:$0xf]
      %v789 = vsel %vm763, %v618, %v788
      %790 = vst [vmem:[#allocation2 + $0x24] sm:$0xf] %v789
      %791 = vst.msk [vmem:[#allocation2 + $0x28] sm:$0xf] %vm767, %v627
      %v792 = vld [vmem:[#allocation2 + $0x2c] sm:$0x1]
      %v793 = vsel %vm770, %v628, %v792
      %794 = vst [vmem:[#allocation2 + $0x2c] sm:$0x1] %v793
      %v795 = vld [vmem:[#allocation2 + $0x30] sm:$0xf]
      %v796 = vsel %vm763, %v635, %v795
      %797 = vst [vmem:[#allocation2 + $0x30] sm:$0xf] %v796
      %798 = vst.msk [vmem:[#allocation2 + $0x34] sm:$0xf] %vm767, %v644
      %v799 = vld [vmem:[#allocation2 + $0x38] sm:$0x1]
      %v800 = vsel %vm770, %v645, %v799
      %801 = vst [vmem:[#allocation2 + $0x38] sm:$0x1] %v800
      %v802 = vld [vmem:[#allocation2 + $0x3c] sm:$0xf]
      %v803 = vsel %vm763, %v652, %v802
      %804 = vst [vmem:[#allocation2 + $0x3c] sm:$0xf] %v803
      %805 = vst.msk [vmem:[#allocation2 + $0x40] sm:$0xf] %vm767, %v661
      %v806 = vld [vmem:[#allocation2 + $0x44] sm:$0x1]
      %v807 = vsel %vm770, %v662, %v806
      %808 = vst [vmem:[#allocation2 + $0x44] sm:$0x1] %v807
      %v809 = vld [vmem:[#allocation2 + $0x48] sm:$0xf]
      %v810 = vsel %vm763, %v669, %v809
      %811 = vst [vmem:[#allocation2 + $0x48] sm:$0xf] %v810
      %812 = vst.msk [vmem:[#allocation2 + $0x4c] sm:$0xf] %vm767, %v678
      %v813 = vld [vmem:[#allocation2 + $0x50] sm:$0x1]
      %v814 = vsel %vm770, %v679, %v813
      %815 = vst [vmem:[#allocation2 + $0x50] sm:$0x1] %v814
      %v816 = vld [vmem:[#allocation2 + $0x54] sm:$0xf]
      %v817 = vsel %vm763, %v686, %v816
      %818 = vst [vmem:[#allocation2 + $0x54] sm:$0xf] %v817
      %819 = vst.msk [vmem:[#allocation2 + $0x58] sm:$0xf] %vm767, %v695
      %v820 = vld [vmem:[#allocation2 + $0x5c] sm:$0x1]
      %v821 = vsel %vm770, %v696, %v820
      %822 = vst [vmem:[#allocation2 + $0x5c] sm:$0x1] %v821
      %v823 = vld [vmem:[#allocation2 + $0x60] sm:$0xf]
      %v824 = vsel %vm763, %v703, %v823
      %825 = vst [vmem:[#allocation2 + $0x60] sm:$0xf] %v824
      %826 = vst.msk [vmem:[#allocation2 + $0x64] sm:$0xf] %vm767, %v712
      %v827 = vld [vmem:[#allocation2 + $0x68] sm:$0x1]
      %v828 = vsel %vm770, %v713, %v827
      %829 = vst [vmem:[#allocation2 + $0x68] sm:$0x1] %v828
      %v830 = vld [vmem:[#allocation2 + $0x6c] sm:$0xf]
      %v831 = vsel %vm763, %v720, %v830
      %832 = vst [vmem:[#allocation2 + $0x6c] sm:$0xf] %v831
      %833 = vst.msk [vmem:[#allocation2 + $0x70] sm:$0xf] %vm767, %v729
      %v834 = vld [vmem:[#allocation2 + $0x74] sm:$0x1]
      %v835 = vsel %vm770, %v730, %v834
      %836 = vst [vmem:[#allocation2 + $0x74] sm:$0x1] %v835
      %v837 = vld [vmem:[#allocation2] sm:$0x1]
      %v838 = vsel %vm770, 0, %v837
      %839 = vst [vmem:[#allocation2] sm:$0x1] %v838
      %v840 = vld [vmem:[#allocation2 + $0xc] sm:$0x1]
      %v841 = vsel %vm770, 0, %v840
      %842 = vst [vmem:[#allocation2 + $0xc] sm:$0x1] %v841
      %v843 = vld [vmem:[#allocation2 + $0x18] sm:$0x1]
      %v844 = vsel %vm770, 0, %v843
      %845 = vst [vmem:[#allocation2 + $0x18] sm:$0x1] %v844
      %v846 = vld [vmem:[#allocation2 + $0x24] sm:$0x1]
      %v847 = vsel %vm770, 0, %v846
      %848 = vst [vmem:[#allocation2 + $0x24] sm:$0x1] %v847
      %v849 = vld [vmem:[#allocation2 + $0x30] sm:$0x1]
      %v850 = vsel %vm770, 0, %v849
      %851 = vst [vmem:[#allocation2 + $0x30] sm:$0x1] %v850
      %v852 = vld [vmem:[#allocation2 + $0x3c] sm:$0x1]
      %v853 = vsel %vm770, 0, %v852
      %854 = vst [vmem:[#allocation2 + $0x3c] sm:$0x1] %v853
      %v855 = vld [vmem:[#allocation2 + $0x48] sm:$0x1]
      %v856 = vsel %vm770, 0, %v855
      %857 = vst [vmem:[#allocation2 + $0x48] sm:$0x1] %v856
      %v858 = vld [vmem:[#allocation2 + $0x54] sm:$0x1]
      %v859 = vsel %vm770, 0, %v858
      %860 = vst [vmem:[#allocation2 + $0x54] sm:$0x1] %v859
      %v861 = vld [vmem:[#allocation2 + $0x60] sm:$0x1]
      %v862 = vsel %vm770, 0, %v861
      %863 = vst [vmem:[#allocation2 + $0x60] sm:$0x1] %v862
      %v864 = vld [vmem:[#allocation2 + $0x6c] sm:$0x1]
      %v865 = vsel %vm770, 0, %v864
      %866 = vst [vmem:[#allocation2 + $0x6c] sm:$0x1] %v865
      %vm867 = vmand %vm769, %vm762
      %v868 = vld [vmem:[#allocation2 + $0x8] sm:$0x1]
      %v869 = vsel %vm867, 0, %v868
      %870 = vst [vmem:[#allocation2 + $0x8] sm:$0x1] %v869
      %v871 = vld [vmem:[#allocation2 + $0x14] sm:$0x1]
      %v872 = vsel %vm867, 0, %v871
      %873 = vst [vmem:[#allocation2 + $0x14] sm:$0x1] %v872
      %v874 = vld [vmem:[#allocation2 + $0x20] sm:$0x1]
      %v875 = vsel %vm867, 0, %v874
      %876 = vst [vmem:[#allocation2 + $0x20] sm:$0x1] %v875
      %v877 = vld [vmem:[#allocation2 + $0x2c] sm:$0x1]
      %v878 = vsel %vm867, 0, %v877
      %879 = vst [vmem:[#allocation2 + $0x2c] sm:$0x1] %v878
      %v880 = vld [vmem:[#allocation2 + $0x38] sm:$0x1]
      %v881 = vsel %vm867, 0, %v880
      %882 = vst [vmem:[#allocation2 + $0x38] sm:$0x1] %v881
      %v883 = vld [vmem:[#allocation2 + $0x44] sm:$0x1]
      %v884 = vsel %vm867, 0, %v883
      %885 = vst [vmem:[#allocation2 + $0x44] sm:$0x1] %v884
      %v886 = vld [vmem:[#allocation2 + $0x50] sm:$0x1]
      %v887 = vsel %vm867, 0, %v886
      %888 = vst [vmem:[#allocation2 + $0x50] sm:$0x1] %v887
      %v889 = vld [vmem:[#allocation2 + $0x5c] sm:$0x1]
      %v890 = vsel %vm867, 0, %v889
      %891 = vst [vmem:[#allocation2 + $0x5c] sm:$0x1] %v890
      %v892 = vld [vmem:[#allocation2 + $0x68] sm:$0x1]
      %v893 = vsel %vm867, 0, %v892
      %894 = vst [vmem:[#allocation2 + $0x68] sm:$0x1] %v893
      %v895 = vld [vmem:[#allocation2 + $0x74] sm:$0x1]
      %v896 = vsel %vm867, 0, %v895
      %897 = vst [vmem:[#allocation2 + $0x74] sm:$0x1] %v896
      %p898 = scmp.eq.s32.totalorder %s240, 0
      // Predicated region
      $region41: #{a_call__.1} parent=39 // pred_check
        %p899 = pneg %p898
      $region42: #{a_call__.1} parent=39 // pred_check_branch
        %901 = sbr.rel (%p899) target = $region44
      $region43: #{a_call__.1} parent=39 // pred_region
        %902 = vst.msk [vmem:[#allocation2] sm:$0xf] %vm767, 0
        %903 = vst.msk [vmem:[#allocation2 + $0x4] sm:$0xf] %vm767, 0
        %vm904 = vcmask 57344
        %905 = vst.msk [vmem:[#allocation2 + $0x8] sm:$0x1] %vm904, 0
      $region44: #{a_call__.1} parent=39 // pred_fallthru
        _
      %p906 = scmp.eq.s32.totalorder %s240, 1
      // Predicated region
      $region45: #{a_call__.1} parent=39 // pred_check
        %p907 = pneg %p906
      $region46: #{a_call__.1} parent=39 // pred_check_branch
        %909 = sbr.rel (%p907) target = $region48
      $region47: #{a_call__.1} parent=39 // pred_region
        %s910 = scalar_lea.vmem [#allocation2], 108
        %911 = vst.msk [vmem:[%s910] sm:$0xf] %vm767, 0
        %912 = vst.msk [vmem:[%s910 + $0x4] sm:$0xf] %vm767, 0
        %vm913 = vcmask 57344
        %914 = vst.msk [vmem:[%s910 + $0x8] sm:$0x1] %vm913, 0
      $region48: #{a_call__.1} parent=39 // pred_fallthru
        _
      %v915 = vld [vmem:[#allocation2] sm:$0xf]
      %v916 = vld [vmem:[#allocation2 + $0x4] sm:$0xf]
      %v917 = vld [vmem:[#allocation2 + $0xc] sm:$0xf]
      %v918 = vld [vmem:[#allocation2 + $0x10] sm:$0xf]
      %v919 = vld [vmem:[#allocation2 + $0x18] sm:$0xf]
      %v920 = vld [vmem:[#allocation2 + $0x1c] sm:$0xf]
      %v921 = vld [vmem:[#allocation2 + $0x24] sm:$0xf]
      %v922 = vld [vmem:[#allocation2 + $0x28] sm:$0xf]
      %v923 = vld [vmem:[#allocation2 + $0x30] sm:$0xf]
      %v924 = vld [vmem:[#allocation2 + $0x34] sm:$0xf]
      %v925 = vld [vmem:[#allocation2 + $0x3c] sm:$0xf]
      %v926 = vld [vmem:[#allocation2 + $0x40] sm:$0xf]
      %v927 = vld [vmem:[#allocation2 + $0x48] sm:$0xf]
      %v928 = vld [vmem:[#allocation2 + $0x4c] sm:$0xf]
      %v929 = vld [vmem:[#allocation2 + $0x54] sm:$0xf]
      %v930 = vld [vmem:[#allocation2 + $0x58] sm:$0xf]
      %v931 = vld [vmem:[%s3] sm:$0xf]
      %v932 = vld [vmem:[#allocation2 + $0x8] sm:$0x1]
      %v933 = vld [vmem:[#allocation2 + $0x14] sm:$0x1]
      %v934 = vld [vmem:[#allocation2 + $0x20] sm:$0x1]
      %v935 = vld [vmem:[#allocation2 + $0x2c] sm:$0x1]
      %v936 = vld [vmem:[#allocation2 + $0x38] sm:$0x1]
      %v937 = vld [vmem:[#allocation2 + $0x44] sm:$0x1]
      %v938 = vld [vmem:[#allocation2 + $0x50] sm:$0x1]
      %v939 = vld [vmem:[#allocation2 + $0x5c] sm:$0x1]
      %vm940 = vsmask.f32 3328
      %vm941 = vsmask.f32 7440
      %vm942 = vmor %vm940, %vm941
      %v944 = vshrl.u32 %v915, 16
      %v946 = vrot.slane %v944, 4
      %v947 = vshll.u32 %v915, 16
      %v949 = vrot.slane %v947, 5
      %v950 = vor.u32 %v946, %v949
      %v951 = vrot.slane %v950, 4
      %v953 = vshll.u32 %v916, 16
      %v955 = vrot.slane %v953, 5
      %v956 = vsel %vm942, %v951, %v955
      %v957 = vshrl.u32 %v916, 16
      %v959 = vrot.slane %v957, 4
      %v960 = vor.u32 %v959, %v955
      %v961 = vrot.slane %v960, 4
      %v963 = vshll.u32 %v932, 16
      %v965 = vrot.slane %v963, 5
      %v966 = vsel %vm942, %v961, %v965
      %v968 = vshrl.u32 %v917, 16
      %v970 = vrot.slane %v968, 4
      %v971 = vshll.u32 %v917, 16
      %v973 = vrot.slane %v971, 5
      %v974 = vor.u32 %v970, %v973
      %v975 = vrot.slane %v974, 4
      %v977 = vshll.u32 %v918, 16
      %v979 = vrot.slane %v977, 5
      %v980 = vsel %vm942, %v975, %v979
      %v981 = vshrl.u32 %v918, 16
      %v983 = vrot.slane %v981, 4
      %v984 = vor.u32 %v983, %v979
      %v985 = vrot.slane %v984, 4
      %v987 = vshll.u32 %v933, 16
      %v989 = vrot.slane %v987, 5
      %v990 = vsel %vm942, %v985, %v989
      %v992 = vshrl.u32 %v919, 16
      %v994 = vrot.slane %v992, 4
      %v995 = vshll.u32 %v919, 16
      %v997 = vrot.slane %v995, 5
      %v998 = vor.u32 %v994, %v997
      %v999 = vrot.slane %v998, 4
      %v1001 = vshll.u32 %v920, 16
      %v1003 = vrot.slane %v1001, 5
      %v1004 = vsel %vm942, %v999, %v1003
      %v1005 = vshrl.u32 %v920, 16
      %v1007 = vrot.slane %v1005, 4
      %v1008 = vor.u32 %v1007, %v1003
      %v1009 = vrot.slane %v1008, 4
      %v1011 = vshll.u32 %v934, 16
      %v1013 = vrot.slane %v1011, 5
      %v1014 = vsel %vm942, %v1009, %v1013
      %v1016 = vshrl.u32 %v921, 16
      %v1018 = vrot.slane %v1016, 4
      %v1019 = vshll.u32 %v921, 16
      %v1021 = vrot.slane %v1019, 5
      %v1022 = vor.u32 %v1018, %v1021
      %v1023 = vrot.slane %v1022, 4
      %v1025 = vshll.u32 %v922, 16
      %v1027 = vrot.slane %v1025, 5
      %v1028 = vsel %vm942, %v1023, %v1027
      %v1029 = vshrl.u32 %v922, 16
      %v1031 = vrot.slane %v1029, 4
      %v1032 = vor.u32 %v1031, %v1027
      %v1033 = vrot.slane %v1032, 4
      %v1035 = vshll.u32 %v935, 16
      %v1037 = vrot.slane %v1035, 5
      %v1038 = vsel %vm942, %v1033, %v1037
      %v1040 = vshrl.u32 %v923, 16
      %v1042 = vrot.slane %v1040, 4
      %v1043 = vshll.u32 %v923, 16
      %v1045 = vrot.slane %v1043, 5
      %v1046 = vor.u32 %v1042, %v1045
      %v1047 = vrot.slane %v1046, 4
      %v1049 = vshll.u32 %v924, 16
      %v1051 = vrot.slane %v1049, 5
      %v1052 = vsel %vm942, %v1047, %v1051
      %v1053 = vshrl.u32 %v924, 16
      %v1055 = vrot.slane %v1053, 4
      %v1056 = vor.u32 %v1055, %v1051
      %v1057 = vrot.slane %v1056, 4
      %v1059 = vshll.u32 %v936, 16
      %v1061 = vrot.slane %v1059, 5
      %v1062 = vsel %vm942, %v1057, %v1061
      %v1064 = vshrl.u32 %v925, 16
      %v1066 = vrot.slane %v1064, 4
      %v1067 = vshll.u32 %v925, 16
      %v1069 = vrot.slane %v1067, 5
      %v1070 = vor.u32 %v1066, %v1069
      %v1071 = vrot.slane %v1070, 4
      %v1073 = vshll.u32 %v926, 16
      %v1075 = vrot.slane %v1073, 5
      %v1076 = vsel %vm942, %v1071, %v1075
      %v1077 = vshrl.u32 %v926, 16
      %v1079 = vrot.slane %v1077, 4
      %v1080 = vor.u32 %v1079, %v1075
      %v1081 = vrot.slane %v1080, 4
      %v1083 = vshll.u32 %v937, 16
      %v1085 = vrot.slane %v1083, 5
      %v1086 = vsel %vm942, %v1081, %v1085
      %v1088 = vshrl.u32 %v927, 16
      %v1090 = vrot.slane %v1088, 4
      %v1091 = vshll.u32 %v927, 16
      %v1093 = vrot.slane %v1091, 5
      %v1094 = vor.u32 %v1090, %v1093
      %v1095 = vrot.slane %v1094, 4
      %v1097 = vshll.u32 %v928, 16
      %v1099 = vrot.slane %v1097, 5
      %v1100 = vsel %vm942, %v1095, %v1099
      %v1101 = vshrl.u32 %v928, 16
      %v1103 = vrot.slane %v1101, 4
      %v1104 = vor.u32 %v1103, %v1099
      %v1105 = vrot.slane %v1104, 4
      %v1107 = vshll.u32 %v938, 16
      %v1109 = vrot.slane %v1107, 5
      %v1110 = vsel %vm942, %v1105, %v1109
      %v1112 = vshrl.u32 %v929, 16
      %v1114 = vrot.slane %v1112, 4
      %v1115 = vshll.u32 %v929, 16
      %v1117 = vrot.slane %v1115, 5
      %v1118 = vor.u32 %v1114, %v1117
      %v1119 = vrot.slane %v1118, 4
      %v1121 = vshll.u32 %v930, 16
      %v1123 = vrot.slane %v1121, 5
      %v1124 = vsel %vm942, %v1119, %v1123
      %v1125 = vshrl.u32 %v930, 16
      %v1127 = vrot.slane %v1125, 4
      %v1128 = vor.u32 %v1127, %v1123
      %v1129 = vrot.slane %v1128, 4
      %v1131 = vshll.u32 %v939, 16
      %v1133 = vrot.slane %v1131, 5
      %v1134 = vsel %vm942, %v1129, %v1133
      %v1135 = vld [vmem:[%s3 + $0x4] sm:$0xf]
      %v1136 = vunpack.c.l.b16 %v956
      %v1137 = vunpack.c.l.b16 %v966
      %v1138 = vunpack.c.l.b16 %v980
      %v1139 = vunpack.c.l.b16 %v990
      %v1140 = vunpack.c.l.b16 %v1004
      %v1141 = vunpack.c.l.b16 %v1014
      %v1142 = vunpack.c.l.b16 %v1028
      %v1143 = vunpack.c.l.b16 %v1038
      %v1144 = vunpack.c.l.b16 %v1052
      %v1145 = vunpack.c.l.b16 %v1062
      %v1146 = vunpack.c.l.b16 %v1076
      %v1147 = vunpack.c.l.b16 %v1086
      %v1148 = vunpack.c.l.b16 %v1100
      %v1149 = vunpack.c.l.b16 %v1110
      %v1150 = vunpack.c.l.b16 %v1124
      %v1151 = vunpack.c.l.b16 %v1134
      %v1152 = vpack.c.b16 %v1137, %v1136
      %v1153 = vpack.c.b16 %v1139, %v1138
      %v1154 = vpack.c.b16 %v1141, %v1140
      %v1155 = vpack.c.b16 %v1143, %v1142
      %v1156 = vpack.c.b16 %v1145, %v1144
      %v1157 = vpack.c.b16 %v1147, %v1146
      %v1158 = vpack.c.b16 %v1149, %v1148
      %v1159 = vpack.c.b16 %v1151, %v1150
      %vm1160 = vcmask 64512
      %v1162 = vsel %vm1160, %v1152, 0
      %v1165 = vsel %vm1160, %v1153, 0
      %v1168 = vsel %vm1160, %v1154, 0
      %v1171 = vsel %vm1160, %v1155, 0
      %v1174 = vsel %vm1160, %v1156, 0
      %v1177 = vsel %vm1160, %v1157, 0
      %v1180 = vsel %vm1160, %v1158, 0
      %v1183 = vsel %vm1160, %v1159, 0
      %vm1185 = vcmask 1043456
      %v1187 = vsel %vm1185, %v1135, 0
      %1189 = vmatprep.subr.bf16.mxu0 0
      %1190 = vmatpush1.bf16.msra.mxu0 %v1187
      %1191 = vmatprep.subr.bf16.mxu0 0
      %1192 = vmatpush1.bf16.msra.mxu0 0
      %1193 = vmatprep.subr.bf16.mxu0 0
      %1194 = vmatpush1.bf16.msra.mxu0 0
      %1195 = vmatprep.subr.bf16.mxu0 0
      %1196 = vmatpush1.bf16.msra.mxu0 0
      %1197 = vmatprep.subr.bf16.mxu0 0
      %1198 = vmatpush1.bf16.msra.mxu0 0
      %1199 = vmatprep.subr.bf16.mxu0 0
      %1200 = vmatpush1.bf16.msra.mxu0 0
      %1201 = vmatprep.subr.bf16.mxu0 0
      %1202 = vmatpush1.bf16.msra.mxu0 0
      %1203 = vmatprep.subr.bf16.mxu0 0
      %1204 = vmatpush1.bf16.msra.mxu0 0
      %1205 = vmatprep.subr.bf16.mxu0 0
      %1206 = vmatpush1.bf16.msra.mxu0 0
      %1207 = vmatprep.subr.bf16.mxu0 0
      %1208 = vmatpush1.bf16.msra.mxu0 0
      %1209 = vmatprep.subr.bf16.mxu0 0
      %1210 = vmatpush1.bf16.msra.mxu0 0
      %1211 = vmatprep.subr.bf16.mxu0 0
      %1212 = vmatpush1.bf16.msra.mxu0 0
      %1213 = vmatprep.subr.bf16.mxu0 0
      %1214 = vmatpush1.bf16.msra.mxu0 0
      %1215 = vmatprep.subr.bf16.mxu0 0
      %1216 = vmatpush1.bf16.msra.mxu0 0
      %1217 = vmatprep.subr.bf16.mxu0 0
      %1218 = vmatpush1.bf16.msra.mxu0 0
      %1219 = vmatprep.subr.bf16.mxu0 0
      %1220 = vmatpush1.bf16.msra.mxu0 0
      %1221 = vmatprep.mubr.bf16.mxu0 0
      %1222 = vmatmul.mubr.bf16.gmra.mrb[0].mxu0 %v1162
      %v1223 = vpop.f32.mrb[0].mxu0
      %v1224 = vadd.f32 0.0, %v1223
      %v1225 = vpop.f32.mrb[0].mxu0
      %v1226 = vpop.f32.mrb[0].mxu0
      %v1227 = vadd.f32 0.0, %v1226
      %v1228 = vpop.f32.mrb[0].mxu0
      %1229 = vmatprep.mubr.bf16.mxu0 0
      %1230 = vmatmul.mubr.bf16.gmra.mrb[0].mxu0 %v1165
      %v1231 = vpop.f32.mrb[0].mxu0
      %v1232 = vadd.f32 0.0, %v1231
      %v1233 = vpop.f32.mrb[0].mxu0
      %v1234 = vpop.f32.mrb[0].mxu0
      %v1235 = vadd.f32 0.0, %v1234
      %v1236 = vpop.f32.mrb[0].mxu0
      %1237 = vmatprep.mubr.bf16.mxu0 0
      %1238 = vmatmul.mubr.bf16.gmra.mrb[0].mxu0 %v1168
      %v1239 = vpop.f32.mrb[0].mxu0
      %v1240 = vadd.f32 0.0, %v1239
      %v1241 = vpop.f32.mrb[0].mxu0
      %v1242 = vpop.f32.mrb[0].mxu0
      %v1243 = vadd.f32 0.0, %v1242
      %v1244 = vpop.f32.mrb[0].mxu0
      %1245 = vmatprep.mubr.bf16.mxu0 0
      %1246 = vmatmul.mubr.bf16.gmra.mrb[0].mxu0 %v1171
      %v1247 = vpop.f32.mrb[0].mxu0
      %v1248 = vadd.f32 0.0, %v1247
      %v1249 = vpop.f32.mrb[0].mxu0
      %v1250 = vpop.f32.mrb[0].mxu0
      %v1251 = vadd.f32 0.0, %v1250
      %v1252 = vpop.f32.mrb[0].mxu0
      %1253 = vmatprep.mubr.bf16.mxu0 0
      %1254 = vmatmul.mubr.bf16.gmra.mrb[0].mxu0 %v1174
      %v1255 = vpop.f32.mrb[0].mxu0
      %v1256 = vadd.f32 0.0, %v1255
      %v1257 = vpop.f32.mrb[0].mxu0
      %v1258 = vpop.f32.mrb[0].mxu0
      %v1259 = vadd.f32 0.0, %v1258
      %v1260 = vpop.f32.mrb[0].mxu0
      %1261 = vmatprep.mubr.bf16.mxu0 0
      %1262 = vmatmul.mubr.bf16.gmra.mrb[0].mxu0 %v1177
      %v1263 = vpop.f32.mrb[0].mxu0
      %v1264 = vadd.f32 0.0, %v1263
      %v1265 = vpop.f32.mrb[0].mxu0
      %v1266 = vpop.f32.mrb[0].mxu0
      %v1267 = vadd.f32 0.0, %v1266
      %v1268 = vpop.f32.mrb[0].mxu0
      %1269 = vmatprep.mubr.bf16.mxu0 0
      %1270 = vmatmul.mubr.bf16.gmra.mrb[0].mxu0 %v1180
      %v1271 = vpop.f32.mrb[0].mxu0
      %v1272 = vadd.f32 0.0, %v1271
      %v1273 = vpop.f32.mrb[0].mxu0
      %v1274 = vpop.f32.mrb[0].mxu0
      %v1275 = vadd.f32 0.0, %v1274
      %v1276 = vpop.f32.mrb[0].mxu0
      %1277 = vmatprep.mubr.bf16.mxu0 0
      %1278 = vmatmul.mubr.bf16.gmra.mrb[0].mxu0 %v1183
      %v1279 = vpop.f32.mrb[0].mxu0
      %v1280 = vadd.f32 0.0, %v1279
      %v1281 = vpop.f32.mrb[0].mxu0
      %v1282 = vpop.f32.mrb[0].mxu0
      %v1283 = vadd.f32 0.0, %v1282
      %v1284 = vpop.f32.mrb[0].mxu0
      %1285 = vdwg.mxu0
      %v1302 = vunpack.c.l.b16 %v915
      %v1303 = vunpack.c.l.b16 %v916
      %v1304 = vunpack.c.l.b16 %v917
      %v1305 = vunpack.c.l.b16 %v918
      %v1306 = vunpack.c.l.b16 %v919
      %v1307 = vunpack.c.l.b16 %v920
      %v1308 = vunpack.c.l.b16 %v921
      %v1309 = vunpack.c.l.b16 %v922
      %v1310 = vunpack.c.l.b16 %v923
      %v1311 = vunpack.c.l.b16 %v924
      %v1312 = vunpack.c.l.b16 %v925
      %v1313 = vunpack.c.l.b16 %v926
      %v1314 = vunpack.c.l.b16 %v927
      %v1315 = vunpack.c.l.b16 %v928
      %v1316 = vunpack.c.l.b16 %v929
      %v1317 = vunpack.c.l.b16 %v930
      %v1318 = vpack.c.b16 %v1303, %v1302
      %v1319 = vpack.c.b16 %v1305, %v1304
      %v1320 = vpack.c.b16 %v1307, %v1306
      %v1321 = vpack.c.b16 %v1309, %v1308
      %v1322 = vpack.c.b16 %v1311, %v1310
      %v1323 = vpack.c.b16 %v1313, %v1312
      %v1324 = vpack.c.b16 %v1315, %v1314
      %v1325 = vpack.c.b16 %v1317, %v1316
      %v1327 = vsel %vm1160, %v1318, 0
      %v1330 = vsel %vm1160, %v1319, 0
      %v1333 = vsel %vm1160, %v1320, 0
      %v1336 = vsel %vm1160, %v1321, 0
      %v1339 = vsel %vm1160, %v1322, 0
      %v1342 = vsel %vm1160, %v1323, 0
      %v1345 = vsel %vm1160, %v1324, 0
      %v1348 = vsel %vm1160, %v1325, 0
      %v1351 = vsel %vm1185, %v931, 0
      %1353 = vmatprep.subr.bf16.mxu0 0
      %1354 = vmatpush1.bf16.msra.mxu0 %v1351
      %1355 = vmatprep.subr.bf16.mxu0 0
      %1356 = vmatpush1.bf16.msra.mxu0 0
      %1357 = vmatprep.subr.bf16.mxu0 0
      %1358 = vmatpush1.bf16.msra.mxu0 0
      %1359 = vmatprep.subr.bf16.mxu0 0
      %1360 = vmatpush1.bf16.msra.mxu0 0
      %1361 = vmatprep.subr.bf16.mxu0 0
      %1362 = vmatpush1.bf16.msra.mxu0 0
      %1363 = vmatprep.subr.bf16.mxu0 0
      %1364 = vmatpush1.bf16.msra.mxu0 0
      %1365 = vmatprep.subr.bf16.mxu0 0
      %1366 = vmatpush1.bf16.msra.mxu0 0
      %1367 = vmatprep.subr.bf16.mxu0 0
      %1368 = vmatpush1.bf16.msra.mxu0 0
      %1369 = vmatprep.subr.bf16.mxu0 0
      %1370 = vmatpush1.bf16.msra.mxu0 0
      %1371 = vmatprep.subr.bf16.mxu0 0
      %1372 = vmatpush1.bf16.msra.mxu0 0
      %1373 = vmatprep.subr.bf16.mxu0 0
      %1374 = vmatpush1.bf16.msra.mxu0 0
      %1375 = vmatprep.subr.bf16.mxu0 0
      %1376 = vmatpush1.bf16.msra.mxu0 0
      %1377 = vmatprep.subr.bf16.mxu0 0
      %1378 = vmatpush1.bf16.msra.mxu0 0
      %1379 = vmatprep.subr.bf16.mxu0 0
      %1380 = vmatpush1.bf16.msra.mxu0 0
      %1381 = vmatprep.subr.bf16.mxu0 0
      %1382 = vmatpush1.bf16.msra.mxu0 0
      %1383 = vmatprep.subr.bf16.mxu0 0
      %1384 = vmatpush1.bf16.msra.mxu0 0
      %1385 = vmatprep.mubr.bf16.mxu0 0
      %1386 = vmatmul.mubr.bf16.gmra.mrb[0].mxu0 %v1327
      %v1387 = vpop.f32.mrb[0].mxu0
      %v1388 = vadd.f32 %v1224, %v1387
      %v1389 = vpop.f32.mrb[0].mxu0
      %v1390 = vpop.f32.mrb[0].mxu0
      %v1391 = vadd.f32 %v1227, %v1390
      %v1392 = vpop.f32.mrb[0].mxu0
      %1393 = vmatprep.mubr.bf16.mxu0 0
      %1394 = vmatmul.mubr.bf16.gmra.mrb[0].mxu0 %v1330
      %v1395 = vpop.f32.mrb[0].mxu0
      %v1396 = vadd.f32 %v1232, %v1395
      %v1397 = vpop.f32.mrb[0].mxu0
      %v1398 = vpop.f32.mrb[0].mxu0
      %v1399 = vadd.f32 %v1235, %v1398
      %v1400 = vpop.f32.mrb[0].mxu0
      %1401 = vmatprep.mubr.bf16.mxu0 0
      %1402 = vmatmul.mubr.bf16.gmra.mrb[0].mxu0 %v1333
      %v1403 = vpop.f32.mrb[0].mxu0
      %v1404 = vadd.f32 %v1240, %v1403
      %v1405 = vpop.f32.mrb[0].mxu0
      %v1406 = vpop.f32.mrb[0].mxu0
      %v1407 = vadd.f32 %v1243, %v1406
      %v1408 = vpop.f32.mrb[0].mxu0
      %1409 = vmatprep.mubr.bf16.mxu0 0
      %1410 = vmatmul.mubr.bf16.gmra.mrb[0].mxu0 %v1336
      %v1411 = vpop.f32.mrb[0].mxu0
      %v1412 = vadd.f32 %v1248, %v1411
      %v1413 = vpop.f32.mrb[0].mxu0
      %v1414 = vpop.f32.mrb[0].mxu0
      %v1415 = vadd.f32 %v1251, %v1414
      %v1416 = vpop.f32.mrb[0].mxu0
      %1417 = vmatprep.mubr.bf16.mxu0 0
      %1418 = vmatmul.mubr.bf16.gmra.mrb[0].mxu0 %v1339
      %v1419 = vpop.f32.mrb[0].mxu0
      %v1420 = vadd.f32 %v1256, %v1419
      %v1421 = vpop.f32.mrb[0].mxu0
      %v1422 = vpop.f32.mrb[0].mxu0
      %v1423 = vadd.f32 %v1259, %v1422
      %v1424 = vpop.f32.mrb[0].mxu0
      %1425 = vmatprep.mubr.bf16.mxu0 0
      %1426 = vmatmul.mubr.bf16.gmra.mrb[0].mxu0 %v1342
      %v1427 = vpop.f32.mrb[0].mxu0
      %v1428 = vadd.f32 %v1264, %v1427
      %v1429 = vpop.f32.mrb[0].mxu0
      %v1430 = vpop.f32.mrb[0].mxu0
      %v1431 = vadd.f32 %v1267, %v1430
      %v1432 = vpop.f32.mrb[0].mxu0
      %1433 = vmatprep.mubr.bf16.mxu0 0
      %1434 = vmatmul.mubr.bf16.gmra.mrb[0].mxu0 %v1345
      %v1435 = vpop.f32.mrb[0].mxu0
      %v1436 = vadd.f32 %v1272, %v1435
      %v1437 = vpop.f32.mrb[0].mxu0
      %v1438 = vpop.f32.mrb[0].mxu0
      %v1439 = vadd.f32 %v1275, %v1438
      %v1440 = vpop.f32.mrb[0].mxu0
      %1441 = vmatprep.mubr.bf16.mxu0 0
      %1442 = vmatmul.mubr.bf16.gmra.mrb[0].mxu0 %v1348
      %v1443 = vpop.f32.mrb[0].mxu0
      %v1444 = vadd.f32 %v1280, %v1443
      %v1445 = vpop.f32.mrb[0].mxu0
      %v1446 = vpop.f32.mrb[0].mxu0
      %v1447 = vadd.f32 %v1283, %v1446
      %v1448 = vpop.f32.mrb[0].mxu0
      %1449 = vdwg.mxu0
      %v1450 = vld [vmem:[#allocation2] sm:$0xe]
      %v1451 = vld [vmem:[#allocation2 + $0xc] sm:$0xe]
      %v1452 = vld [vmem:[#allocation2 + $0x18] sm:$0xe]
      %v1453 = vld [vmem:[#allocation2 + $0x24] sm:$0xe]
      %v1454 = vld [vmem:[#allocation2 + $0x30] sm:$0xe]
      %v1455 = vld [vmem:[#allocation2 + $0x3c] sm:$0xe]
      %v1456 = vld [vmem:[#allocation2 + $0x48] sm:$0xe]
      %v1457 = vld [vmem:[#allocation2 + $0x54] sm:$0xe]
      %vm1474 = vcmask 1042432
      %vm1475 = vcmask 1046532
      %vm1476 = vmor %vm1474, %vm1475
      %v1477 = vrot.slane %v1450, 5
      %v1478 = vrot.slane %v1477, 4
      %v1479 = vrot.slane %v916, 5
      %v1480 = vsel %vm1476, %v1478, %v1479
      %v1481 = vrot.slane %v1479, 4
      %v1482 = vrot.slane %v932, 5
      %v1483 = vsel %vm1476, %v1481, %v1482
      %v1484 = vrot.slane %v1451, 5
      %v1485 = vrot.slane %v1484, 4
      %v1486 = vrot.slane %v918, 5
      %v1487 = vsel %vm1476, %v1485, %v1486
      %v1488 = vrot.slane %v1486, 4
      %v1489 = vrot.slane %v933, 5
      %v1490 = vsel %vm1476, %v1488, %v1489
      %v1491 = vrot.slane %v1452, 5
      %v1492 = vrot.slane %v1491, 4
      %v1493 = vrot.slane %v920, 5
      %v1494 = vsel %vm1476, %v1492, %v1493
      %v1495 = vrot.slane %v1493, 4
      %v1496 = vrot.slane %v934, 5
      %v1497 = vsel %vm1476, %v1495, %v1496
      %v1498 = vrot.slane %v1453, 5
      %v1499 = vrot.slane %v1498, 4
      %v1500 = vrot.slane %v922, 5
      %v1501 = vsel %vm1476, %v1499, %v1500
      %v1502 = vrot.slane %v1500, 4
      %v1503 = vrot.slane %v935, 5
      %v1504 = vsel %vm1476, %v1502, %v1503
      %v1505 = vrot.slane %v1454, 5
      %v1506 = vrot.slane %v1505, 4
      %v1507 = vrot.slane %v924, 5
      %v1508 = vsel %vm1476, %v1506, %v1507
      %v1509 = vrot.slane %v1507, 4
      %v1510 = vrot.slane %v936, 5
      %v1511 = vsel %vm1476, %v1509, %v1510
      %v1512 = vrot.slane %v1455, 5
      %v1513 = vrot.slane %v1512, 4
      %v1514 = vrot.slane %v926, 5
      %v1515 = vsel %vm1476, %v1513, %v1514
      %v1516 = vrot.slane %v1514, 4
      %v1517 = vrot.slane %v937, 5
      %v1518 = vsel %vm1476, %v1516, %v1517
      %v1519 = vrot.slane %v1456, 5
      %v1520 = vrot.slane %v1519, 4
      %v1521 = vrot.slane %v928, 5
      %v1522 = vsel %vm1476, %v1520, %v1521
      %v1523 = vrot.slane %v1521, 4
      %v1524 = vrot.slane %v938, 5
      %v1525 = vsel %vm1476, %v1523, %v1524
      %v1526 = vrot.slane %v1457, 5
      %v1527 = vrot.slane %v1526, 4
      %v1528 = vrot.slane %v930, 5
      %v1529 = vsel %vm1476, %v1527, %v1528
      %v1530 = vrot.slane %v1528, 4
      %v1531 = vrot.slane %v939, 5
      %v1532 = vsel %vm1476, %v1530, %v1531
      %v1533 = vld [vmem:[%s3 + $0x8] sm:$0xf]
      %v1534 = vunpack.c.l.b16 %v1480
      %v1535 = vunpack.c.l.b16 %v1483
      %v1536 = vunpack.c.l.b16 %v1487
      %v1537 = vunpack.c.l.b16 %v1490
      %v1538 = vunpack.c.l.b16 %v1494
      %v1539 = vunpack.c.l.b16 %v1497
      %v1540 = vunpack.c.l.b16 %v1501
      %v1541 = vunpack.c.l.b16 %v1504
      %v1542 = vunpack.c.l.b16 %v1508
      %v1543 = vunpack.c.l.b16 %v1511
      %v1544 = vunpack.c.l.b16 %v1515
      %v1545 = vunpack.c.l.b16 %v1518
      %v1546 = vunpack.c.l.b16 %v1522
      %v1547 = vunpack.c.l.b16 %v1525
      %v1548 = vunpack.c.l.b16 %v1529
      %v1549 = vunpack.c.l.b16 %v1532
      %v1550 = vpack.c.b16 %v1535, %v1534
      %v1551 = vpack.c.b16 %v1537, %v1536
      %v1552 = vpack.c.b16 %v1539, %v1538
      %v1553 = vpack.c.b16 %v1541, %v1540
      %v1554 = vpack.c.b16 %v1543, %v1542
      %v1555 = vpack.c.b16 %v1545, %v1544
      %v1556 = vpack.c.b16 %v1547, %v1546
      %v1557 = vpack.c.b16 %v1549, %v1548
      %v1559 = vsel %vm1160, %v1550, 0
      %v1562 = vsel %vm1160, %v1551, 0
      %v1565 = vsel %vm1160, %v1552, 0
      %v1568 = vsel %vm1160, %v1553, 0
      %v1571 = vsel %vm1160, %v1554, 0
      %v1574 = vsel %vm1160, %v1555, 0
      %v1577 = vsel %vm1160, %v1556, 0
      %v1580 = vsel %vm1160, %v1557, 0
      %v1583 = vsel %vm1185, %v1533, 0
      %1585 = vmatprep.subr.bf16.mxu0 0
      %1586 = vmatpush1.bf16.msra.mxu0 %v1583
      %1587 = vmatprep.subr.bf16.mxu0 0
      %1588 = vmatpush1.bf16.msra.mxu0 0
      %1589 = vmatprep.subr.bf16.mxu0 0
      %1590 = vmatpush1.bf16.msra.mxu0 0
      %1591 = vmatprep.subr.bf16.mxu0 0
      %1592 = vmatpush1.bf16.msra.mxu0 0
      %1593 = vmatprep.subr.bf16.mxu0 0
      %1594 = vmatpush1.bf16.msra.mxu0 0
      %1595 = vmatprep.subr.bf16.mxu0 0
      %1596 = vmatpush1.bf16.msra.mxu0 0
      %1597 = vmatprep.subr.bf16.mxu0 0
      %1598 = vmatpush1.bf16.msra.mxu0 0
      %1599 = vmatprep.subr.bf16.mxu0 0
      %1600 = vmatpush1.bf16.msra.mxu0 0
      %1601 = vmatprep.subr.bf16.mxu0 0
      %1602 = vmatpush1.bf16.msra.mxu0 0
      %1603 = vmatprep.subr.bf16.mxu0 0
      %1604 = vmatpush1.bf16.msra.mxu0 0
      %1605 = vmatprep.subr.bf16.mxu0 0
      %1606 = vmatpush1.bf16.msra.mxu0 0
      %1607 = vmatprep.subr.bf16.mxu0 0
      %1608 = vmatpush1.bf16.msra.mxu0 0
      %1609 = vmatprep.subr.bf16.mxu0 0
      %1610 = vmatpush1.bf16.msra.mxu0 0
      %1611 = vmatprep.subr.bf16.mxu0 0
      %1612 = vmatpush1.bf16.msra.mxu0 0
      %1613 = vmatprep.subr.bf16.mxu0 0
      %1614 = vmatpush1.bf16.msra.mxu0 0
      %1615 = vmatprep.subr.bf16.mxu0 0
      %1616 = vmatpush1.bf16.msra.mxu0 0
      %1617 = vmatprep.mubr.bf16.mxu0 0
      %1618 = vmatmul.mubr.bf16.gmra.mrb[0].mxu0 %v1559
      %v1619 = vpop.f32.mrb[0].mxu0
      %v1620 = vadd.f32 0.0, %v1619
      %v1621 = vpop.f32.mrb[0].mxu0
      %v1622 = vpop.f32.mrb[0].mxu0
      %v1623 = vadd.f32 0.0, %v1622
      %v1624 = vpop.f32.mrb[0].mxu0
      %1625 = vmatprep.mubr.bf16.mxu0 0
      %1626 = vmatmul.mubr.bf16.gmra.mrb[0].mxu0 %v1562
      %v1627 = vpop.f32.mrb[0].mxu0
      %v1628 = vadd.f32 0.0, %v1627
      %v1629 = vpop.f32.mrb[0].mxu0
      %v1630 = vpop.f32.mrb[0].mxu0
      %v1631 = vadd.f32 0.0, %v1630
      %v1632 = vpop.f32.mrb[0].mxu0
      %1633 = vmatprep.mubr.bf16.mxu0 0
      %1634 = vmatmul.mubr.bf16.gmra.mrb[0].mxu0 %v1565
      %v1635 = vpop.f32.mrb[0].mxu0
      %v1636 = vadd.f32 0.0, %v1635
      %v1637 = vpop.f32.mrb[0].mxu0
      %v1638 = vpop.f32.mrb[0].mxu0
      %v1639 = vadd.f32 0.0, %v1638
      %v1640 = vpop.f32.mrb[0].mxu0
      %1641 = vmatprep.mubr.bf16.mxu0 0
      %1642 = vmatmul.mubr.bf16.gmra.mrb[0].mxu0 %v1568
      %v1643 = vpop.f32.mrb[0].mxu0
      %v1644 = vadd.f32 0.0, %v1643
      %v1645 = vpop.f32.mrb[0].mxu0
      %v1646 = vpop.f32.mrb[0].mxu0
      %v1647 = vadd.f32 0.0, %v1646
      %v1648 = vpop.f32.mrb[0].mxu0
      %1649 = vmatprep.mubr.bf16.mxu0 0
      %1650 = vmatmul.mubr.bf16.gmra.mrb[0].mxu0 %v1571
      %v1651 = vpop.f32.mrb[0].mxu0
      %v1652 = vadd.f32 0.0, %v1651
      %v1653 = vpop.f32.mrb[0].mxu0
      %v1654 = vpop.f32.mrb[0].mxu0
      %v1655 = vadd.f32 0.0, %v1654
      %v1656 = vpop.f32.mrb[0].mxu0
      %1657 = vmatprep.mubr.bf16.mxu0 0
      %1658 = vmatmul.mubr.bf16.gmra.mrb[0].mxu0 %v1574
      %v1659 = vpop.f32.mrb[0].mxu0
      %v1660 = vadd.f32 0.0, %v1659
      %v1661 = vpop.f32.mrb[0].mxu0
      %v1662 = vpop.f32.mrb[0].mxu0
      %v1663 = vadd.f32 0.0, %v1662
      %v1664 = vpop.f32.mrb[0].mxu0
      %1665 = vmatprep.mubr.bf16.mxu0 0
      %1666 = vmatmul.mubr.bf16.gmra.mrb[0].mxu0 %v1577
      %v1667 = vpop.f32.mrb[0].mxu0
      %v1668 = vadd.f32 0.0, %v1667
      %v1669 = vpop.f32.mrb[0].mxu0
      %v1670 = vpop.f32.mrb[0].mxu0
      %v1671 = vadd.f32 0.0, %v1670
      %v1672 = vpop.f32.mrb[0].mxu0
      %1673 = vmatprep.mubr.bf16.mxu0 0
      %1674 = vmatmul.mubr.bf16.gmra.mrb[0].mxu0 %v1580
      %v1675 = vpop.f32.mrb[0].mxu0
      %v1676 = vadd.f32 0.0, %v1675
      %v1677 = vpop.f32.mrb[0].mxu0
      %v1678 = vpop.f32.mrb[0].mxu0
      %v1679 = vadd.f32 0.0, %v1678
      %v1680 = vpop.f32.mrb[0].mxu0
      %1681 = vdwg.mxu0
      %v1682 = vadd.f32 %v1388, %v1620
      %v1683 = vadd.f32 %v1391, %v1623
      %v1684 = vadd.f32 %v1396, %v1628
      %v1685 = vadd.f32 %v1399, %v1631
      %v1686 = vadd.f32 %v1404, %v1636
      %v1687 = vadd.f32 %v1407, %v1639
      %v1688 = vadd.f32 %v1412, %v1644
      %v1689 = vadd.f32 %v1415, %v1647
      %v1690 = vadd.f32 %v1420, %v1652
      %v1691 = vadd.f32 %v1423, %v1655
      %v1692 = vadd.f32 %v1428, %v1660
      %v1693 = vadd.f32 %v1431, %v1663
      %v1694 = vadd.f32 %v1436, %v1668
      %v1695 = vadd.f32 %v1439, %v1671
      %v1696 = vadd.f32 %v1444, %v1676
      %v1697 = vadd.f32 %v1447, %v1679
      %s1698 = scalar_lea.vmem [#allocation2], 12
      %v1699 = vld [vmem:[%s1698] sm:$0xf]
      %v1700 = vld [vmem:[%s1698 + $0x4] sm:$0xf]
      %v1701 = vld [vmem:[%s1698 + $0xc] sm:$0xf]
      %v1702 = vld [vmem:[%s1698 + $0x10] sm:$0xf]
      %v1703 = vld [vmem:[%s1698 + $0x18] sm:$0xf]
      %v1704 = vld [vmem:[%s1698 + $0x1c] sm:$0xf]
      %v1705 = vld [vmem:[%s1698 + $0x24] sm:$0xf]
      %v1706 = vld [vmem:[%s1698 + $0x28] sm:$0xf]
      %v1707 = vld [vmem:[%s1698 + $0x30] sm:$0xf]
      %v1708 = vld [vmem:[%s1698 + $0x34] sm:$0xf]
      %v1709 = vld [vmem:[%s1698 + $0x3c] sm:$0xf]
      %v1710 = vld [vmem:[%s1698 + $0x40] sm:$0xf]
      %v1711 = vld [vmem:[%s1698 + $0x48] sm:$0xf]
      %v1712 = vld [vmem:[%s1698 + $0x4c] sm:$0xf]
      %v1713 = vld [vmem:[%s1698 + $0x54] sm:$0xf]
      %v1714 = vld [vmem:[%s1698 + $0x58] sm:$0xf]
      %v1715 = vld [vmem:[%s3 + $0xc] sm:$0xf]
      %v1732 = vunpack.c.l.b16 %v1699
      %v1733 = vunpack.c.l.b16 %v1700
      %v1734 = vunpack.c.l.b16 %v1701
      %v1735 = vunpack.c.l.b16 %v1702
      %v1736 = vunpack.c.l.b16 %v1703
      %v1737 = vunpack.c.l.b16 %v1704
      %v1738 = vunpack.c.l.b16 %v1705
      %v1739 = vunpack.c.l.b16 %v1706
      %v1740 = vunpack.c.l.b16 %v1707
      %v1741 = vunpack.c.l.b16 %v1708
      %v1742 = vunpack.c.l.b16 %v1709
      %v1743 = vunpack.c.l.b16 %v1710
      %v1744 = vunpack.c.l.b16 %v1711
      %v1745 = vunpack.c.l.b16 %v1712
      %v1746 = vunpack.c.l.b16 %v1713
      %v1747 = vunpack.c.l.b16 %v1714
      %v1748 = vpack.c.b16 %v1733, %v1732
      %v1749 = vpack.c.b16 %v1735, %v1734
      %v1750 = vpack.c.b16 %v1737, %v1736
      %v1751 = vpack.c.b16 %v1739, %v1738
      %v1752 = vpack.c.b16 %v1741, %v1740
      %v1753 = vpack.c.b16 %v1743, %v1742
      %v1754 = vpack.c.b16 %v1745, %v1744
      %v1755 = vpack.c.b16 %v1747, %v1746
      %v1757 = vsel %vm1160, %v1748, 0
      %v1760 = vsel %vm1160, %v1749, 0
      %v1763 = vsel %vm1160, %v1750, 0
      %v1766 = vsel %vm1160, %v1751, 0
      %v1769 = vsel %vm1160, %v1752, 0
      %v1772 = vsel %vm1160, %v1753, 0
      %v1775 = vsel %vm1160, %v1754, 0
      %v1778 = vsel %vm1160, %v1755, 0
      %v1781 = vsel %vm1185, %v1715, 0
      %1783 = vmatprep.subr.bf16.mxu0 0
      %1784 = vmatpush1.bf16.msra.mxu0 %v1781
      %1785 = vmatprep.subr.bf16.mxu0 0
      %1786 = vmatpush1.bf16.msra.mxu0 0
      %1787 = vmatprep.subr.bf16.mxu0 0
      %1788 = vmatpush1.bf16.msra.mxu0 0
      %1789 = vmatprep.subr.bf16.mxu0 0
      %1790 = vmatpush1.bf16.msra.mxu0 0
      %1791 = vmatprep.subr.bf16.mxu0 0
      %1792 = vmatpush1.bf16.msra.mxu0 0
      %1793 = vmatprep.subr.bf16.mxu0 0
      %1794 = vmatpush1.bf16.msra.mxu0 0
      %1795 = vmatprep.subr.bf16.mxu0 0
      %1796 = vmatpush1.bf16.msra.mxu0 0
      %1797 = vmatprep.subr.bf16.mxu0 0
      %1798 = vmatpush1.bf16.msra.mxu0 0
      %1799 = vmatprep.subr.bf16.mxu0 0
      %1800 = vmatpush1.bf16.msra.mxu0 0
      %1801 = vmatprep.subr.bf16.mxu0 0
      %1802 = vmatpush1.bf16.msra.mxu0 0
      %1803 = vmatprep.subr.bf16.mxu0 0
      %1804 = vmatpush1.bf16.msra.mxu0 0
      %1805 = vmatprep.subr.bf16.mxu0 0
      %1806 = vmatpush1.bf16.msra.mxu0 0
      %1807 = vmatprep.subr.bf16.mxu0 0
      %1808 = vmatpush1.bf16.msra.mxu0 0
      %1809 = vmatprep.subr.bf16.mxu0 0
      %1810 = vmatpush1.bf16.msra.mxu0 0
      %1811 = vmatprep.subr.bf16.mxu0 0
      %1812 = vmatpush1.bf16.msra.mxu0 0
      %1813 = vmatprep.subr.bf16.mxu0 0
      %1814 = vmatpush1.bf16.msra.mxu0 0
      %1815 = vmatprep.mubr.bf16.mxu0 0
      %1816 = vmatmul.mubr.bf16.gmra.mrb[0].mxu0 %v1757
      %v1817 = vpop.f32.mrb[0].mxu0
      %v1818 = vadd.f32 0.0, %v1817
      %v1819 = vpop.f32.mrb[0].mxu0
      %v1820 = vpop.f32.mrb[0].mxu0
      %v1821 = vadd.f32 0.0, %v1820
      %v1822 = vpop.f32.mrb[0].mxu0
      %1823 = vmatprep.mubr.bf16.mxu0 0
      %1824 = vmatmul.mubr.bf16.gmra.mrb[0].mxu0 %v1760
      %v1825 = vpop.f32.mrb[0].mxu0
      %v1826 = vadd.f32 0.0, %v1825
      %v1827 = vpop.f32.mrb[0].mxu0
      %v1828 = vpop.f32.mrb[0].mxu0
      %v1829 = vadd.f32 0.0, %v1828
      %v1830 = vpop.f32.mrb[0].mxu0
      %1831 = vmatprep.mubr.bf16.mxu0 0
      %1832 = vmatmul.mubr.bf16.gmra.mrb[0].mxu0 %v1763
      %v1833 = vpop.f32.mrb[0].mxu0
      %v1834 = vadd.f32 0.0, %v1833
      %v1835 = vpop.f32.mrb[0].mxu0
      %v1836 = vpop.f32.mrb[0].mxu0
      %v1837 = vadd.f32 0.0, %v1836
      %v1838 = vpop.f32.mrb[0].mxu0
      %1839 = vmatprep.mubr.bf16.mxu0 0
      %1840 = vmatmul.mubr.bf16.gmra.mrb[0].mxu0 %v1766
      %v1841 = vpop.f32.mrb[0].mxu0
      %v1842 = vadd.f32 0.0, %v1841
      %v1843 = vpop.f32.mrb[0].mxu0
      %v1844 = vpop.f32.mrb[0].mxu0
      %v1845 = vadd.f32 0.0, %v1844
      %v1846 = vpop.f32.mrb[0].mxu0
      %1847 = vmatprep.mubr.bf16.mxu0 0
      %1848 = vmatmul.mubr.bf16.gmra.mrb[0].mxu0 %v1769
      %v1849 = vpop.f32.mrb[0].mxu0
      %v1850 = vadd.f32 0.0, %v1849
      %v1851 = vpop.f32.mrb[0].mxu0
      %v1852 = vpop.f32.mrb[0].mxu0
      %v1853 = vadd.f32 0.0, %v1852
      %v1854 = vpop.f32.mrb[0].mxu0
      %1855 = vmatprep.mubr.bf16.mxu0 0
      %1856 = vmatmul.mubr.bf16.gmra.mrb[0].mxu0 %v1772
      %v1857 = vpop.f32.mrb[0].mxu0
      %v1858 = vadd.f32 0.0, %v1857
      %v1859 = vpop.f32.mrb[0].mxu0
      %v1860 = vpop.f32.mrb[0].mxu0
      %v1861 = vadd.f32 0.0, %v1860
      %v1862 = vpop.f32.mrb[0].mxu0
      %1863 = vmatprep.mubr.bf16.mxu0 0
      %1864 = vmatmul.mubr.bf16.gmra.mrb[0].mxu0 %v1775
      %v1865 = vpop.f32.mrb[0].mxu0
      %v1866 = vadd.f32 0.0, %v1865
      %v1867 = vpop.f32.mrb[0].mxu0
      %v1868 = vpop.f32.mrb[0].mxu0
      %v1869 = vadd.f32 0.0, %v1868
      %v1870 = vpop.f32.mrb[0].mxu0
      %1871 = vmatprep.mubr.bf16.mxu0 0
      %1872 = vmatmul.mubr.bf16.gmra.mrb[0].mxu0 %v1778
      %v1873 = vpop.f32.mrb[0].mxu0
      %v1874 = vadd.f32 0.0, %v1873
      %v1875 = vpop.f32.mrb[0].mxu0
      %v1876 = vpop.f32.mrb[0].mxu0
      %v1877 = vadd.f32 0.0, %v1876
      %v1878 = vpop.f32.mrb[0].mxu0
      %1879 = vdwg.mxu0
      %v1880 = vadd.f32 %v1682, %v1818
      %v1881 = vadd.f32 %v1683, %v1821
      %v1882 = vadd.f32 %v1684, %v1826
      %v1883 = vadd.f32 %v1685, %v1829
      %v1884 = vadd.f32 %v1686, %v1834
      %v1885 = vadd.f32 %v1687, %v1837
      %v1886 = vadd.f32 %v1688, %v1842
      %v1887 = vadd.f32 %v1689, %v1845
      %v1888 = vadd.f32 %v1690, %v1850
      %v1889 = vadd.f32 %v1691, %v1853
      %v1890 = vadd.f32 %v1692, %v1858
      %v1891 = vadd.f32 %v1693, %v1861
      %v1892 = vadd.f32 %v1694, %v1866
      %v1893 = vadd.f32 %v1695, %v1869
      %v1894 = vadd.f32 %v1696, %v1874
      %v1895 = vadd.f32 %v1697, %v1877
      %v1896 = vld [vmem:[%s1698] sm:$0xf]
      %v1897 = vld [vmem:[%s1698 + $0x4] sm:$0xf]
      %v1898 = vld [vmem:[%s1698 + $0x8] sm:$0x1]
      %v1899 = vld [vmem:[%s1698 + $0xc] sm:$0xf]
      %v1900 = vld [vmem:[%s1698 + $0x10] sm:$0xf]
      %v1901 = vld [vmem:[%s1698 + $0x14] sm:$0x1]
      %v1902 = vld [vmem:[%s1698 + $0x18] sm:$0xf]
      %v1903 = vld [vmem:[%s1698 + $0x1c] sm:$0xf]
      %v1904 = vld [vmem:[%s1698 + $0x20] sm:$0x1]
      %v1905 = vld [vmem:[%s1698 + $0x24] sm:$0xf]
      %v1906 = vld [vmem:[%s1698 + $0x28] sm:$0xf]
      %v1907 = vld [vmem:[%s1698 + $0x2c] sm:$0x1]
      %v1908 = vld [vmem:[%s1698 + $0x30] sm:$0xf]
      %v1909 = vld [vmem:[%s1698 + $0x34] sm:$0xf]
      %v1910 = vld [vmem:[%s1698 + $0x38] sm:$0x1]
      %v1911 = vld [vmem:[%s1698 + $0x3c] sm:$0xf]
      %v1912 = vld [vmem:[%s1698 + $0x40] sm:$0xf]
      %v1913 = vld [vmem:[%s1698 + $0x44] sm:$0x1]
      %v1914 = vld [vmem:[%s1698 + $0x48] sm:$0xf]
      %v1915 = vld [vmem:[%s1698 + $0x4c] sm:$0xf]
      %v1916 = vld [vmem:[%s1698 + $0x50] sm:$0x1]
      %v1917 = vld [vmem:[%s1698 + $0x54] sm:$0xf]
      %v1918 = vld [vmem:[%s1698 + $0x58] sm:$0xf]
      %v1919 = vld [vmem:[%s1698 + $0x5c] sm:$0x1]
      %v1921 = vshrl.u32 %v1896, 16
      %v1923 = vrot.slane %v1921, 4
      %v1924 = vshll.u32 %v1896, 16
      %v1926 = vrot.slane %v1924, 5
      %v1927 = vor.u32 %v1923, %v1926
      %v1928 = vrot.slane %v1927, 4
      %v1930 = vshll.u32 %v1897, 16
      %v1932 = vrot.slane %v1930, 5
      %v1933 = vsel %vm942, %v1928, %v1932
      %v1934 = vshrl.u32 %v1897, 16
      %v1936 = vrot.slane %v1934, 4
      %v1937 = vor.u32 %v1936, %v1932
      %v1938 = vrot.slane %v1937, 4
      %v1940 = vshll.u32 %v1898, 16
      %v1942 = vrot.slane %v1940, 5
      %v1943 = vsel %vm942, %v1938, %v1942
      %v1945 = vshrl.u32 %v1899, 16
      %v1947 = vrot.slane %v1945, 4
      %v1948 = vshll.u32 %v1899, 16
      %v1950 = vrot.slane %v1948, 5
      %v1951 = vor.u32 %v1947, %v1950
      %v1952 = vrot.slane %v1951, 4
      %v1954 = vshll.u32 %v1900, 16
      %v1956 = vrot.slane %v1954, 5
      %v1957 = vsel %vm942, %v1952, %v1956
      %v1958 = vshrl.u32 %v1900, 16
      %v1960 = vrot.slane %v1958, 4
      %v1961 = vor.u32 %v1960, %v1956
      %v1962 = vrot.slane %v1961, 4
      %v1964 = vshll.u32 %v1901, 16
      %v1966 = vrot.slane %v1964, 5
      %v1967 = vsel %vm942, %v1962, %v1966
      %v1969 = vshrl.u32 %v1902, 16
      %v1971 = vrot.slane %v1969, 4
      %v1972 = vshll.u32 %v1902, 16
      %v1974 = vrot.slane %v1972, 5
      %v1975 = vor.u32 %v1971, %v1974
      %v1976 = vrot.slane %v1975, 4
      %v1978 = vshll.u32 %v1903, 16
      %v1980 = vrot.slane %v1978, 5
      %v1981 = vsel %vm942, %v1976, %v1980
      %v1982 = vshrl.u32 %v1903, 16
      %v1984 = vrot.slane %v1982, 4
      %v1985 = vor.u32 %v1984, %v1980
      %v1986 = vrot.slane %v1985, 4
      %v1988 = vshll.u32 %v1904, 16
      %v1990 = vrot.slane %v1988, 5
      %v1991 = vsel %vm942, %v1986, %v1990
      %v1993 = vshrl.u32 %v1905, 16
      %v1995 = vrot.slane %v1993, 4
      %v1996 = vshll.u32 %v1905, 16
      %v1998 = vrot.slane %v1996, 5
      %v1999 = vor.u32 %v1995, %v1998
      %v2000 = vrot.slane %v1999, 4
      %v2002 = vshll.u32 %v1906, 16
      %v2004 = vrot.slane %v2002, 5
      %v2005 = vsel %vm942, %v2000, %v2004
      %v2006 = vshrl.u32 %v1906, 16
      %v2008 = vrot.slane %v2006, 4
      %v2009 = vor.u32 %v2008, %v2004
      %v2010 = vrot.slane %v2009, 4
      %v2012 = vshll.u32 %v1907, 16
      %v2014 = vrot.slane %v2012, 5
      %v2015 = vsel %vm942, %v2010, %v2014
      %v2017 = vshrl.u32 %v1908, 16
      %v2019 = vrot.slane %v2017, 4
      %v2020 = vshll.u32 %v1908, 16
      %v2022 = vrot.slane %v2020, 5
      %v2023 = vor.u32 %v2019, %v2022
      %v2024 = vrot.slane %v2023, 4
      %v2026 = vshll.u32 %v1909, 16
      %v2028 = vrot.slane %v2026, 5
      %v2029 = vsel %vm942, %v2024, %v2028
      %v2030 = vshrl.u32 %v1909, 16
      %v2032 = vrot.slane %v2030, 4
      %v2033 = vor.u32 %v2032, %v2028
      %v2034 = vrot.slane %v2033, 4
      %v2036 = vshll.u32 %v1910, 16
      %v2038 = vrot.slane %v2036, 5
      %v2039 = vsel %vm942, %v2034, %v2038
      %v2041 = vshrl.u32 %v1911, 16
      %v2043 = vrot.slane %v2041, 4
      %v2044 = vshll.u32 %v1911, 16
      %v2046 = vrot.slane %v2044, 5
      %v2047 = vor.u32 %v2043, %v2046
      %v2048 = vrot.slane %v2047, 4
      %v2050 = vshll.u32 %v1912, 16
      %v2052 = vrot.slane %v2050, 5
      %v2053 = vsel %vm942, %v2048, %v2052
      %v2054 = vshrl.u32 %v1912, 16
      %v2056 = vrot.slane %v2054, 4
      %v2057 = vor.u32 %v2056, %v2052
      %v2058 = vrot.slane %v2057, 4
      %v2060 = vshll.u32 %v1913, 16
      %v2062 = vrot.slane %v2060, 5
      %v2063 = vsel %vm942, %v2058, %v2062
      %v2065 = vshrl.u32 %v1914, 16
      %v2067 = vrot.slane %v2065, 4
      %v2068 = vshll.u32 %v1914, 16
      %v2070 = vrot.slane %v2068, 5
      %v2071 = vor.u32 %v2067, %v2070
      %v2072 = vrot.slane %v2071, 4
      %v2074 = vshll.u32 %v1915, 16
      %v2076 = vrot.slane %v2074, 5
      %v2077 = vsel %vm942, %v2072, %v2076
      %v2078 = vshrl.u32 %v1915, 16
      %v2080 = vrot.slane %v2078, 4
      %v2081 = vor.u32 %v2080, %v2076
      %v2082 = vrot.slane %v2081, 4
      %v2084 = vshll.u32 %v1916, 16
      %v2086 = vrot.slane %v2084, 5
      %v2087 = vsel %vm942, %v2082, %v2086
      %v2089 = vshrl.u32 %v1917, 16
      %v2091 = vrot.slane %v2089, 4
      %v2092 = vshll.u32 %v1917, 16
      %v2094 = vrot.slane %v2092, 5
      %v2095 = vor.u32 %v2091, %v2094
      %v2096 = vrot.slane %v2095, 4
      %v2098 = vshll.u32 %v1918, 16
      %v2100 = vrot.slane %v2098, 5
      %v2101 = vsel %vm942, %v2096, %v2100
      %v2102 = vshrl.u32 %v1918, 16
      %v2104 = vrot.slane %v2102, 4
      %v2105 = vor.u32 %v2104, %v2100
      %v2106 = vrot.slane %v2105, 4
      %v2108 = vshll.u32 %v1919, 16
      %v2110 = vrot.slane %v2108, 5
      %v2111 = vsel %vm942, %v2106, %v2110
      %v2112 = vld [vmem:[%s3 + $0x10] sm:$0xf]
      %v2113 = vunpack.c.l.b16 %v1933
      %v2114 = vunpack.c.l.b16 %v1943
      %v2115 = vunpack.c.l.b16 %v1957
      %v2116 = vunpack.c.l.b16 %v1967
      %v2117 = vunpack.c.l.b16 %v1981
      %v2118 = vunpack.c.l.b16 %v1991
      %v2119 = vunpack.c.l.b16 %v2005
      %v2120 = vunpack.c.l.b16 %v2015
      %v2121 = vunpack.c.l.b16 %v2029
      %v2122 = vunpack.c.l.b16 %v2039
      %v2123 = vunpack.c.l.b16 %v2053
      %v2124 = vunpack.c.l.b16 %v2063
      %v2125 = vunpack.c.l.b16 %v2077
      %v2126 = vunpack.c.l.b16 %v2087
      %v2127 = vunpack.c.l.b16 %v2101
      %v2128 = vunpack.c.l.b16 %v2111
      %v2129 = vpack.c.b16 %v2114, %v2113
      %v2130 = vpack.c.b16 %v2116, %v2115
      %v2131 = vpack.c.b16 %v2118, %v2117
      %v2132 = vpack.c.b16 %v2120, %v2119
      %v2133 = vpack.c.b16 %v2122, %v2121
      %v2134 = vpack.c.b16 %v2124, %v2123
      %v2135 = vpack.c.b16 %v2126, %v2125
      %v2136 = vpack.c.b16 %v2128, %v2127
      %v2138 = vsel %vm1160, %v2129, 0
      %v2141 = vsel %vm1160, %v2130, 0
      %v2144 = vsel %vm1160, %v2131, 0
      %v2147 = vsel %vm1160, %v2132, 0
      %v2150 = vsel %vm1160, %v2133, 0
      %v2153 = vsel %vm1160, %v2134, 0
      %v2156 = vsel %vm1160, %v2135, 0
      %v2159 = vsel %vm1160, %v2136, 0
      %v2162 = vsel %vm1185, %v2112, 0
      %2164 = vmatprep.subr.bf16.mxu0 0
      %2165 = vmatpush1.bf16.msra.mxu0 %v2162
      %2166 = vmatprep.subr.bf16.mxu0 0
      %2167 = vmatpush1.bf16.msra.mxu0 0
      %2168 = vmatprep.subr.bf16.mxu0 0
      %2169 = vmatpush1.bf16.msra.mxu0 0
      %2170 = vmatprep.subr.bf16.mxu0 0
      %2171 = vmatpush1.bf16.msra.mxu0 0
      %2172 = vmatprep.subr.bf16.mxu0 0
      %2173 = vmatpush1.bf16.msra.mxu0 0
      %2174 = vmatprep.subr.bf16.mxu0 0
      %2175 = vmatpush1.bf16.msra.mxu0 0
      %2176 = vmatprep.subr.bf16.mxu0 0
      %2177 = vmatpush1.bf16.msra.mxu0 0
      %2178 = vmatprep.subr.bf16.mxu0 0
      %2179 = vmatpush1.bf16.msra.mxu0 0
      %2180 = vmatprep.subr.bf16.mxu0 0
      %2181 = vmatpush1.bf16.msra.mxu0 0
      %2182 = vmatprep.subr.bf16.mxu0 0
      %2183 = vmatpush1.bf16.msra.mxu0 0
      %2184 = vmatprep.subr.bf16.mxu0 0
      %2185 = vmatpush1.bf16.msra.mxu0 0
      %2186 = vmatprep.subr.bf16.mxu0 0
      %2187 = vmatpush1.bf16.msra.mxu0 0
      %2188 = vmatprep.subr.bf16.mxu0 0
      %2189 = vmatpush1.bf16.msra.mxu0 0
      %2190 = vmatprep.subr.bf16.mxu0 0
      %2191 = vmatpush1.bf16.msra.mxu0 0
      %2192 = vmatprep.subr.bf16.mxu0 0
      %2193 = vmatpush1.bf16.msra.mxu0 0
      %2194 = vmatprep.subr.bf16.mxu0 0
      %2195 = vmatpush1.bf16.msra.mxu0 0
      %2196 = vmatprep.mubr.bf16.mxu0 0
      %2197 = vmatmul.mubr.bf16.gmra.mrb[0].mxu0 %v2138
      %v2198 = vpop.f32.mrb[0].mxu0
      %v2199 = vadd.f32 0.0, %v2198
      %v2200 = vpop.f32.mrb[0].mxu0
      %v2201 = vpop.f32.mrb[0].mxu0
      %v2202 = vadd.f32 0.0, %v2201
      %v2203 = vpop.f32.mrb[0].mxu0
      %2204 = vmatprep.mubr.bf16.mxu0 0
      %2205 = vmatmul.mubr.bf16.gmra.mrb[0].mxu0 %v2141
      %v2206 = vpop.f32.mrb[0].mxu0
      %v2207 = vadd.f32 0.0, %v2206
      %v2208 = vpop.f32.mrb[0].mxu0
      %v2209 = vpop.f32.mrb[0].mxu0
      %v2210 = vadd.f32 0.0, %v2209
      %v2211 = vpop.f32.mrb[0].mxu0
      %2212 = vmatprep.mubr.bf16.mxu0 0
      %2213 = vmatmul.mubr.bf16.gmra.mrb[0].mxu0 %v2144
      %v2214 = vpop.f32.mrb[0].mxu0
      %v2215 = vadd.f32 0.0, %v2214
      %v2216 = vpop.f32.mrb[0].mxu0
      %v2217 = vpop.f32.mrb[0].mxu0
      %v2218 = vadd.f32 0.0, %v2217
      %v2219 = vpop.f32.mrb[0].mxu0
      %2220 = vmatprep.mubr.bf16.mxu0 0
      %2221 = vmatmul.mubr.bf16.gmra.mrb[0].mxu0 %v2147
      %v2222 = vpop.f32.mrb[0].mxu0
      %v2223 = vadd.f32 0.0, %v2222
      %v2224 = vpop.f32.mrb[0].mxu0
      %v2225 = vpop.f32.mrb[0].mxu0
      %v2226 = vadd.f32 0.0, %v2225
      %v2227 = vpop.f32.mrb[0].mxu0
      %2228 = vmatprep.mubr.bf16.mxu0 0
      %2229 = vmatmul.mubr.bf16.gmra.mrb[0].mxu0 %v2150
      %v2230 = vpop.f32.mrb[0].mxu0
      %v2231 = vadd.f32 0.0, %v2230
      %v2232 = vpop.f32.mrb[0].mxu0
      %v2233 = vpop.f32.mrb[0].mxu0
      %v2234 = vadd.f32 0.0, %v2233
      %v2235 = vpop.f32.mrb[0].mxu0
      %2236 = vmatprep.mubr.bf16.mxu0 0
      %2237 = vmatmul.mubr.bf16.gmra.mrb[0].mxu0 %v2153
      %v2238 = vpop.f32.mrb[0].mxu0
      %v2239 = vadd.f32 0.0, %v2238
      %v2240 = vpop.f32.mrb[0].mxu0
      %v2241 = vpop.f32.mrb[0].mxu0
      %v2242 = vadd.f32 0.0, %v2241
      %v2243 = vpop.f32.mrb[0].mxu0
      %2244 = vmatprep.mubr.bf16.mxu0 0
      %2245 = vmatmul.mubr.bf16.gmra.mrb[0].mxu0 %v2156
      %v2246 = vpop.f32.mrb[0].mxu0
      %v2247 = vadd.f32 0.0, %v2246
      %v2248 = vpop.f32.mrb[0].mxu0
      %v2249 = vpop.f32.mrb[0].mxu0
      %v2250 = vadd.f32 0.0, %v2249
      %v2251 = vpop.f32.mrb[0].mxu0
      %2252 = vmatprep.mubr.bf16.mxu0 0
      %2253 = vmatmul.mubr.bf16.gmra.mrb[0].mxu0 %v2159
      %v2254 = vpop.f32.mrb[0].mxu0
      %v2255 = vadd.f32 0.0, %v2254
      %v2256 = vpop.f32.mrb[0].mxu0
      %v2257 = vpop.f32.mrb[0].mxu0
      %v2258 = vadd.f32 0.0, %v2257
      %v2259 = vpop.f32.mrb[0].mxu0
      %2260 = vdwg.mxu0
      %v2261 = vadd.f32 %v1880, %v2199
      %v2262 = vadd.f32 %v1881, %v2202
      %v2263 = vadd.f32 %v1882, %v2207
      %v2264 = vadd.f32 %v1883, %v2210
      %v2265 = vadd.f32 %v1884, %v2215
      %v2266 = vadd.f32 %v1885, %v2218
      %v2267 = vadd.f32 %v1886, %v2223
      %v2268 = vadd.f32 %v1887, %v2226
      %v2269 = vadd.f32 %v1888, %v2231
      %v2270 = vadd.f32 %v1889, %v2234
      %v2271 = vadd.f32 %v1890, %v2239
      %v2272 = vadd.f32 %v1891, %v2242
      %v2273 = vadd.f32 %v1892, %v2247
      %v2274 = vadd.f32 %v1893, %v2250
      %v2275 = vadd.f32 %v1894, %v2255
      %v2276 = vadd.f32 %v1895, %v2258
      %v2277 = vld [vmem:[%s1698] sm:$0xe]
      %v2278 = vld [vmem:[%s1698 + $0xc] sm:$0xe]
      %v2279 = vld [vmem:[%s1698 + $0x18] sm:$0xe]
      %v2280 = vld [vmem:[%s1698 + $0x24] sm:$0xe]
      %v2281 = vld [vmem:[%s1698 + $0x30] sm:$0xe]
      %v2282 = vld [vmem:[%s1698 + $0x3c] sm:$0xe]
      %v2283 = vld [vmem:[%s1698 + $0x48] sm:$0xe]
      %v2284 = vld [vmem:[%s1698 + $0x54] sm:$0xe]
      %v2309 = vrot.slane %v2277, 5
      %v2310 = vrot.slane %v2309, 4
      %v2311 = vrot.slane %v1897, 5
      %v2312 = vsel %vm1476, %v2310, %v2311
      %v2313 = vrot.slane %v2311, 4
      %v2314 = vrot.slane %v1898, 5
      %v2315 = vsel %vm1476, %v2313, %v2314
      %v2316 = vrot.slane %v2278, 5
      %v2317 = vrot.slane %v2316, 4
      %v2318 = vrot.slane %v1900, 5
      %v2319 = vsel %vm1476, %v2317, %v2318
      %v2320 = vrot.slane %v2318, 4
      %v2321 = vrot.slane %v1901, 5
      %v2322 = vsel %vm1476, %v2320, %v2321
      %v2323 = vrot.slane %v2279, 5
      %v2324 = vrot.slane %v2323, 4
      %v2325 = vrot.slane %v1903, 5
      %v2326 = vsel %vm1476, %v2324, %v2325
      %v2327 = vrot.slane %v2325, 4
      %v2328 = vrot.slane %v1904, 5
      %v2329 = vsel %vm1476, %v2327, %v2328
      %v2330 = vrot.slane %v2280, 5
      %v2331 = vrot.slane %v2330, 4
      %v2332 = vrot.slane %v1906, 5
      %v2333 = vsel %vm1476, %v2331, %v2332
      %v2334 = vrot.slane %v2332, 4
      %v2335 = vrot.slane %v1907, 5
      %v2336 = vsel %vm1476, %v2334, %v2335
      %v2337 = vrot.slane %v2281, 5
      %v2338 = vrot.slane %v2337, 4
      %v2339 = vrot.slane %v1909, 5
      %v2340 = vsel %vm1476, %v2338, %v2339
      %v2341 = vrot.slane %v2339, 4
      %v2342 = vrot.slane %v1910, 5
      %v2343 = vsel %vm1476, %v2341, %v2342
      %v2344 = vrot.slane %v2282, 5
      %v2345 = vrot.slane %v2344, 4
      %v2346 = vrot.slane %v1912, 5
      %v2347 = vsel %vm1476, %v2345, %v2346
      %v2348 = vrot.slane %v2346, 4
      %v2349 = vrot.slane %v1913, 5
      %v2350 = vsel %vm1476, %v2348, %v2349
      %v2351 = vrot.slane %v2283, 5
      %v2352 = vrot.slane %v2351, 4
      %v2353 = vrot.slane %v1915, 5
      %v2354 = vsel %vm1476, %v2352, %v2353
      %v2355 = vrot.slane %v2353, 4
      %v2356 = vrot.slane %v1916, 5
      %v2357 = vsel %vm1476, %v2355, %v2356
      %v2358 = vrot.slane %v2284, 5
      %v2359 = vrot.slane %v2358, 4
      %v2360 = vrot.slane %v1918, 5
      %v2361 = vsel %vm1476, %v2359, %v2360
      %v2362 = vrot.slane %v2360, 4
      %v2363 = vrot.slane %v1919, 5
      %v2364 = vsel %vm1476, %v2362, %v2363
      %v2365 = vld [vmem:[%s3 + $0x14] sm:$0xf]
      %v2366 = vunpack.c.l.b16 %v2312
      %v2367 = vunpack.c.l.b16 %v2315
      %v2368 = vunpack.c.l.b16 %v2319
      %v2369 = vunpack.c.l.b16 %v2322
      %v2370 = vunpack.c.l.b16 %v2326
      %v2371 = vunpack.c.l.b16 %v2329
      %v2372 = vunpack.c.l.b16 %v2333
      %v2373 = vunpack.c.l.b16 %v2336
      %v2374 = vunpack.c.l.b16 %v2340
      %v2375 = vunpack.c.l.b16 %v2343
      %v2376 = vunpack.c.l.b16 %v2347
      %v2377 = vunpack.c.l.b16 %v2350
      %v2378 = vunpack.c.l.b16 %v2354
      %v2379 = vunpack.c.l.b16 %v2357
      %v2380 = vunpack.c.l.b16 %v2361
      %v2381 = vunpack.c.l.b16 %v2364
      %v2382 = vpack.c.b16 %v2367, %v2366
      %v2383 = vpack.c.b16 %v2369, %v2368
      %v2384 = vpack.c.b16 %v2371, %v2370
      %v2385 = vpack.c.b16 %v2373, %v2372
      %v2386 = vpack.c.b16 %v2375, %v2374
      %v2387 = vpack.c.b16 %v2377, %v2376
      %v2388 = vpack.c.b16 %v2379, %v2378
      %v2389 = vpack.c.b16 %v2381, %v2380
      %v2391 = vsel %vm1160, %v2382, 0
      %v2394 = vsel %vm1160, %v2383, 0
      %v2397 = vsel %vm1160, %v2384, 0
      %v2400 = vsel %vm1160, %v2385, 0
      %v2403 = vsel %vm1160, %v2386, 0
      %v2406 = vsel %vm1160, %v2387, 0
      %v2409 = vsel %vm1160, %v2388, 0
      %v2412 = vsel %vm1160, %v2389, 0
      %v2415 = vsel %vm1185, %v2365, 0
      %2417 = vmatprep.subr.bf16.mxu0 0
      %2418 = vmatpush1.bf16.msra.mxu0 %v2415
      %2419 = vmatprep.subr.bf16.mxu0 0
      %2420 = vmatpush1.bf16.msra.mxu0 0
      %2421 = vmatprep.subr.bf16.mxu0 0
      %2422 = vmatpush1.bf16.msra.mxu0 0
      %2423 = vmatprep.subr.bf16.mxu0 0
      %2424 = vmatpush1.bf16.msra.mxu0 0
      %2425 = vmatprep.subr.bf16.mxu0 0
      %2426 = vmatpush1.bf16.msra.mxu0 0
      %2427 = vmatprep.subr.bf16.mxu0 0
      %2428 = vmatpush1.bf16.msra.mxu0 0
      %2429 = vmatprep.subr.bf16.mxu0 0
      %2430 = vmatpush1.bf16.msra.mxu0 0
      %2431 = vmatprep.subr.bf16.mxu0 0
      %2432 = vmatpush1.bf16.msra.mxu0 0
      %2433 = vmatprep.subr.bf16.mxu0 0
      %2434 = vmatpush1.bf16.msra.mxu0 0
      %2435 = vmatprep.subr.bf16.mxu0 0
      %2436 = vmatpush1.bf16.msra.mxu0 0
      %2437 = vmatprep.subr.bf16.mxu0 0
      %2438 = vmatpush1.bf16.msra.mxu0 0
      %2439 = vmatprep.subr.bf16.mxu0 0
      %2440 = vmatpush1.bf16.msra.mxu0 0
      %2441 = vmatprep.subr.bf16.mxu0 0
      %2442 = vmatpush1.bf16.msra.mxu0 0
      %2443 = vmatprep.subr.bf16.mxu0 0
      %2444 = vmatpush1.bf16.msra.mxu0 0
      %2445 = vmatprep.subr.bf16.mxu0 0
      %2446 = vmatpush1.bf16.msra.mxu0 0
      %2447 = vmatprep.subr.bf16.mxu0 0
      %2448 = vmatpush1.bf16.msra.mxu0 0
      %2449 = vmatprep.mubr.bf16.mxu0 0
      %2450 = vmatmul.mubr.bf16.gmra.mrb[0].mxu0 %v2391
      %v2451 = vpop.f32.mrb[0].mxu0
      %v2452 = vadd.f32 0.0, %v2451
      %v2453 = vpop.f32.mrb[0].mxu0
      %v2454 = vpop.f32.mrb[0].mxu0
      %v2455 = vadd.f32 0.0, %v2454
      %v2456 = vpop.f32.mrb[0].mxu0
      %2457 = vmatprep.mubr.bf16.mxu0 0
      %2458 = vmatmul.mubr.bf16.gmra.mrb[0].mxu0 %v2394
      %v2459 = vpop.f32.mrb[0].mxu0
      %v2460 = vadd.f32 0.0, %v2459
      %v2461 = vpop.f32.mrb[0].mxu0
      %v2462 = vpop.f32.mrb[0].mxu0
      %v2463 = vadd.f32 0.0, %v2462
      %v2464 = vpop.f32.mrb[0].mxu0
      %2465 = vmatprep.mubr.bf16.mxu0 0
      %2466 = vmatmul.mubr.bf16.gmra.mrb[0].mxu0 %v2397
      %v2467 = vpop.f32.mrb[0].mxu0
      %v2468 = vadd.f32 0.0, %v2467
      %v2469 = vpop.f32.mrb[0].mxu0
      %v2470 = vpop.f32.mrb[0].mxu0
      %v2471 = vadd.f32 0.0, %v2470
      %v2472 = vpop.f32.mrb[0].mxu0
      %2473 = vmatprep.mubr.bf16.mxu0 0
      %2474 = vmatmul.mubr.bf16.gmra.mrb[0].mxu0 %v2400
      %v2475 = vpop.f32.mrb[0].mxu0
      %v2476 = vadd.f32 0.0, %v2475
      %v2477 = vpop.f32.mrb[0].mxu0
      %v2478 = vpop.f32.mrb[0].mxu0
      %v2479 = vadd.f32 0.0, %v2478
      %v2480 = vpop.f32.mrb[0].mxu0
      %2481 = vmatprep.mubr.bf16.mxu0 0
      %2482 = vmatmul.mubr.bf16.gmra.mrb[0].mxu0 %v2403
      %v2483 = vpop.f32.mrb[0].mxu0
      %v2484 = vadd.f32 0.0, %v2483
      %v2485 = vpop.f32.mrb[0].mxu0
      %v2486 = vpop.f32.mrb[0].mxu0
      %v2487 = vadd.f32 0.0, %v2486
      %v2488 = vpop.f32.mrb[0].mxu0
      %2489 = vmatprep.mubr.bf16.mxu0 0
      %2490 = vmatmul.mubr.bf16.gmra.mrb[0].mxu0 %v2406
      %v2491 = vpop.f32.mrb[0].mxu0
      %v2492 = vadd.f32 0.0, %v2491
      %v2493 = vpop.f32.mrb[0].mxu0
      %v2494 = vpop.f32.mrb[0].mxu0
      %v2495 = vadd.f32 0.0, %v2494
      %v2496 = vpop.f32.mrb[0].mxu0
      %2497 = vmatprep.mubr.bf16.mxu0 0
      %2498 = vmatmul.mubr.bf16.gmra.mrb[0].mxu0 %v2409
      %v2499 = vpop.f32.mrb[0].mxu0
      %v2500 = vadd.f32 0.0, %v2499
      %v2501 = vpop.f32.mrb[0].mxu0
      %v2502 = vpop.f32.mrb[0].mxu0
      %v2503 = vadd.f32 0.0, %v2502
      %v2504 = vpop.f32.mrb[0].mxu0
      %2505 = vmatprep.mubr.bf16.mxu0 0
      %2506 = vmatmul.mubr.bf16.gmra.mrb[0].mxu0 %v2412
      %v2507 = vpop.f32.mrb[0].mxu0
      %v2508 = vadd.f32 0.0, %v2507
      %v2509 = vpop.f32.mrb[0].mxu0
      %v2510 = vpop.f32.mrb[0].mxu0
      %v2511 = vadd.f32 0.0, %v2510
      %v2512 = vpop.f32.mrb[0].mxu0
      %2513 = vdwg.mxu0
      %v2514 = vadd.f32 %v2261, %v2452
      %v2515 = vadd.f32 %v2262, %v2455
      %v2516 = vadd.f32 %v2263, %v2460
      %v2517 = vadd.f32 %v2264, %v2463
      %v2518 = vadd.f32 %v2265, %v2468
      %v2519 = vadd.f32 %v2266, %v2471
      %v2520 = vadd.f32 %v2267, %v2476
      %v2521 = vadd.f32 %v2268, %v2479
      %v2522 = vadd.f32 %v2269, %v2484
      %v2523 = vadd.f32 %v2270, %v2487
      %v2524 = vadd.f32 %v2271, %v2492
      %v2525 = vadd.f32 %v2272, %v2495
      %v2526 = vadd.f32 %v2273, %v2500
      %v2527 = vadd.f32 %v2274, %v2503
      %v2528 = vadd.f32 %v2275, %v2508
      %v2529 = vadd.f32 %v2276, %v2511
      %s2530 = scalar_lea.vmem [#allocation2], 24
      %v2531 = vld [vmem:[%s2530] sm:$0xf]
      %v2532 = vld [vmem:[%s2530 + $0x4] sm:$0xf]
      %v2533 = vld [vmem:[%s2530 + $0xc] sm:$0xf]
      %v2534 = vld [vmem:[%s2530 + $0x10] sm:$0xf]
      %v2535 = vld [vmem:[%s2530 + $0x18] sm:$0xf]
      %v2536 = vld [vmem:[%s2530 + $0x1c] sm:$0xf]
      %v2537 = vld [vmem:[%s2530 + $0x24] sm:$0xf]
      %v2538 = vld [vmem:[%s2530 + $0x28] sm:$0xf]
      %v2539 = vld [vmem:[%s2530 + $0x30] sm:$0xf]
      %v2540 = vld [vmem:[%s2530 + $0x34] sm:$0xf]
      %v2541 = vld [vmem:[%s2530 + $0x3c] sm:$0xf]
      %v2542 = vld [vmem:[%s2530 + $0x40] sm:$0xf]
      %v2543 = vld [vmem:[%s2530 + $0x48] sm:$0xf]
      %v2544 = vld [vmem:[%s2530 + $0x4c] sm:$0xf]
      %v2545 = vld [vmem:[%s2530 + $0x54] sm:$0xf]
      %v2546 = vld [vmem:[%s2530 + $0x58] sm:$0xf]
      %v2547 = vld [vmem:[%s3 + $0x18] sm:$0xf]
      %v2564 = vunpack.c.l.b16 %v2531
      %v2565 = vunpack.c.l.b16 %v2532
      %v2566 = vunpack.c.l.b16 %v2533
      %v2567 = vunpack.c.l.b16 %v2534
      %v2568 = vunpack.c.l.b16 %v2535
      %v2569 = vunpack.c.l.b16 %v2536
      %v2570 = vunpack.c.l.b16 %v2537
      %v2571 = vunpack.c.l.b16 %v2538
      %v2572 = vunpack.c.l.b16 %v2539
      %v2573 = vunpack.c.l.b16 %v2540
      %v2574 = vunpack.c.l.b16 %v2541
      %v2575 = vunpack.c.l.b16 %v2542
      %v2576 = vunpack.c.l.b16 %v2543
      %v2577 = vunpack.c.l.b16 %v2544
      %v2578 = vunpack.c.l.b16 %v2545
      %v2579 = vunpack.c.l.b16 %v2546
      %v2580 = vpack.c.b16 %v2565, %v2564
      %v2581 = vpack.c.b16 %v2567, %v2566
      %v2582 = vpack.c.b16 %v2569, %v2568
      %v2583 = vpack.c.b16 %v2571, %v2570
      %v2584 = vpack.c.b16 %v2573, %v2572
      %v2585 = vpack.c.b16 %v2575, %v2574
      %v2586 = vpack.c.b16 %v2577, %v2576
      %v2587 = vpack.c.b16 %v2579, %v2578
      %v2589 = vsel %vm1160, %v2580, 0
      %v2592 = vsel %vm1160, %v2581, 0
      %v2595 = vsel %vm1160, %v2582, 0
      %v2598 = vsel %vm1160, %v2583, 0
      %v2601 = vsel %vm1160, %v2584, 0
      %v2604 = vsel %vm1160, %v2585, 0
      %v2607 = vsel %vm1160, %v2586, 0
      %v2610 = vsel %vm1160, %v2587, 0
      %v2613 = vsel %vm1185, %v2547, 0
      %2615 = vmatprep.subr.bf16.mxu0 0
      %2616 = vmatpush1.bf16.msra.mxu0 %v2613
      %2617 = vmatprep.subr.bf16.mxu0 0
      %2618 = vmatpush1.bf16.msra.mxu0 0
      %2619 = vmatprep.subr.bf16.mxu0 0
      %2620 = vmatpush1.bf16.msra.mxu0 0
      %2621 = vmatprep.subr.bf16.mxu0 0
      %2622 = vmatpush1.bf16.msra.mxu0 0
      %2623 = vmatprep.subr.bf16.mxu0 0
      %2624 = vmatpush1.bf16.msra.mxu0 0
      %2625 = vmatprep.subr.bf16.mxu0 0
      %2626 = vmatpush1.bf16.msra.mxu0 0
      %2627 = vmatprep.subr.bf16.mxu0 0
      %2628 = vmatpush1.bf16.msra.mxu0 0
      %2629 = vmatprep.subr.bf16.mxu0 0
      %2630 = vmatpush1.bf16.msra.mxu0 0
      %2631 = vmatprep.subr.bf16.mxu0 0
      %2632 = vmatpush1.bf16.msra.mxu0 0
      %2633 = vmatprep.subr.bf16.mxu0 0
      %2634 = vmatpush1.bf16.msra.mxu0 0
      %2635 = vmatprep.subr.bf16.mxu0 0
      %2636 = vmatpush1.bf16.msra.mxu0 0
      %2637 = vmatprep.subr.bf16.mxu0 0
      %2638 = vmatpush1.bf16.msra.mxu0 0
      %2639 = vmatprep.subr.bf16.mxu0 0
      %2640 = vmatpush1.bf16.msra.mxu0 0
      %2641 = vmatprep.subr.bf16.mxu0 0
      %2642 = vmatpush1.bf16.msra.mxu0 0
      %2643 = vmatprep.subr.bf16.mxu0 0
      %2644 = vmatpush1.bf16.msra.mxu0 0
      %2645 = vmatprep.subr.bf16.mxu0 0
      %2646 = vmatpush1.bf16.msra.mxu0 0
      %2647 = vmatprep.mubr.bf16.mxu0 0
      %2648 = vmatmul.mubr.bf16.gmra.mrb[0].mxu0 %v2589
      %v2649 = vpop.f32.mrb[0].mxu0
      %v2650 = vadd.f32 0.0, %v2649
      %v2651 = vpop.f32.mrb[0].mxu0
      %v2652 = vpop.f32.mrb[0].mxu0
      %v2653 = vadd.f32 0.0, %v2652
      %v2654 = vpop.f32.mrb[0].mxu0
      %2655 = vmatprep.mubr.bf16.mxu0 0
      %2656 = vmatmul.mubr.bf16.gmra.mrb[0].mxu0 %v2592
      %v2657 = vpop.f32.mrb[0].mxu0
      %v2658 = vadd.f32 0.0, %v2657
      %v2659 = vpop.f32.mrb[0].mxu0
      %v2660 = vpop.f32.mrb[0].mxu0
      %v2661 = vadd.f32 0.0, %v2660
      %v2662 = vpop.f32.mrb[0].mxu0
      %2663 = vmatprep.mubr.bf16.mxu0 0
      %2664 = vmatmul.mubr.bf16.gmra.mrb[0].mxu0 %v2595
      %v2665 = vpop.f32.mrb[0].mxu0
      %v2666 = vadd.f32 0.0, %v2665
      %v2667 = vpop.f32.mrb[0].mxu0
      %v2668 = vpop.f32.mrb[0].mxu0
      %v2669 = vadd.f32 0.0, %v2668
      %v2670 = vpop.f32.mrb[0].mxu0
      %2671 = vmatprep.mubr.bf16.mxu0 0
      %2672 = vmatmul.mubr.bf16.gmra.mrb[0].mxu0 %v2598
      %v2673 = vpop.f32.mrb[0].mxu0
      %v2674 = vadd.f32 0.0, %v2673
      %v2675 = vpop.f32.mrb[0].mxu0
      %v2676 = vpop.f32.mrb[0].mxu0
      %v2677 = vadd.f32 0.0, %v2676
      %v2678 = vpop.f32.mrb[0].mxu0
      %2679 = vmatprep.mubr.bf16.mxu0 0
      %2680 = vmatmul.mubr.bf16.gmra.mrb[0].mxu0 %v2601
      %v2681 = vpop.f32.mrb[0].mxu0
      %v2682 = vadd.f32 0.0, %v2681
      %v2683 = vpop.f32.mrb[0].mxu0
      %v2684 = vpop.f32.mrb[0].mxu0
      %v2685 = vadd.f32 0.0, %v2684
      %v2686 = vpop.f32.mrb[0].mxu0
      %2687 = vmatprep.mubr.bf16.mxu0 0
      %2688 = vmatmul.mubr.bf16.gmra.mrb[0].mxu0 %v2604
      %v2689 = vpop.f32.mrb[0].mxu0
      %v2690 = vadd.f32 0.0, %v2689
      %v2691 = vpop.f32.mrb[0].mxu0
      %v2692 = vpop.f32.mrb[0].mxu0
      %v2693 = vadd.f32 0.0, %v2692
      %v2694 = vpop.f32.mrb[0].mxu0
      %2695 = vmatprep.mubr.bf16.mxu0 0
      %2696 = vmatmul.mubr.bf16.gmra.mrb[0].mxu0 %v2607
      %v2697 = vpop.f32.mrb[0].mxu0
      %v2698 = vadd.f32 0.0, %v2697
      %v2699 = vpop.f32.mrb[0].mxu0
      %v2700 = vpop.f32.mrb[0].mxu0
      %v2701 = vadd.f32 0.0, %v2700
      %v2702 = vpop.f32.mrb[0].mxu0
      %2703 = vmatprep.mubr.bf16.mxu0 0
      %2704 = vmatmul.mubr.bf16.gmra.mrb[0].mxu0 %v2610
      %v2705 = vpop.f32.mrb[0].mxu0
      %v2706 = vadd.f32 0.0, %v2705
      %v2707 = vpop.f32.mrb[0].mxu0
      %v2708 = vpop.f32.mrb[0].mxu0
      %v2709 = vadd.f32 0.0, %v2708
      %v2710 = vpop.f32.mrb[0].mxu0
      %2711 = vdwg.mxu0
      %v2712 = vadd.f32 %v2514, %v2650
      %v2713 = vadd.f32 %v2515, %v2653
      %v2714 = vadd.f32 %v2516, %v2658
      %v2715 = vadd.f32 %v2517, %v2661
      %v2716 = vadd.f32 %v2518, %v2666
      %v2717 = vadd.f32 %v2519, %v2669
      %v2718 = vadd.f32 %v2520, %v2674
      %v2719 = vadd.f32 %v2521, %v2677
      %v2720 = vadd.f32 %v2522, %v2682
      %v2721 = vadd.f32 %v2523, %v2685
      %v2722 = vadd.f32 %v2524, %v2690
      %v2723 = vadd.f32 %v2525, %v2693
      %v2724 = vadd.f32 %v2526, %v2698
      %v2725 = vadd.f32 %v2527, %v2701
      %v2726 = vadd.f32 %v2528, %v2706
      %v2727 = vadd.f32 %v2529, %v2709
      %v2728 = vld [vmem:[%s2530] sm:$0xf]
      %v2729 = vld [vmem:[%s2530 + $0x4] sm:$0xf]
      %v2730 = vld [vmem:[%s2530 + $0x8] sm:$0x1]
      %v2731 = vld [vmem:[%s2530 + $0xc] sm:$0xf]
      %v2732 = vld [vmem:[%s2530 + $0x10] sm:$0xf]
      %v2733 = vld [vmem:[%s2530 + $0x14] sm:$0x1]
      %v2734 = vld [vmem:[%s2530 + $0x18] sm:$0xf]
      %v2735 = vld [vmem:[%s2530 + $0x1c] sm:$0xf]
      %v2736 = vld [vmem:[%s2530 + $0x20] sm:$0x1]
      %v2737 = vld [vmem:[%s2530 + $0x24] sm:$0xf]
      %v2738 = vld [vmem:[%s2530 + $0x28] sm:$0xf]
      %v2739 = vld [vmem:[%s2530 + $0x2c] sm:$0x1]
      %v2740 = vld [vmem:[%s2530 + $0x30] sm:$0xf]
      %v2741 = vld [vmem:[%s2530 + $0x34] sm:$0xf]
      %v2742 = vld [vmem:[%s2530 + $0x38] sm:$0x1]
      %v2743 = vld [vmem:[%s2530 + $0x3c] sm:$0xf]
      %v2744 = vld [vmem:[%s2530 + $0x40] sm:$0xf]
      %v2745 = vld [vmem:[%s2530 + $0x44] sm:$0x1]
      %v2746 = vld [vmem:[%s2530 + $0x48] sm:$0xf]
      %v2747 = vld [vmem:[%s2530 + $0x4c] sm:$0xf]
      %v2748 = vld [vmem:[%s2530 + $0x50] sm:$0x1]
      %v2749 = vld [vmem:[%s2530 + $0x54] sm:$0xf]
      %v2750 = vld [vmem:[%s2530 + $0x58] sm:$0xf]
      %v2751 = vld [vmem:[%s2530 + $0x5c] sm:$0x1]
      %v2753 = vshrl.u32 %v2728, 16
      %v2755 = vrot.slane %v2753, 4
      %v2756 = vshll.u32 %v2728, 16
      %v2758 = vrot.slane %v2756, 5
      %v2759 = vor.u32 %v2755, %v2758
      %v2760 = vrot.slane %v2759, 4
      %v2762 = vshll.u32 %v2729, 16
      %v2764 = vrot.slane %v2762, 5
      %v2765 = vsel %vm942, %v2760, %v2764
      %v2766 = vshrl.u32 %v2729, 16
      %v2768 = vrot.slane %v2766, 4
      %v2769 = vor.u32 %v2768, %v2764
      %v2770 = vrot.slane %v2769, 4
      %v2772 = vshll.u32 %v2730, 16
      %v2774 = vrot.slane %v2772, 5
      %v2775 = vsel %vm942, %v2770, %v2774
      %v2777 = vshrl.u32 %v2731, 16
      %v2779 = vrot.slane %v2777, 4
      %v2780 = vshll.u32 %v2731, 16
      %v2782 = vrot.slane %v2780, 5
      %v2783 = vor.u32 %v2779, %v2782
      %v2784 = vrot.slane %v2783, 4
      %v2786 = vshll.u32 %v2732, 16
      %v2788 = vrot.slane %v2786, 5
      %v2789 = vsel %vm942, %v2784, %v2788
      %v2790 = vshrl.u32 %v2732, 16
      %v2792 = vrot.slane %v2790, 4
      %v2793 = vor.u32 %v2792, %v2788
      %v2794 = vrot.slane %v2793, 4
      %v2796 = vshll.u32 %v2733, 16
      %v2798 = vrot.slane %v2796, 5
      %v2799 = vsel %vm942, %v2794, %v2798
      %v2801 = vshrl.u32 %v2734, 16
      %v2803 = vrot.slane %v2801, 4
      %v2804 = vshll.u32 %v2734, 16
      %v2806 = vrot.slane %v2804, 5
      %v2807 = vor.u32 %v2803, %v2806
      %v2808 = vrot.slane %v2807, 4
      %v2810 = vshll.u32 %v2735, 16
      %v2812 = vrot.slane %v2810, 5
      %v2813 = vsel %vm942, %v2808, %v2812
      %v2814 = vshrl.u32 %v2735, 16
      %v2816 = vrot.slane %v2814, 4
      %v2817 = vor.u32 %v2816, %v2812
      %v2818 = vrot.slane %v2817, 4
      %v2820 = vshll.u32 %v2736, 16
      %v2822 = vrot.slane %v2820, 5
      %v2823 = vsel %vm942, %v2818, %v2822
      %v2825 = vshrl.u32 %v2737, 16
      %v2827 = vrot.slane %v2825, 4
      %v2828 = vshll.u32 %v2737, 16
      %v2830 = vrot.slane %v2828, 5
      %v2831 = vor.u32 %v2827, %v2830
      %v2832 = vrot.slane %v2831, 4
      %v2834 = vshll.u32 %v2738, 16
      %v2836 = vrot.slane %v2834, 5
      %v2837 = vsel %vm942, %v2832, %v2836
      %v2838 = vshrl.u32 %v2738, 16
      %v2840 = vrot.slane %v2838, 4
      %v2841 = vor.u32 %v2840, %v2836
      %v2842 = vrot.slane %v2841, 4
      %v2844 = vshll.u32 %v2739, 16
      %v2846 = vrot.slane %v2844, 5
      %v2847 = vsel %vm942, %v2842, %v2846
      %v2849 = vshrl.u32 %v2740, 16
      %v2851 = vrot.slane %v2849, 4
      %v2852 = vshll.u32 %v2740, 16
      %v2854 = vrot.slane %v2852, 5
      %v2855 = vor.u32 %v2851, %v2854
      %v2856 = vrot.slane %v2855, 4
      %v2858 = vshll.u32 %v2741, 16
      %v2860 = vrot.slane %v2858, 5
      %v2861 = vsel %vm942, %v2856, %v2860
      %v2862 = vshrl.u32 %v2741, 16
      %v2864 = vrot.slane %v2862, 4
      %v2865 = vor.u32 %v2864, %v2860
      %v2866 = vrot.slane %v2865, 4
      %v2868 = vshll.u32 %v2742, 16
      %v2870 = vrot.slane %v2868, 5
      %v2871 = vsel %vm942, %v2866, %v2870
      %v2873 = vshrl.u32 %v2743, 16
      %v2875 = vrot.slane %v2873, 4
      %v2876 = vshll.u32 %v2743, 16
      %v2878 = vrot.slane %v2876, 5
      %v2879 = vor.u32 %v2875, %v2878
      %v2880 = vrot.slane %v2879, 4
      %v2882 = vshll.u32 %v2744, 16
      %v2884 = vrot.slane %v2882, 5
      %v2885 = vsel %vm942, %v2880, %v2884
      %v2886 = vshrl.u32 %v2744, 16
      %v2888 = vrot.slane %v2886, 4
      %v2889 = vor.u32 %v2888, %v2884
      %v2890 = vrot.slane %v2889, 4
      %v2892 = vshll.u32 %v2745, 16
      %v2894 = vrot.slane %v2892, 5
      %v2895 = vsel %vm942, %v2890, %v2894
      %v2897 = vshrl.u32 %v2746, 16
      %v2899 = vrot.slane %v2897, 4
      %v2900 = vshll.u32 %v2746, 16
      %v2902 = vrot.slane %v2900, 5
      %v2903 = vor.u32 %v2899, %v2902
      %v2904 = vrot.slane %v2903, 4
      %v2906 = vshll.u32 %v2747, 16
      %v2908 = vrot.slane %v2906, 5
      %v2909 = vsel %vm942, %v2904, %v2908
      %v2910 = vshrl.u32 %v2747, 16
      %v2912 = vrot.slane %v2910, 4
      %v2913 = vor.u32 %v2912, %v2908
      %v2914 = vrot.slane %v2913, 4
      %v2916 = vshll.u32 %v2748, 16
      %v2918 = vrot.slane %v2916, 5
      %v2919 = vsel %vm942, %v2914, %v2918
      %v2921 = vshrl.u32 %v2749, 16
      %v2923 = vrot.slane %v2921, 4
      %v2924 = vshll.u32 %v2749, 16
      %v2926 = vrot.slane %v2924, 5
      %v2927 = vor.u32 %v2923, %v2926
      %v2928 = vrot.slane %v2927, 4
      %v2930 = vshll.u32 %v2750, 16
      %v2932 = vrot.slane %v2930, 5
      %v2933 = vsel %vm942, %v2928, %v2932
      %v2934 = vshrl.u32 %v2750, 16
      %v2936 = vrot.slane %v2934, 4
      %v2937 = vor.u32 %v2936, %v2932
      %v2938 = vrot.slane %v2937, 4
      %v2940 = vshll.u32 %v2751, 16
      %v2942 = vrot.slane %v2940, 5
      %v2943 = vsel %vm942, %v2938, %v2942
      %v2944 = vld [vmem:[%s3 + $0x1c] sm:$0xf]
      %v2945 = vunpack.c.l.b16 %v2765
      %v2946 = vunpack.c.l.b16 %v2775
      %v2947 = vunpack.c.l.b16 %v2789
      %v2948 = vunpack.c.l.b16 %v2799
      %v2949 = vunpack.c.l.b16 %v2813
      %v2950 = vunpack.c.l.b16 %v2823
      %v2951 = vunpack.c.l.b16 %v2837
      %v2952 = vunpack.c.l.b16 %v2847
      %v2953 = vunpack.c.l.b16 %v2861
      %v2954 = vunpack.c.l.b16 %v2871
      %v2955 = vunpack.c.l.b16 %v2885
      %v2956 = vunpack.c.l.b16 %v2895
      %v2957 = vunpack.c.l.b16 %v2909
      %v2958 = vunpack.c.l.b16 %v2919
      %v2959 = vunpack.c.l.b16 %v2933
      %v2960 = vunpack.c.l.b16 %v2943
      %v2961 = vpack.c.b16 %v2946, %v2945
      %v2962 = vpack.c.b16 %v2948, %v2947
      %v2963 = vpack.c.b16 %v2950, %v2949
      %v2964 = vpack.c.b16 %v2952, %v2951
      %v2965 = vpack.c.b16 %v2954, %v2953
      %v2966 = vpack.c.b16 %v2956, %v2955
      %v2967 = vpack.c.b16 %v2958, %v2957
      %v2968 = vpack.c.b16 %v2960, %v2959
      %v2970 = vsel %vm1160, %v2961, 0
      %v2973 = vsel %vm1160, %v2962, 0
      %v2976 = vsel %vm1160, %v2963, 0
      %v2979 = vsel %vm1160, %v2964, 0
      %v2982 = vsel %vm1160, %v2965, 0
      %v2985 = vsel %vm1160, %v2966, 0
      %v2988 = vsel %vm1160, %v2967, 0
      %v2991 = vsel %vm1160, %v2968, 0
      %v2994 = vsel %vm1185, %v2944, 0
      %2996 = vmatprep.subr.bf16.mxu0 0
      %2997 = vmatpush1.bf16.msra.mxu0 %v2994
      %2998 = vmatprep.subr.bf16.mxu0 0
      %2999 = vmatpush1.bf16.msra.mxu0 0
      %3000 = vmatprep.subr.bf16.mxu0 0
      %3001 = vmatpush1.bf16.msra.mxu0 0
      %3002 = vmatprep.subr.bf16.mxu0 0
      %3003 = vmatpush1.bf16.msra.mxu0 0
      %3004 = vmatprep.subr.bf16.mxu0 0
      %3005 = vmatpush1.bf16.msra.mxu0 0
      %3006 = vmatprep.subr.bf16.mxu0 0
      %3007 = vmatpush1.bf16.msra.mxu0 0
      %3008 = vmatprep.subr.bf16.mxu0 0
      %3009 = vmatpush1.bf16.msra.mxu0 0
      %3010 = vmatprep.subr.bf16.mxu0 0
      %3011 = vmatpush1.bf16.msra.mxu0 0
      %3012 = vmatprep.subr.bf16.mxu0 0
      %3013 = vmatpush1.bf16.msra.mxu0 0
      %3014 = vmatprep.subr.bf16.mxu0 0
      %3015 = vmatpush1.bf16.msra.mxu0 0
      %3016 = vmatprep.subr.bf16.mxu0 0
      %3017 = vmatpush1.bf16.msra.mxu0 0
      %3018 = vmatprep.subr.bf16.mxu0 0
      %3019 = vmatpush1.bf16.msra.mxu0 0
      %3020 = vmatprep.subr.bf16.mxu0 0
      %3021 = vmatpush1.bf16.msra.mxu0 0
      %3022 = vmatprep.subr.bf16.mxu0 0
      %3023 = vmatpush1.bf16.msra.mxu0 0
      %3024 = vmatprep.subr.bf16.mxu0 0
      %3025 = vmatpush1.bf16.msra.mxu0 0
      %3026 = vmatprep.subr.bf16.mxu0 0
      %3027 = vmatpush1.bf16.msra.mxu0 0
      %3028 = vmatprep.mubr.bf16.mxu0 0
      %3029 = vmatmul.mubr.bf16.gmra.mrb[0].mxu0 %v2970
      %v3030 = vpop.f32.mrb[0].mxu0
      %v3031 = vadd.f32 0.0, %v3030
      %v3032 = vpop.f32.mrb[0].mxu0
      %v3033 = vpop.f32.mrb[0].mxu0
      %v3034 = vadd.f32 0.0, %v3033
      %v3035 = vpop.f32.mrb[0].mxu0
      %3036 = vmatprep.mubr.bf16.mxu0 0
      %3037 = vmatmul.mubr.bf16.gmra.mrb[0].mxu0 %v2973
      %v3038 = vpop.f32.mrb[0].mxu0
      %v3039 = vadd.f32 0.0, %v3038
      %v3040 = vpop.f32.mrb[0].mxu0
      %v3041 = vpop.f32.mrb[0].mxu0
      %v3042 = vadd.f32 0.0, %v3041
      %v3043 = vpop.f32.mrb[0].mxu0
      %3044 = vmatprep.mubr.bf16.mxu0 0
      %3045 = vmatmul.mubr.bf16.gmra.mrb[0].mxu0 %v2976
      %v3046 = vpop.f32.mrb[0].mxu0
      %v3047 = vadd.f32 0.0, %v3046
      %v3048 = vpop.f32.mrb[0].mxu0
      %v3049 = vpop.f32.mrb[0].mxu0
      %v3050 = vadd.f32 0.0, %v3049
      %v3051 = vpop.f32.mrb[0].mxu0
      %3052 = vmatprep.mubr.bf16.mxu0 0
      %3053 = vmatmul.mubr.bf16.gmra.mrb[0].mxu0 %v2979
      %v3054 = vpop.f32.mrb[0].mxu0
      %v3055 = vadd.f32 0.0, %v3054
      %v3056 = vpop.f32.mrb[0].mxu0
      %v3057 = vpop.f32.mrb[0].mxu0
      %v3058 = vadd.f32 0.0, %v3057
      %v3059 = vpop.f32.mrb[0].mxu0
      %3060 = vmatprep.mubr.bf16.mxu0 0
      %3061 = vmatmul.mubr.bf16.gmra.mrb[0].mxu0 %v2982
      %v3062 = vpop.f32.mrb[0].mxu0
      %v3063 = vadd.f32 0.0, %v3062
      %v3064 = vpop.f32.mrb[0].mxu0
      %v3065 = vpop.f32.mrb[0].mxu0
      %v3066 = vadd.f32 0.0, %v3065
      %v3067 = vpop.f32.mrb[0].mxu0
      %3068 = vmatprep.mubr.bf16.mxu0 0
      %3069 = vmatmul.mubr.bf16.gmra.mrb[0].mxu0 %v2985
      %v3070 = vpop.f32.mrb[0].mxu0
      %v3071 = vadd.f32 0.0, %v3070
      %v3072 = vpop.f32.mrb[0].mxu0
      %v3073 = vpop.f32.mrb[0].mxu0
      %v3074 = vadd.f32 0.0, %v3073
      %v3075 = vpop.f32.mrb[0].mxu0
      %3076 = vmatprep.mubr.bf16.mxu0 0
      %3077 = vmatmul.mubr.bf16.gmra.mrb[0].mxu0 %v2988
      %v3078 = vpop.f32.mrb[0].mxu0
      %v3079 = vadd.f32 0.0, %v3078
      %v3080 = vpop.f32.mrb[0].mxu0
      %v3081 = vpop.f32.mrb[0].mxu0
      %v3082 = vadd.f32 0.0, %v3081
      %v3083 = vpop.f32.mrb[0].mxu0
      %3084 = vmatprep.mubr.bf16.mxu0 0
      %3085 = vmatmul.mubr.bf16.gmra.mrb[0].mxu0 %v2991
      %v3086 = vpop.f32.mrb[0].mxu0
      %v3087 = vadd.f32 0.0, %v3086
      %v3088 = vpop.f32.mrb[0].mxu0
      %v3089 = vpop.f32.mrb[0].mxu0
      %v3090 = vadd.f32 0.0, %v3089
      %v3091 = vpop.f32.mrb[0].mxu0
      %3092 = vdwg.mxu0
      %v3093 = vadd.f32 %v2712, %v3031
      %v3094 = vadd.f32 %v2713, %v3034
      %v3095 = vadd.f32 %v2714, %v3039
      %v3096 = vadd.f32 %v2715, %v3042
      %v3097 = vadd.f32 %v2716, %v3047
      %v3098 = vadd.f32 %v2717, %v3050
      %v3099 = vadd.f32 %v2718, %v3055
      %v3100 = vadd.f32 %v2719, %v3058
      %v3101 = vadd.f32 %v2720, %v3063
      %v3102 = vadd.f32 %v2721, %v3066
      %v3103 = vadd.f32 %v2722, %v3071
      %v3104 = vadd.f32 %v2723, %v3074
      %v3105 = vadd.f32 %v2724, %v3079
      %v3106 = vadd.f32 %v2725, %v3082
      %v3107 = vadd.f32 %v2726, %v3087
      %v3108 = vadd.f32 %v2727, %v3090
      %v3109 = vld [vmem:[%s2530] sm:$0xe]
      %v3110 = vld [vmem:[%s2530 + $0xc] sm:$0xe]
      %v3111 = vld [vmem:[%s2530 + $0x18] sm:$0xe]
      %v3112 = vld [vmem:[%s2530 + $0x24] sm:$0xe]
      %v3113 = vld [vmem:[%s2530 + $0x30] sm:$0xe]
      %v3114 = vld [vmem:[%s2530 + $0x3c] sm:$0xe]
      %v3115 = vld [vmem:[%s2530 + $0x48] sm:$0xe]
      %v3116 = vld [vmem:[%s2530 + $0x54] sm:$0xe]
      %v3141 = vrot.slane %v3109, 5
      %v3142 = vrot.slane %v3141, 4
      %v3143 = vrot.slane %v2729, 5
      %v3144 = vsel %vm1476, %v3142, %v3143
      %v3145 = vrot.slane %v3143, 4
      %v3146 = vrot.slane %v2730, 5
      %v3147 = vsel %vm1476, %v3145, %v3146
      %v3148 = vrot.slane %v3110, 5
      %v3149 = vrot.slane %v3148, 4
      %v3150 = vrot.slane %v2732, 5
      %v3151 = vsel %vm1476, %v3149, %v3150
      %v3152 = vrot.slane %v3150, 4
      %v3153 = vrot.slane %v2733, 5
      %v3154 = vsel %vm1476, %v3152, %v3153
      %v3155 = vrot.slane %v3111, 5
      %v3156 = vrot.slane %v3155, 4
      %v3157 = vrot.slane %v2735, 5
      %v3158 = vsel %vm1476, %v3156, %v3157
      %v3159 = vrot.slane %v3157, 4
      %v3160 = vrot.slane %v2736, 5
      %v3161 = vsel %vm1476, %v3159, %v3160
      %v3162 = vrot.slane %v3112, 5
      %v3163 = vrot.slane %v3162, 4
      %v3164 = vrot.slane %v2738, 5
      %v3165 = vsel %vm1476, %v3163, %v3164
      %v3166 = vrot.slane %v3164, 4
      %v3167 = vrot.slane %v2739, 5
      %v3168 = vsel %vm1476, %v3166, %v3167
      %v3169 = vrot.slane %v3113, 5
      %v3170 = vrot.slane %v3169, 4
      %v3171 = vrot.slane %v2741, 5
      %v3172 = vsel %vm1476, %v3170, %v3171
      %v3173 = vrot.slane %v3171, 4
      %v3174 = vrot.slane %v2742, 5
      %v3175 = vsel %vm1476, %v3173, %v3174
      %v3176 = vrot.slane %v3114, 5
      %v3177 = vrot.slane %v3176, 4
      %v3178 = vrot.slane %v2744, 5
      %v3179 = vsel %vm1476, %v3177, %v3178
      %v3180 = vrot.slane %v3178, 4
      %v3181 = vrot.slane %v2745, 5
      %v3182 = vsel %vm1476, %v3180, %v3181
      %v3183 = vrot.slane %v3115, 5
      %v3184 = vrot.slane %v3183, 4
      %v3185 = vrot.slane %v2747, 5
      %v3186 = vsel %vm1476, %v3184, %v3185
      %v3187 = vrot.slane %v3185, 4
      %v3188 = vrot.slane %v2748, 5
      %v3189 = vsel %vm1476, %v3187, %v3188
      %v3190 = vrot.slane %v3116, 5
      %v3191 = vrot.slane %v3190, 4
      %v3192 = vrot.slane %v2750, 5
      %v3193 = vsel %vm1476, %v3191, %v3192
      %v3194 = vrot.slane %v3192, 4
      %v3195 = vrot.slane %v2751, 5
      %v3196 = vsel %vm1476, %v3194, %v3195
      %v3197 = vld [vmem:[%s3 + $0x20] sm:$0xf]
      %v3198 = vunpack.c.l.b16 %v3144
      %v3199 = vunpack.c.l.b16 %v3147
      %v3200 = vunpack.c.l.b16 %v3151
      %v3201 = vunpack.c.l.b16 %v3154
      %v3202 = vunpack.c.l.b16 %v3158
      %v3203 = vunpack.c.l.b16 %v3161
      %v3204 = vunpack.c.l.b16 %v3165
      %v3205 = vunpack.c.l.b16 %v3168
      %v3206 = vunpack.c.l.b16 %v3172
      %v3207 = vunpack.c.l.b16 %v3175
      %v3208 = vunpack.c.l.b16 %v3179
      %v3209 = vunpack.c.l.b16 %v3182
      %v3210 = vunpack.c.l.b16 %v3186
      %v3211 = vunpack.c.l.b16 %v3189
      %v3212 = vunpack.c.l.b16 %v3193
      %v3213 = vunpack.c.l.b16 %v3196
      %v3214 = vpack.c.b16 %v3199, %v3198
      %v3215 = vpack.c.b16 %v3201, %v3200
      %v3216 = vpack.c.b16 %v3203, %v3202
      %v3217 = vpack.c.b16 %v3205, %v3204
      %v3218 = vpack.c.b16 %v3207, %v3206
      %v3219 = vpack.c.b16 %v3209, %v3208
      %v3220 = vpack.c.b16 %v3211, %v3210
      %v3221 = vpack.c.b16 %v3213, %v3212
      %v3223 = vsel %vm1160, %v3214, 0
      %v3226 = vsel %vm1160, %v3215, 0
      %v3229 = vsel %vm1160, %v3216, 0
      %v3232 = vsel %vm1160, %v3217, 0
      %v3235 = vsel %vm1160, %v3218, 0
      %v3238 = vsel %vm1160, %v3219, 0
      %v3241 = vsel %vm1160, %v3220, 0
      %v3244 = vsel %vm1160, %v3221, 0
      %v3247 = vsel %vm1185, %v3197, 0
      %3249 = vmatprep.subr.bf16.mxu0 0
      %3250 = vmatpush1.bf16.msra.mxu0 %v3247
      %3251 = vmatprep.subr.bf16.mxu0 0
      %3252 = vmatpush1.bf16.msra.mxu0 0
      %3253 = vmatprep.subr.bf16.mxu0 0
      %3254 = vmatpush1.bf16.msra.mxu0 0
      %3255 = vmatprep.subr.bf16.mxu0 0
      %3256 = vmatpush1.bf16.msra.mxu0 0
      %3257 = vmatprep.subr.bf16.mxu0 0
      %3258 = vmatpush1.bf16.msra.mxu0 0
      %3259 = vmatprep.subr.bf16.mxu0 0
      %3260 = vmatpush1.bf16.msra.mxu0 0
      %3261 = vmatprep.subr.bf16.mxu0 0
      %3262 = vmatpush1.bf16.msra.mxu0 0
      %3263 = vmatprep.subr.bf16.mxu0 0
      %3264 = vmatpush1.bf16.msra.mxu0 0
      %3265 = vmatprep.subr.bf16.mxu0 0
      %3266 = vmatpush1.bf16.msra.mxu0 0
      %3267 = vmatprep.subr.bf16.mxu0 0
      %3268 = vmatpush1.bf16.msra.mxu0 0
      %3269 = vmatprep.subr.bf16.mxu0 0
      %3270 = vmatpush1.bf16.msra.mxu0 0
      %3271 = vmatprep.subr.bf16.mxu0 0
      %3272 = vmatpush1.bf16.msra.mxu0 0
      %3273 = vmatprep.subr.bf16.mxu0 0
      %3274 = vmatpush1.bf16.msra.mxu0 0
      %3275 = vmatprep.subr.bf16.mxu0 0
      %3276 = vmatpush1.bf16.msra.mxu0 0
      %3277 = vmatprep.subr.bf16.mxu0 0
      %3278 = vmatpush1.bf16.msra.mxu0 0
      %3279 = vmatprep.subr.bf16.mxu0 0
      %3280 = vmatpush1.bf16.msra.mxu0 0
      %3281 = vmatprep.mubr.bf16.mxu0 0
      %3282 = vmatmul.mubr.bf16.gmra.mrb[0].mxu0 %v3223
      %v3283 = vpop.f32.mrb[0].mxu0
      %v3284 = vadd.f32 0.0, %v3283
      %v3285 = vpop.f32.mrb[0].mxu0
      %v3286 = vpop.f32.mrb[0].mxu0
      %v3287 = vadd.f32 0.0, %v3286
      %v3288 = vpop.f32.mrb[0].mxu0
      %3289 = vmatprep.mubr.bf16.mxu0 0
      %3290 = vmatmul.mubr.bf16.gmra.mrb[0].mxu0 %v3226
      %v3291 = vpop.f32.mrb[0].mxu0
      %v3292 = vadd.f32 0.0, %v3291
      %v3293 = vpop.f32.mrb[0].mxu0
      %v3294 = vpop.f32.mrb[0].mxu0
      %v3295 = vadd.f32 0.0, %v3294
      %v3296 = vpop.f32.mrb[0].mxu0
      %3297 = vmatprep.mubr.bf16.mxu0 0
      %3298 = vmatmul.mubr.bf16.gmra.mrb[0].mxu0 %v3229
      %v3299 = vpop.f32.mrb[0].mxu0
      %v3300 = vadd.f32 0.0, %v3299
      %v3301 = vpop.f32.mrb[0].mxu0
      %v3302 = vpop.f32.mrb[0].mxu0
      %v3303 = vadd.f32 0.0, %v3302
      %v3304 = vpop.f32.mrb[0].mxu0
      %3305 = vmatprep.mubr.bf16.mxu0 0
      %3306 = vmatmul.mubr.bf16.gmra.mrb[0].mxu0 %v3232
      %v3307 = vpop.f32.mrb[0].mxu0
      %v3308 = vadd.f32 0.0, %v3307
      %v3309 = vpop.f32.mrb[0].mxu0
      %v3310 = vpop.f32.mrb[0].mxu0
      %v3311 = vadd.f32 0.0, %v3310
      %v3312 = vpop.f32.mrb[0].mxu0
      %3313 = vmatprep.mubr.bf16.mxu0 0
      %3314 = vmatmul.mubr.bf16.gmra.mrb[0].mxu0 %v3235
      %v3315 = vpop.f32.mrb[0].mxu0
      %v3316 = vadd.f32 0.0, %v3315
      %v3317 = vpop.f32.mrb[0].mxu0
      %v3318 = vpop.f32.mrb[0].mxu0
      %v3319 = vadd.f32 0.0, %v3318
      %v3320 = vpop.f32.mrb[0].mxu0
      %3321 = vmatprep.mubr.bf16.mxu0 0
      %3322 = vmatmul.mubr.bf16.gmra.mrb[0].mxu0 %v3238
      %v3323 = vpop.f32.mrb[0].mxu0
      %v3324 = vadd.f32 0.0, %v3323
      %v3325 = vpop.f32.mrb[0].mxu0
      %v3326 = vpop.f32.mrb[0].mxu0
      %v3327 = vadd.f32 0.0, %v3326
      %v3328 = vpop.f32.mrb[0].mxu0
      %3329 = vmatprep.mubr.bf16.mxu0 0
      %3330 = vmatmul.mubr.bf16.gmra.mrb[0].mxu0 %v3241
      %v3331 = vpop.f32.mrb[0].mxu0
      %v3332 = vadd.f32 0.0, %v3331
      %v3333 = vpop.f32.mrb[0].mxu0
      %v3334 = vpop.f32.mrb[0].mxu0
      %v3335 = vadd.f32 0.0, %v3334
      %v3336 = vpop.f32.mrb[0].mxu0
      %3337 = vmatprep.mubr.bf16.mxu0 0
      %3338 = vmatmul.mubr.bf16.gmra.mrb[0].mxu0 %v3244
      %v3339 = vpop.f32.mrb[0].mxu0
      %v3340 = vadd.f32 0.0, %v3339
      %v3341 = vpop.f32.mrb[0].mxu0
      %v3342 = vpop.f32.mrb[0].mxu0
      %v3343 = vadd.f32 0.0, %v3342
      %v3344 = vpop.f32.mrb[0].mxu0
      %3345 = vdwg.mxu0
      %v3346 = vadd.f32 %v3093, %v3284
      %v3347 = vadd.f32 %v3094, %v3287
      %v3348 = vadd.f32 %v3095, %v3292
      %v3349 = vadd.f32 %v3096, %v3295
      %v3350 = vadd.f32 %v3097, %v3300
      %v3351 = vadd.f32 %v3098, %v3303
      %v3352 = vadd.f32 %v3099, %v3308
      %v3353 = vadd.f32 %v3100, %v3311
      %v3354 = vadd.f32 %v3101, %v3316
      %v3355 = vadd.f32 %v3102, %v3319
      %v3356 = vadd.f32 %v3103, %v3324
      %v3357 = vadd.f32 %v3104, %v3327
      %v3358 = vadd.f32 %v3105, %v3332
      %v3359 = vadd.f32 %v3106, %v3335
      %v3360 = vadd.f32 %v3107, %v3340
      %v3361 = vadd.f32 %v3108, %v3343
      %v3362 = vld [vmem:[%s4] sm:$0x1]
      %v3364 = vlaneseq
      %v3365 = vshrl.u32 %v3364, 7
      %v3366 = vsub.s32 0, %v3365
      %v3367 = vrot.slane %v3362, %v3366
      %v3369 = vadd.f32 %v3346, %v3367
      %v3370 = vadd.f32 %v3347, %v3367
      %v3371 = vadd.f32 %v3348, %v3367
      %v3372 = vadd.f32 %v3349, %v3367
      %v3373 = vadd.f32 %v3350, %v3367
      %v3374 = vadd.f32 %v3351, %v3367
      %v3375 = vadd.f32 %v3352, %v3367
      %v3376 = vadd.f32 %v3353, %v3367
      %v3377 = vadd.f32 %v3354, %v3367
      %v3378 = vadd.f32 %v3355, %v3367
      %v3379 = vadd.f32 %v3356, %v3367
      %v3380 = vadd.f32 %v3357, %v3367
      %v3381 = vadd.f32 %v3358, %v3367
      %v3382 = vadd.f32 %v3359, %v3367
      %v3383 = vadd.f32 %v3360, %v3367
      %v3384 = vadd.f32 %v3361, %v3367
      %v3385 = vpack.c.bf16 %v3370, %v3369
      %v3386 = vpack.c.bf16 %v3372, %v3371
      %v3387 = vpack.c.bf16 %v3374, %v3373
      %v3388 = vpack.c.bf16 %v3376, %v3375
      %v3389 = vpack.c.bf16 %v3378, %v3377
      %v3390 = vpack.c.bf16 %v3380, %v3379
      %v3391 = vpack.c.bf16 %v3382, %v3381
      %v3392 = vpack.c.bf16 %v3384, %v3383
      %v3401 = vunpack.c.l.b16 %v3385
      %v3402 = vunpack.c.h.b16 %v3385
      %v3403 = vunpack.c.l.b16 %v3386
      %v3404 = vunpack.c.h.b16 %v3386
      %v3405 = vunpack.c.l.b16 %v3387
      %v3406 = vunpack.c.h.b16 %v3387
      %v3407 = vunpack.c.l.b16 %v3388
      %v3408 = vunpack.c.h.b16 %v3388
      %v3409 = vunpack.c.l.b16 %v3389
      %v3410 = vunpack.c.h.b16 %v3389
      %v3411 = vunpack.c.l.b16 %v3390
      %v3412 = vunpack.c.h.b16 %v3390
      %v3413 = vunpack.c.l.b16 %v3391
      %v3414 = vunpack.c.h.b16 %v3391
      %v3415 = vunpack.c.l.b16 %v3392
      %v3416 = vunpack.c.h.b16 %v3392
      %v3417 = vpack.c.b16 %v3401, %v3401
      %v3418 = vpack.c.b16 %v3402, %v3402
      %v3419 = vpack.c.b16 %v3403, %v3403
      %v3420 = vpack.c.b16 %v3404, %v3404
      %v3421 = vpack.c.b16 %v3405, %v3405
      %v3422 = vpack.c.b16 %v3406, %v3406
      %v3423 = vpack.c.b16 %v3407, %v3407
      %v3424 = vpack.c.b16 %v3408, %v3408
      %v3425 = vpack.c.b16 %v3409, %v3409
      %v3426 = vpack.c.b16 %v3410, %v3410
      %v3427 = vpack.c.b16 %v3411, %v3411
      %v3428 = vpack.c.b16 %v3412, %v3412
      %v3429 = vpack.c.b16 %v3413, %v3413
      %v3430 = vpack.c.b16 %v3414, %v3414
      %v3431 = vpack.c.b16 %v3415, %v3415
      %v3432 = vpack.c.b16 %v3416, %v3416
      %vm3449 = vcmask 257024
      %3450 = vst.msk [vmem:[%s226] sm:$0xf] %vm3449, %v3417
      %3451 = vst.msk [vmem:[%s226 + $0x4] sm:$0xf] %vm3449, %v3418
      %3452 = vst.msk [vmem:[%s226 + $0x8] sm:$0xf] %vm3449, %v3419
      %3453 = vst.msk [vmem:[%s226 + $0xc] sm:$0xf] %vm3449, %v3420
      %3454 = vst.msk [vmem:[%s226 + $0x10] sm:$0xf] %vm3449, %v3421
      %3455 = vst.msk [vmem:[%s226 + $0x14] sm:$0xf] %vm3449, %v3422
      %3456 = vst.msk [vmem:[%s226 + $0x18] sm:$0xf] %vm3449, %v3423
      %3457 = vst.msk [vmem:[%s226 + $0x1c] sm:$0xf] %vm3449, %v3424
      %3458 = vst.msk [vmem:[%s226 + $0x20] sm:$0xf] %vm3449, %v3425
      %3459 = vst.msk [vmem:[%s226 + $0x24] sm:$0xf] %vm3449, %v3426
      %3460 = vst.msk [vmem:[%s226 + $0x28] sm:$0xf] %vm3449, %v3427
      %3461 = vst.msk [vmem:[%s226 + $0x2c] sm:$0xf] %vm3449, %v3428
      %3462 = vst.msk [vmem:[%s226 + $0x30] sm:$0xf] %vm3449, %v3429
      %3463 = vst.msk [vmem:[%s226 + $0x34] sm:$0xf] %vm3449, %v3430
      %3464 = vst.msk [vmem:[%s226 + $0x38] sm:$0xf] %vm3449, %v3431
      %3465 = vst.msk [vmem:[%s226 + $0x3c] sm:$0xf] %vm3449, %v3432
      %s3466 = smul.u32 16, %s16
      %p3467 = scmp.lt.s32.totalorder %s3466, 63
      %s3468 = scalar_select %p3467, %s3466, 63
      %s3469 = smul.addr %s3468, 4
      %s3470 = scalar_lea.vmem %s5, %s3469
      // Predicated region
      $region49: #{a_call__.1} parent=39 // pred_check
        %p3471 = pneg %p144
      $region50: #{a_call__.1} parent=39 // pred_check_branch
        %3473 = sbr.rel (%p3471) target = $region52
      $region51: #{a_call__.1} parent=39 // pred_region
        %s3474 = smul.u32 16, %s16
      $region52: #{a_call__.1} parent=39 // pred_fallthru
        _
    $region40: #{a_call__.1} parent=5 // pred_fallthru
      _
    %p3475 = scmp.le.s32.totalorder 2, %s11
    // Predicated region
    $region53: #{a_call__.1} parent=5 // pred_check
      %p3476 = pneg %p3475
    $region54: #{a_call__.1} parent=5 // pred_check_branch
      %3478 = sbr.rel (%p3476) target = $region56
    $region55: #{a_call__.1} parent=5 // pred_region
      %s3479 = ssub.s32 %s11, 2
      // Predicated region
      $region57: #{a_call__.1} parent=55 // pred_check
        %p3480 = pneg %p150
      $region58: #{a_call__.1} parent=55 // pred_check_branch
        %3482 = sbr.rel (%p3480) target = $region60
      $region59: #{a_call__.1} parent=55 // pred_region
        %s3483 = smul.u32 16, %s17
        %p3484 = scmp.lt.s32.totalorder %s3483, 63
        %s3485 = scalar_select %p3484, %s3483, 63
        %s3486 = smul.addr %s3485, 4
        %s3487 = scalar_lea.vmem %s5, %s3486
      $region60: #{a_call__.1} parent=55 // pred_fallthru
        _
    $region56: #{a_call__.1} parent=5 // pred_fallthru
      _
  $region6: #{a_call__.1} parent=0 // loop_footer
    %s15 = sadd.s32 1, %s11
  $region7: #{a_call__.1} parent=0 // loop_footer_branch
    %10 = sbr.rel target = $region3
  $region8: #{a_call__.1} parent=0 // loop_exit
    _

</llo_original>
